<compile_context>
chip_gen: v6e
topology: v6e:2x2x1
jax: 0.10.0
libtpu: 0.0.40
codegen_flags: <defaults>
</compile_context>

<pallas_src>
import jax
import jax.numpy as jnp
from jax import lax
from jax.experimental import pallas as pl
from jax.experimental.pallas import tpu as pltpu


# ----------------------------------------------------------------------------
# Pallas kernels
# ----------------------------------------------------------------------------
def _bilstm_recurrence(xpf_ref, xpb_ref, whhf_ref, whhb_ref, out_ref):
    """Fused bidirectional LSTM recurrence.

    xpf_ref / xpb_ref : (T, B, 4H)  precomputed x @ W_ih^T + (b_ih + b_hh)
                        for the forward / backward direction.
    whhf_ref / whhb_ref : (H, 4H)   recurrent weights (pre-transposed).
    out_ref : (T, B, 2H)  out[t, :, :H] = fwd h_t, out[t, :, H:] = bwd h_t.
    """
    T, B, _ = xpf_ref.shape
    H = whhf_ref.shape[0]

    # Load the (small) recurrent weights once; they stay in vregs/VMEM.
    whh_f = whhf_ref[...]
    whh_b = whhb_ref[...]

    def cell(gates, c):
        # PyTorch gate order: i, f, g, o
        i_g = jax.nn.sigmoid(gates[:, 0 * H:1 * H])
        f_g = jax.nn.sigmoid(gates[:, 1 * H:2 * H])
        g_g = jnp.tanh(gates[:, 2 * H:3 * H])
        o_g = jax.nn.sigmoid(gates[:, 3 * H:4 * H])
        c_new = f_g * c + i_g * g_g
        h_new = o_g * jnp.tanh(c_new)
        return h_new, c_new

    def step(s, carry):
        h_f, c_f, h_b, c_b = carry
        tb = T - 1 - s                                   # backward time index
        gates_f = xpf_ref[s] + jnp.dot(h_f, whh_f,
                                       preferred_element_type=jnp.float32)
        gates_b = xpb_ref[tb] + jnp.dot(h_b, whh_b,
                                        preferred_element_type=jnp.float32)
        h_f, c_f = cell(gates_f, c_f)
        h_b, c_b = cell(gates_b, c_b)
        out_ref[s, :, 0:H] = h_f                         # forward half
        out_ref[tb, :, H:2 * H] = h_b                    # backward half
        return (h_f, c_f, h_b, c_b)

    z = jnp.zeros((B, H), jnp.float32)
    lax.fori_loop(0, T, step, (z, z, z, z), unroll=True)


def _bilstm_kernel(xpf_ref, xpb_ref, whhf_ref, whhb_ref, out_ref):
    _bilstm_recurrence(xpf_ref, xpb_ref, whhf_ref, whhb_ref, out_ref)


def _bilstm_linear_kernel(xpf_ref, xpb_ref, whhf_ref, whhb_ref,
                          fcw_ref, fcb_ref, out_ref, lin_ref):
    """BiLSTM layer + fused final Linear epilogue on the last timestep."""
    _bilstm_recurrence(xpf_ref, xpb_ref, whhf_ref, whhb_ref, out_ref)
    T = xpf_ref.shape[0]
    last = out_ref[T - 1]                                # (B, 2H), batch-first t = -1
    lin_ref[...] = (jnp.dot(last, fcw_ref[...],
                            preferred_element_type=jnp.float32)
                    + fcb_ref[...])


# ----------------------------------------------------------------------------
# Wrappers
# ----------------------------------------------------------------------------
_VMEM_SPEC = pl.BlockSpec(memory_space=pltpu.MemorySpace.VMEM)


def bilstm_layer_tm(x_tbd, p_fwd, p_bwd, fc=None):
    """One fused bidirectional LSTM layer, time-major in / time-major out.

    x_tbd: (T, B, D) float32.  Returns (T, B, 2H), plus (B, O) if `fc` given.
    """
    T, B, _ = x_tbd.shape
    w_ih_f, w_hh_f, b_ih_f, b_hh_f = p_fwd
    w_ih_b, w_hh_b, b_ih_b, b_hh_b = p_bwd
    H = w_hh_f.shape[1]

    # Hoisted input projection: one large MXU-friendly matmul per direction
    # (plain XLA, off the serial recurrence path).  Bias (b_ih + b_hh) fused.
    xp_f = jnp.einsum('tbd,gd->tbg', x_tbd, w_ih_f) + (b_ih_f + b_hh_f)
    xp_b = jnp.einsum('tbd,gd->tbg', x_tbd, w_ih_b) + (b_ih_b + b_hh_b)
    whh_f_t = jnp.transpose(w_hh_f)                      # (H, 4H)
    whh_b_t = jnp.transpose(w_hh_b)                      # (H, 4H)

    if fc is None:
        return pl.pallas_call(
            _bilstm_kernel,
            out_shape=jax.ShapeDtypeStruct((T, B, 2 * H), jnp.float32),
            in_specs=[_VMEM_SPEC] * 4,
            out_specs=_VMEM_SPEC,
        )(xp_f, xp_b, whh_f_t, whh_b_t)

    fc_w, fc_b = fc
    O = fc_w.shape[0]
    out, lin = pl.pallas_call(
        _bilstm_linear_kernel,
        out_shape=(jax.ShapeDtypeStruct((T, B, 2 * H), jnp.float32),
                   jax.ShapeDtypeStruct((B, O), jnp.float32)),
        in_specs=[_VMEM_SPEC] * 6,
        out_specs=(_VMEM_SPEC, _VMEM_SPEC),
    )(xp_f, xp_b, whh_f_t, whh_b_t, jnp.transpose(fc_w), fc_b.reshape(1, O))
    return out, lin


def lstm_model_forward(x, params_lstm1, params_lstm2, fc_w, fc_b):
    """x: (B, T, D) batch-first, like PyTorch.  Returns (out_linear, out2)."""
    # Time-major end-to-end: one transpose in, one transpose out.
    out_tm = jnp.transpose(x, (1, 0, 2))                 # (T, B, D)

    for p_fwd, p_bwd in params_lstm1:
        out_tm = bilstm_layer_tm(out_tm, p_fwd, p_bwd)

    # TODO(synk): nn.Dropout(p=0.5) treated as identity (eval-mode semantics);
    # training-mode Bernoulli masking is not reproduced.

    out_linear = None
    n_layers2 = len(params_lstm2)
    for li, (p_fwd, p_bwd) in enumerate(params_lstm2):
        if li == n_layers2 - 1:
            out_tm, out_linear = bilstm_layer_tm(out_tm, p_fwd, p_bwd,
                                                 fc=(fc_w, fc_b))
        else:
            out_tm = bilstm_layer_tm(out_tm, p_fwd, p_bwd)

    out2 = jnp.transpose(out_tm, (1, 0, 2))              # (B, T, 2H)
    return out_linear, out2


# ----------------------------------------------------------------------------
# Deterministic parameter construction (matches nn.LSTM / nn.Linear shapes)
# ----------------------------------------------------------------------------
def init_bilstm_params(key, input_dim, hidden, num_layers, num_directions=2):
    params = []
    bound = 1.0 / float(hidden) ** 0.5
    for layer in range(num_layers):
        in_d = input_dim if layer == 0 else hidden * num_directions
        dirs = []
        for _ in range(num_directions):
            key, k1, k2, k3, k4 = jax.random.split(key, 5)
            w_ih = jax.random.uniform(k1, (4 * hidden, in_d), jnp.float32,
                                      -bound, bound)
            w_hh = jax.random.uniform(k2, (4 * hidden, hidden), jnp.float32,
                                      -bound, bound)
            b_ih = jax.random.uniform(k3, (4 * hidden,), jnp.float32,
                                      -bound, bound)
            b_hh = jax.random.uniform(k4, (4 * hidden,), jnp.float32,
                                      -bound, bound)
            dirs.append((w_ih, w_hh, b_ih, b_hh))
        params.append(tuple(dirs))
    return key, params


# ----------------------------------------------------------------------------
# Pure-JAX reference (for correctness check of the Pallas path)
# ----------------------------------------------------------------------------
def _ref_direction(x_btd, p, reverse):
    w_ih, w_hh, b_ih, b_hh = p
    B, T, _ = x_btd.shape
    H = w_hh.shape[1]
    h = jnp.zeros((B, H), jnp.float32)
    c = jnp.zeros((B, H), jnp.float32)
    outs = [None] * T
    steps = range(T - 1, -1, -1) if reverse else range(T)
    for t in steps:
        gates = x_btd[:, t] @ w_ih.T + h @ w_hh.T + b_ih + b_hh
        i = jax.nn.sigmoid(gates[:, :H])
        f = jax.nn.sigmoid(gates[:, H:2 * H])
        g = jnp.tanh(gates[:, 2 * H:3 * H])
        o = jax.nn.sigmoid(gates[:, 3 * H:])
        c = f * c + i * g
        h = o * jnp.tanh(c)
        outs[t] = h
    return jnp.stack(outs, axis=1)


def _ref_bilstm(x, layer_params):
    out = x
    for p_fwd, p_bwd in layer_params:
        out = jnp.concatenate([_ref_direction(out, p_fwd, False),
                               _ref_direction(out, p_bwd, True)], axis=-1)
    return out


def _ref_forward(x, params1, params2, fc_w, fc_b):
    out1 = _ref_bilstm(x, params1)
    out2 = _ref_bilstm(out1, params2)
    return out2[:, -1, :] @ fc_w.T + fc_b, out2


# ----------------------------------------------------------------------------
if __name__ == "__main__":
    # Model hyperparameters (bidirectional_set = True -> 2 directions).
    input_dim, hidden1, hidden2, layer_dim, output_dim = 16, 32, 32, 1, 8
    batch, seq = 2, 8

    key = jax.random.PRNGKey(0)
    key, x_key = jax.random.split(key)
    x = jax.random.normal(x_key, (batch, seq, input_dim), jnp.float32)

    key, params_lstm1 = init_bilstm_params(key, input_dim, hidden1, layer_dim)
    key, params_lstm2 = init_bilstm_params(key, 2 * hidden1, hidden2, layer_dim)
    key, kw, kb = jax.random.split(key, 3)
    fc_bound = 1.0 / float(2 * hidden2) ** 0.5
    fc_w = jax.random.uniform(kw, (output_dim, 2 * hidden2), jnp.float32,
                              -fc_bound, fc_bound)
    fc_b = jax.random.uniform(kb, (output_dim,), jnp.float32,
                              -fc_bound, fc_bound)

    fwd = jax.jit(lstm_model_forward)
    out_linear, out_lstm2 = fwd(x, params_lstm1, params_lstm2, fc_w, fc_b)
    jax.block_until_ready((out_linear, out_lstm2))

    # Sanity check against pure-JAX reference.
    ref_linear, ref_lstm2 = _ref_forward(x, params_lstm1, params_lstm2,
                                         fc_w, fc_b)
    assert out_linear.shape == (batch, output_dim)
    assert out_lstm2.shape == (batch, seq, 2 * hidden2)
    assert jnp.allclose(out_lstm2, ref_lstm2, atol=2e-5, rtol=2e-5)
    assert jnp.allclose(out_linear, ref_linear, atol=2e-5, rtol=2e-5)

    print("KERNEL_OK")
</pallas_src>

<mosaic_0001>
module attributes {stable_mosaic.version = 11 : i64} {
  func.func @_bilstm_kernel(%arg0: memref<8x2x128xf32, #tpu.memory_space<vmem>>, %arg1: memref<8x2x128xf32, #tpu.memory_space<vmem>>, %arg2: memref<32x128xf32, #tpu.memory_space<vmem>>, %arg3: memref<32x128xf32, #tpu.memory_space<vmem>>, %arg4: memref<8x2x64xf32, #tpu.memory_space<vmem>>) attributes {dimension_semantics = [], scalar_prefetch = 0 : i64, scratch_operands = 0 : i64, tpu.core_type = #tpu.core_type<tc>} {
    %c0 = arith.constant 0 : index
    %c0_0 = arith.constant 0 : index
    %0 = vector.load %arg2[%c0, %c0_0] : memref<32x128xf32, #tpu.memory_space<vmem>>, vector<32x128xf32>
    %c0_1 = arith.constant 0 : index
    %c0_2 = arith.constant 0 : index
    %1 = vector.load %arg3[%c0_1, %c0_2] : memref<32x128xf32, #tpu.memory_space<vmem>>, vector<32x128xf32>
    %cst = arith.constant 0.000000e+00 : f32
    %2 = vector.broadcast %cst : f32 to vector<2x32xf32>
    %c0_i32 = arith.constant 0 : i32
    %c7_i32 = arith.constant 7 : i32
    %3 = arith.subi %c7_i32, %c0_i32 : i32
    %4 = arith.index_cast %c0_i32 : i32 to index
    %c0_3 = arith.constant 0 : index
    %c0_4 = arith.constant 0 : index
    %5 = vector.load %arg0[%4, %c0_3, %c0_4] : memref<8x2x128xf32, #tpu.memory_space<vmem>>, vector<1x2x128xf32>
    %6 = vector.shape_cast %5 : vector<1x2x128xf32> to vector<2x128xf32>
    %cst_5 = arith.constant dense<0.000000e+00> : vector<2x128xf32>
    %7 = tpu.matmul %2, %0, %cst_5 {dimension_numbers = #tpu.dot_dimension_numbers<[1], [0], [0], [1], [0, 0, 1, 1], [], []>} : vector<2x32xf32>, vector<32x128xf32>, vector<2x128xf32> -> vector<2x128xf32>
    %8 = arith.addf %6, %7 : vector<2x128xf32>
    %9 = arith.index_cast %3 : i32 to index
    %c0_6 = arith.constant 0 : index
    %c0_7 = arith.constant 0 : index
    %10 = vector.load %arg1[%9, %c0_6, %c0_7] : memref<8x2x128xf32, #tpu.memory_space<vmem>>, vector<1x2x128xf32>
    %11 = vector.shape_cast %10 : vector<1x2x128xf32> to vector<2x128xf32>
    %cst_8 = arith.constant dense<0.000000e+00> : vector<2x128xf32>
    %12 = tpu.matmul %2, %1, %cst_8 {dimension_numbers = #tpu.dot_dimension_numbers<[1], [0], [0], [1], [0, 0, 1, 1], [], []>} : vector<2x32xf32>, vector<32x128xf32>, vector<2x128xf32> -> vector<2x128xf32>
    %13 = arith.addf %11, %12 : vector<2x128xf32>
    %14 = vector.extract_strided_slice %8 {offsets = [0, 0], sizes = [2, 32], strides = [1, 1]} : vector<2x128xf32> to vector<2x32xf32>
    %15 = arith.negf %14 : vector<2x32xf32>
    %16 = math.exp %15 : vector<2x32xf32>
    %cst_9 = arith.constant 1.000000e+00 : f32
    %17 = vector.broadcast %cst_9 : f32 to vector<2x32xf32>
    %18 = arith.addf %17, %16 : vector<2x32xf32>
    %19 = arith.divf %17, %18 : vector<2x32xf32>
    %20 = vector.extract_strided_slice %8 {offsets = [0, 32], sizes = [2, 32], strides = [1, 1]} : vector<2x128xf32> to vector<2x32xf32>
    %21 = arith.negf %20 : vector<2x32xf32>
    %22 = math.exp %21 : vector<2x32xf32>
    %cst_10 = arith.constant 1.000000e+00 : f32
    %23 = vector.broadcast %cst_10 : f32 to vector<2x32xf32>
    %24 = arith.addf %23, %22 : vector<2x32xf32>
    %25 = arith.divf %23, %24 : vector<2x32xf32>
    %26 = vector.extract_strided_slice %8 {offsets = [0, 64], sizes = [2, 32], strides = [1, 1]} : vector<2x128xf32> to vector<2x32xf32>
    %27 = math.tanh %26 : vector<2x32xf32>
    %28 = vector.extract_strided_slice %8 {offsets = [0, 96], sizes = [2, 32], strides = [1, 1]} : vector<2x128xf32> to vector<2x32xf32>
    %29 = arith.negf %28 : vector<2x32xf32>
    %30 = math.exp %29 : vector<2x32xf32>
    %cst_11 = arith.constant 1.000000e+00 : f32
    %31 = vector.broadcast %cst_11 : f32 to vector<2x32xf32>
    %32 = arith.addf %31, %30 : vector<2x32xf32>
    %33 = arith.divf %31, %32 : vector<2x32xf32>
    %34 = arith.mulf %25, %2 : vector<2x32xf32>
    %35 = arith.mulf %19, %27 : vector<2x32xf32>
    %36 = arith.addf %34, %35 : vector<2x32xf32>
    %37 = math.tanh %36 : vector<2x32xf32>
    %38 = arith.mulf %33, %37 : vector<2x32xf32>
    %39 = vector.extract_strided_slice %13 {offsets = [0, 0], sizes = [2, 32], strides = [1, 1]} : vector<2x128xf32> to vector<2x32xf32>
    %40 = arith.negf %39 : vector<2x32xf32>
    %41 = math.exp %40 : vector<2x32xf32>
    %cst_12 = arith.constant 1.000000e+00 : f32
    %42 = vector.broadcast %cst_12 : f32 to vector<2x32xf32>
    %43 = arith.addf %42, %41 : vector<2x32xf32>
    %44 = arith.divf %42, %43 : vector<2x32xf32>
    %45 = vector.extract_strided_slice %13 {offsets = [0, 32], sizes = [2, 32], strides = [1, 1]} : vector<2x128xf32> to vector<2x32xf32>
    %46 = arith.negf %45 : vector<2x32xf32>
    %47 = math.exp %46 : vector<2x32xf32>
    %cst_13 = arith.constant 1.000000e+00 : f32
    %48 = vector.broadcast %cst_13 : f32 to vector<2x32xf32>
    %49 = arith.addf %48, %47 : vector<2x32xf32>
    %50 = arith.divf %48, %49 : vector<2x32xf32>
    %51 = vector.extract_strided_slice %13 {offsets = [0, 64], sizes = [2, 32], strides = [1, 1]} : vector<2x128xf32> to vector<2x32xf32>
    %52 = math.tanh %51 : vector<2x32xf32>
    %53 = vector.extract_strided_slice %13 {offsets = [0, 96], sizes = [2, 32], strides = [1, 1]} : vector<2x128xf32> to vector<2x32xf32>
    %54 = arith.negf %53 : vector<2x32xf32>
    %55 = math.exp %54 : vector<2x32xf32>
    %cst_14 = arith.constant 1.000000e+00 : f32
    %56 = vector.broadcast %cst_14 : f32 to vector<2x32xf32>
    %57 = arith.addf %56, %55 : vector<2x32xf32>
    %58 = arith.divf %56, %57 : vector<2x32xf32>
    %59 = arith.mulf %50, %2 : vector<2x32xf32>
    %60 = arith.mulf %44, %52 : vector<2x32xf32>
    %61 = arith.addf %59, %60 : vector<2x32xf32>
    %62 = math.tanh %61 : vector<2x32xf32>
    %63 = arith.mulf %58, %62 : vector<2x32xf32>
    %64 = arith.index_cast %c0_i32 : i32 to index
    %c0_15 = arith.constant 0 : index
    %c0_16 = arith.constant 0 : index
    %65 = vector.load %arg4[%64, %c0_15, %c0_16] : memref<8x2x64xf32, #tpu.memory_space<vmem>>, vector<1x2x32xf32>
    %66 = vector.shape_cast %65 : vector<1x2x32xf32> to vector<2x32xf32>
    %67 = vector.shape_cast %38 : vector<2x32xf32> to vector<1x2x32xf32>
    tpu.vector_store %arg4[%64, %c0_15, %c0_16], %67 {strides = array<i32>} : memref<8x2x64xf32, #tpu.memory_space<vmem>>, vector<1x2x32xf32>,
    %68 = arith.index_cast %3 : i32 to index
    %c0_17 = arith.constant 0 : index
    %c32 = arith.constant 32 : index
    %69 = vector.load %arg4[%68, %c0_17, %c32] : memref<8x2x64xf32, #tpu.memory_space<vmem>>, vector<1x2x32xf32>
    %70 = vector.shape_cast %69 : vector<1x2x32xf32> to vector<2x32xf32>
    %71 = vector.shape_cast %63 : vector<2x32xf32> to vector<1x2x32xf32>
    tpu.vector_store %arg4[%68, %c0_17, %c32], %71 {strides = array<i32>} : memref<8x2x64xf32, #tpu.memory_space<vmem>>, vector<1x2x32xf32>,
    %c1_i32 = arith.constant 1 : i32
    %c7_i32_18 = arith.constant 7 : i32
    %72 = arith.subi %c7_i32_18, %c1_i32 : i32
    %73 = arith.index_cast %c1_i32 : i32 to index
    %c0_19 = arith.constant 0 : index
    %c0_20 = arith.constant 0 : index
    %74 = vector.load %arg0[%73, %c0_19, %c0_20] : memref<8x2x128xf32, #tpu.memory_space<vmem>>, vector<1x2x128xf32>
    %75 = vector.shape_cast %74 : vector<1x2x128xf32> to vector<2x128xf32>
    %cst_21 = arith.constant dense<0.000000e+00> : vector<2x128xf32>
    %76 = tpu.matmul %38, %0, %cst_21 {dimension_numbers = #tpu.dot_dimension_numbers<[1], [0], [0], [1], [0, 0, 1, 1], [], []>} : vector<2x32xf32>, vector<32x128xf32>, vector<2x128xf32> -> vector<2x128xf32>
    %77 = arith.addf %75, %76 : vector<2x128xf32>
    %78 = arith.index_cast %72 : i32 to index
    %c0_22 = arith.constant 0 : index
    %c0_23 = arith.constant 0 : index
    %79 = vector.load %arg1[%78, %c0_22, %c0_23] : memref<8x2x128xf32, #tpu.memory_space<vmem>>, vector<1x2x128xf32>
    %80 = vector.shape_cast %79 : vector<1x2x128xf32> to vector<2x128xf32>
    %cst_24 = arith.constant dense<0.000000e+00> : vector<2x128xf32>
    %81 = tpu.matmul %63, %1, %cst_24 {dimension_numbers = #tpu.dot_dimension_numbers<[1], [0], [0], [1], [0, 0, 1, 1], [], []>} : vector<2x32xf32>, vector<32x128xf32>, vector<2x128xf32> -> vector<2x128xf32>
    %82 = arith.addf %80, %81 : vector<2x128xf32>
    %83 = vector.extract_strided_slice %77 {offsets = [0, 0], sizes = [2, 32], strides = [1, 1]} : vector<2x128xf32> to vector<2x32xf32>
    %84 = arith.negf %83 : vector<2x32xf32>
    %85 = math.exp %84 : vector<2x32xf32>
    %cst_25 = arith.constant 1.000000e+00 : f32
    %86 = vector.broadcast %cst_25 : f32 to vector<2x32xf32>
    %87 = arith.addf %86, %85 : vector<2x32xf32>
    %88 = arith.divf %86, %87 : vector<2x32xf32>
    %89 = vector.extract_strided_slice %77 {offsets = [0, 32], sizes = [2, 32], strides = [1, 1]} : vector<2x128xf32> to vector<2x32xf32>
    %90 = arith.negf %89 : vector<2x32xf32>
    %91 = math.exp %90 : vector<2x32xf32>
    %cst_26 = arith.constant 1.000000e+00 : f32
    %92 = vector.broadcast %cst_26 : f32 to vector<2x32xf32>
    %93 = arith.addf %92, %91 : vector<2x32xf32>
    %94 = arith.divf %92, %93 : vector<2x32xf32>
    %95 = vector.extract_strided_slice %77 {offsets = [0, 64], sizes = [2, 32], strides = [1, 1]} : vector<2x128xf32> to vector<2x32xf32>
    %96 = math.tanh %95 : vector<2x32xf32>
    %97 = vector.extract_strided_slice %77 {offsets = [0, 96], sizes = [2, 32], strides = [1, 1]} : vector<2x128xf32> to vector<2x32xf32>
    %98 = arith.negf %97 : vector<2x32xf32>
    %99 = math.exp %98 : vector<2x32xf32>
    %cst_27 = arith.constant 1.000000e+00 : f32
    %100 = vector.broadcast %cst_27 : f32 to vector<2x32xf32>
    %101 = arith.addf %100, %99 : vector<2x32xf32>
    %102 = arith.divf %100, %101 : vector<2x32xf32>
    %103 = arith.mulf %94, %36 : vector<2x32xf32>
    %104 = arith.mulf %88, %96 : vector<2x32xf32>
    %105 = arith.addf %103, %104 : vector<2x32xf32>
    %106 = math.tanh %105 : vector<2x32xf32>
    %107 = arith.mulf %102, %106 : vector<2x32xf32>
    %108 = vector.extract_strided_slice %82 {offsets = [0, 0], sizes = [2, 32], strides = [1, 1]} : vector<2x128xf32> to vector<2x32xf32>
    %109 = arith.negf %108 : vector<2x32xf32>
    %110 = math.exp %109 : vector<2x32xf32>
    %cst_28 = arith.constant 1.000000e+00 : f32
    %111 = vector.broadcast %cst_28 : f32 to vector<2x32xf32>
    %112 = arith.addf %111, %110 : vector<2x32xf32>
    %113 = arith.divf %111, %112 : vector<2x32xf32>
    %114 = vector.extract_strided_slice %82 {offsets = [0, 32], sizes = [2, 32], strides = [1, 1]} : vector<2x128xf32> to vector<2x32xf32>
    %115 = arith.negf %114 : vector<2x32xf32>
    %116 = math.exp %115 : vector<2x32xf32>
    %cst_29 = arith.constant 1.000000e+00 : f32
    %117 = vector.broadcast %cst_29 : f32 to vector<2x32xf32>
    %118 = arith.addf %117, %116 : vector<2x32xf32>
    %119 = arith.divf %117, %118 : vector<2x32xf32>
    %120 = vector.extract_strided_slice %82 {offsets = [0, 64], sizes = [2, 32], strides = [1, 1]} : vector<2x128xf32> to vector<2x32xf32>
    %121 = math.tanh %120 : vector<2x32xf32>
    %122 = vector.extract_strided_slice %82 {offsets = [0, 96], sizes = [2, 32], strides = [1, 1]} : vector<2x128xf32> to vector<2x32xf32>
    %123 = arith.negf %122 : vector<2x32xf32>
    %124 = math.exp %123 : vector<2x32xf32>
    %cst_30 = arith.constant 1.000000e+00 : f32
    %125 = vector.broadcast %cst_30 : f32 to vector<2x32xf32>
    %126 = arith.addf %125, %124 : vector<2x32xf32>
    %127 = arith.divf %125, %126 : vector<2x32xf32>
    %128 = arith.mulf %119, %61 : vector<2x32xf32>
    %129 = arith.mulf %113, %121 : vector<2x32xf32>
    %130 = arith.addf %128, %129 : vector<2x32xf32>
    %131 = math.tanh %130 : vector<2x32xf32>
    %132 = arith.mulf %127, %131 : vector<2x32xf32>
    %133 = arith.index_cast %c1_i32 : i32 to index
    %c0_31 = arith.constant 0 : index
    %c0_32 = arith.constant 0 : index
    %134 = vector.load %arg4[%133, %c0_31, %c0_32] : memref<8x2x64xf32, #tpu.memory_space<vmem>>, vector<1x2x32xf32>
    %135 = vector.shape_cast %134 : vector<1x2x32xf32> to vector<2x32xf32>
    %136 = vector.shape_cast %107 : vector<2x32xf32> to vector<1x2x32xf32>
    tpu.vector_store %arg4[%133, %c0_31, %c0_32], %136 {strides = array<i32>} : memref<8x2x64xf32, #tpu.memory_space<vmem>>, vector<1x2x32xf32>,
    %137 = arith.index_cast %72 : i32 to index
    %c0_33 = arith.constant 0 : index
    %c32_34 = arith.constant 32 : index
    %138 = vector.load %arg4[%137, %c0_33, %c32_34] : memref<8x2x64xf32, #tpu.memory_space<vmem>>, vector<1x2x32xf32>
    %139 = vector.shape_cast %138 : vector<1x2x32xf32> to vector<2x32xf32>
    %140 = vector.shape_cast %132 : vector<2x32xf32> to vector<1x2x32xf32>
    tpu.vector_store %arg4[%137, %c0_33, %c32_34], %140 {strides = array<i32>} : memref<8x2x64xf32, #tpu.memory_space<vmem>>, vector<1x2x32xf32>,
    %c2_i32 = arith.constant 2 : i32
    %c7_i32_35 = arith.constant 7 : i32
    %141 = arith.subi %c7_i32_35, %c2_i32 : i32
    %142 = arith.index_cast %c2_i32 : i32 to index
    %c0_36 = arith.constant 0 : index
    %c0_37 = arith.constant 0 : index
    %143 = vector.load %arg0[%142, %c0_36, %c0_37] : memref<8x2x128xf32, #tpu.memory_space<vmem>>, vector<1x2x128xf32>
    %144 = vector.shape_cast %143 : vector<1x2x128xf32> to vector<2x128xf32>
    %cst_38 = arith.constant dense<0.000000e+00> : vector<2x128xf32>
    %145 = tpu.matmul %107, %0, %cst_38 {dimension_numbers = #tpu.dot_dimension_numbers<[1], [0], [0], [1], [0, 0, 1, 1], [], []>} : vector<2x32xf32>, vector<32x128xf32>, vector<2x128xf32> -> vector<2x128xf32>
    %146 = arith.addf %144, %145 : vector<2x128xf32>
    %147 = arith.index_cast %141 : i32 to index
    %c0_39 = arith.constant 0 : index
    %c0_40 = arith.constant 0 : index
    %148 = vector.load %arg1[%147, %c0_39, %c0_40] : memref<8x2x128xf32, #tpu.memory_space<vmem>>, vector<1x2x128xf32>
    %149 = vector.shape_cast %148 : vector<1x2x128xf32> to vector<2x128xf32>
    %cst_41 = arith.constant dense<0.000000e+00> : vector<2x128xf32>
    %150 = tpu.matmul %132, %1, %cst_41 {dimension_numbers = #tpu.dot_dimension_numbers<[1], [0], [0], [1], [0, 0, 1, 1], [], []>} : vector<2x32xf32>, vector<32x128xf32>, vector<2x128xf32> -> vector<2x128xf32>
    %151 = arith.addf %149, %150 : vector<2x128xf32>
    %152 = vector.extract_strided_slice %146 {offsets = [0, 0], sizes = [2, 32], strides = [1, 1]} : vector<2x128xf32> to vector<2x32xf32>
    %153 = arith.negf %152 : vector<2x32xf32>
    %154 = math.exp %153 : vector<2x32xf32>
    %cst_42 = arith.constant 1.000000e+00 : f32
    %155 = vector.broadcast %cst_42 : f32 to vector<2x32xf32>
    %156 = arith.addf %155, %154 : vector<2x32xf32>
    %157 = arith.divf %155, %156 : vector<2x32xf32>
    %158 = vector.extract_strided_slice %146 {offsets = [0, 32], sizes = [2, 32], strides = [1, 1]} : vector<2x128xf32> to vector<2x32xf32>
    %159 = arith.negf %158 : vector<2x32xf32>
    %160 = math.exp %159 : vector<2x32xf32>
    %cst_43 = arith.constant 1.000000e+00 : f32
    %161 = vector.broadcast %cst_43 : f32 to vector<2x32xf32>
    %162 = arith.addf %161, %160 : vector<2x32xf32>
    %163 = arith.divf %161, %162 : vector<2x32xf32>
    %164 = vector.extract_strided_slice %146 {offsets = [0, 64], sizes = [2, 32], strides = [1, 1]} : vector<2x128xf32> to vector<2x32xf32>
    %165 = math.tanh %164 : vector<2x32xf32>
    %166 = vector.extract_strided_slice %146 {offsets = [0, 96], sizes = [2, 32], strides = [1, 1]} : vector<2x128xf32> to vector<2x32xf32>
    %167 = arith.negf %166 : vector<2x32xf32>
    %168 = math.exp %167 : vector<2x32xf32>
    %cst_44 = arith.constant 1.000000e+00 : f32
    %169 = vector.broadcast %cst_44 : f32 to vector<2x32xf32>
    %170 = arith.addf %169, %168 : vector<2x32xf32>
    %171 = arith.divf %169, %170 : vector<2x32xf32>
    %172 = arith.mulf %163, %105 : vector<2x32xf32>
    %173 = arith.mulf %157, %165 : vector<2x32xf32>
    %174 = arith.addf %172, %173 : vector<2x32xf32>
    %175 = math.tanh %174 : vector<2x32xf32>
    %176 = arith.mulf %171, %175 : vector<2x32xf32>
    %177 = vector.extract_strided_slice %151 {offsets = [0, 0], sizes = [2, 32], strides = [1, 1]} : vector<2x128xf32> to vector<2x32xf32>
    %178 = arith.negf %177 : vector<2x32xf32>
    %179 = math.exp %178 : vector<2x32xf32>
    %cst_45 = arith.constant 1.000000e+00 : f32
    %180 = vector.broadcast %cst_45 : f32 to vector<2x32xf32>
    %181 = arith.addf %180, %179 : vector<2x32xf32>
    %182 = arith.divf %180, %181 : vector<2x32xf32>
    %183 = vector.extract_strided_slice %151 {offsets = [0, 32], sizes = [2, 32], strides = [1, 1]} : vector<2x128xf32> to vector<2x32xf32>
    %184 = arith.negf %183 : vector<2x32xf32>
    %185 = math.exp %184 : vector<2x32xf32>
    %cst_46 = arith.constant 1.000000e+00 : f32
    %186 = vector.broadcast %cst_46 : f32 to vector<2x32xf32>
    %187 = arith.addf %186, %185 : vector<2x32xf32>
    %188 = arith.divf %186, %187 : vector<2x32xf32>
    %189 = vector.extract_strided_slice %151 {offsets = [0, 64], sizes = [2, 32], strides = [1, 1]} : vector<2x128xf32> to vector<2x32xf32>
    %190 = math.tanh %189 : vector<2x32xf32>
    %191 = vector.extract_strided_slice %151 {offsets = [0, 96], sizes = [2, 32], strides = [1, 1]} : vector<2x128xf32> to vector<2x32xf32>
    %192 = arith.negf %191 : vector<2x32xf32>
    %193 = math.exp %192 : vector<2x32xf32>
    %cst_47 = arith.constant 1.000000e+00 : f32
    %194 = vector.broadcast %cst_47 : f32 to vector<2x32xf32>
    %195 = arith.addf %194, %193 : vector<2x32xf32>
    %196 = arith.divf %194, %195 : vector<2x32xf32>
    %197 = arith.mulf %188, %130 : vector<2x32xf32>
    %198 = arith.mulf %182, %190 : vector<2x32xf32>
    %199 = arith.addf %197, %198 : vector<2x32xf32>
    %200 = math.tanh %199 : vector<2x32xf32>
    %201 = arith.mulf %196, %200 : vector<2x32xf32>
    %202 = arith.index_cast %c2_i32 : i32 to index
    %c0_48 = arith.constant 0 : index
    %c0_49 = arith.constant 0 : index
    %203 = vector.load %arg4[%202, %c0_48, %c0_49] : memref<8x2x64xf32, #tpu.memory_space<vmem>>, vector<1x2x32xf32>
    %204 = vector.shape_cast %203 : vector<1x2x32xf32> to vector<2x32xf32>
    %205 = vector.shape_cast %176 : vector<2x32xf32> to vector<1x2x32xf32>
    tpu.vector_store %arg4[%202, %c0_48, %c0_49], %205 {strides = array<i32>} : memref<8x2x64xf32, #tpu.memory_space<vmem>>, vector<1x2x32xf32>,
    %206 = arith.index_cast %141 : i32 to index
    %c0_50 = arith.constant 0 : index
    %c32_51 = arith.constant 32 : index
    %207 = vector.load %arg4[%206, %c0_50, %c32_51] : memref<8x2x64xf32, #tpu.memory_space<vmem>>, vector<1x2x32xf32>
    %208 = vector.shape_cast %207 : vector<1x2x32xf32> to vector<2x32xf32>
    %209 = vector.shape_cast %201 : vector<2x32xf32> to vector<1x2x32xf32>
    tpu.vector_store %arg4[%206, %c0_50, %c32_51], %209 {strides = array<i32>} : memref<8x2x64xf32, #tpu.memory_space<vmem>>, vector<1x2x32xf32>,
    %c3_i32 = arith.constant 3 : i32
    %c7_i32_52 = arith.constant 7 : i32
    %210 = arith.subi %c7_i32_52, %c3_i32 : i32
    %211 = arith.index_cast %c3_i32 : i32 to index
    %c0_53 = arith.constant 0 : index
    %c0_54 = arith.constant 0 : index
    %212 = vector.load %arg0[%211, %c0_53, %c0_54] : memref<8x2x128xf32, #tpu.memory_space<vmem>>, vector<1x2x128xf32>
    %213 = vector.shape_cast %212 : vector<1x2x128xf32> to vector<2x128xf32>
    %cst_55 = arith.constant dense<0.000000e+00> : vector<2x128xf32>
    %214 = tpu.matmul %176, %0, %cst_55 {dimension_numbers = #tpu.dot_dimension_numbers<[1], [0], [0], [1], [0, 0, 1, 1], [], []>} : vector<2x32xf32>, vector<32x128xf32>, vector<2x128xf32> -> vector<2x128xf32>
    %215 = arith.addf %213, %214 : vector<2x128xf32>
    %216 = arith.index_cast %210 : i32 to index
    %c0_56 = arith.constant 0 : index
    %c0_57 = arith.constant 0 : index
    %217 = vector.load %arg1[%216, %c0_56, %c0_57] : memref<8x2x128xf32, #tpu.memory_space<vmem>>, vector<1x2x128xf32>
    %218 = vector.shape_cast %217 : vector<1x2x128xf32> to vector<2x128xf32>
    %cst_58 = arith.constant dense<0.000000e+00> : vector<2x128xf32>
    %219 = tpu.matmul %201, %1, %cst_58 {dimension_numbers = #tpu.dot_dimension_numbers<[1], [0], [0], [1], [0, 0, 1, 1], [], []>} : vector<2x32xf32>, vector<32x128xf32>, vector<2x128xf32> -> vector<2x128xf32>
    %220 = arith.addf %218, %219 : vector<2x128xf32>
    %221 = vector.extract_strided_slice %215 {offsets = [0, 0], sizes = [2, 32], strides = [1, 1]} : vector<2x128xf32> to vector<2x32xf32>
    %222 = arith.negf %221 : vector<2x32xf32>
    %223 = math.exp %222 : vector<2x32xf32>
    %cst_59 = arith.constant 1.000000e+00 : f32
    %224 = vector.broadcast %cst_59 : f32 to vector<2x32xf32>
    %225 = arith.addf %224, %223 : vector<2x32xf32>
    %226 = arith.divf %224, %225 : vector<2x32xf32>
    %227 = vector.extract_strided_slice %215 {offsets = [0, 32], sizes = [2, 32], strides = [1, 1]} : vector<2x128xf32> to vector<2x32xf32>
    %228 = arith.negf %227 : vector<2x32xf32>
    %229 = math.exp %228 : vector<2x32xf32>
    %cst_60 = arith.constant 1.000000e+00 : f32
    %230 = vector.broadcast %cst_60 : f32 to vector<2x32xf32>
    %231 = arith.addf %230, %229 : vector<2x32xf32>
    %232 = arith.divf %230, %231 : vector<2x32xf32>
    %233 = vector.extract_strided_slice %215 {offsets = [0, 64], sizes = [2, 32], strides = [1, 1]} : vector<2x128xf32> to vector<2x32xf32>
    %234 = math.tanh %233 : vector<2x32xf32>
    %235 = vector.extract_strided_slice %215 {offsets = [0, 96], sizes = [2, 32], strides = [1, 1]} : vector<2x128xf32> to vector<2x32xf32>
    %236 = arith.negf %235 : vector<2x32xf32>
    %237 = math.exp %236 : vector<2x32xf32>
    %cst_61 = arith.constant 1.000000e+00 : f32
    %238 = vector.broadcast %cst_61 : f32 to vector<2x32xf32>
    %239 = arith.addf %238, %237 : vector<2x32xf32>
    %240 = arith.divf %238, %239 : vector<2x32xf32>
    %241 = arith.mulf %232, %174 : vector<2x32xf32>
    %242 = arith.mulf %226, %234 : vector<2x32xf32>
    %243 = arith.addf %241, %242 : vector<2x32xf32>
    %244 = math.tanh %243 : vector<2x32xf32>
    %245 = arith.mulf %240, %244 : vector<2x32xf32>
    %246 = vector.extract_strided_slice %220 {offsets = [0, 0], sizes = [2, 32], strides = [1, 1]} : vector<2x128xf32> to vector<2x32xf32>
    %247 = arith.negf %246 : vector<2x32xf32>
    %248 = math.exp %247 : vector<2x32xf32>
    %cst_62 = arith.constant 1.000000e+00 : f32
    %249 = vector.broadcast %cst_62 : f32 to vector<2x32xf32>
    %250 = arith.addf %249, %248 : vector<2x32xf32>
    %251 = arith.divf %249, %250 : vector<2x32xf32>
    %252 = vector.extract_strided_slice %220 {offsets = [0, 32], sizes = [2, 32], strides = [1, 1]} : vector<2x128xf32> to vector<2x32xf32>
    %253 = arith.negf %252 : vector<2x32xf32>
    %254 = math.exp %253 : vector<2x32xf32>
    %cst_63 = arith.constant 1.000000e+00 : f32
    %255 = vector.broadcast %cst_63 : f32 to vector<2x32xf32>
    %256 = arith.addf %255, %254 : vector<2x32xf32>
    %257 = arith.divf %255, %256 : vector<2x32xf32>
    %258 = vector.extract_strided_slice %220 {offsets = [0, 64], sizes = [2, 32], strides = [1, 1]} : vector<2x128xf32> to vector<2x32xf32>
    %259 = math.tanh %258 : vector<2x32xf32>
    %260 = vector.extract_strided_slice %220 {offsets = [0, 96], sizes = [2, 32], strides = [1, 1]} : vector<2x128xf32> to vector<2x32xf32>
    %261 = arith.negf %260 : vector<2x32xf32>
    %262 = math.exp %261 : vector<2x32xf32>
    %cst_64 = arith.constant 1.000000e+00 : f32
    %263 = vector.broadcast %cst_64 : f32 to vector<2x32xf32>
    %264 = arith.addf %263, %262 : vector<2x32xf32>
    %265 = arith.divf %263, %264 : vector<2x32xf32>
    %266 = arith.mulf %257, %199 : vector<2x32xf32>
    %267 = arith.mulf %251, %259 : vector<2x32xf32>
    %268 = arith.addf %266, %267 : vector<2x32xf32>
    %269 = math.tanh %268 : vector<2x32xf32>
    %270 = arith.mulf %265, %269 : vector<2x32xf32>
    %271 = arith.index_cast %c3_i32 : i32 to index
    %c0_65 = arith.constant 0 : index
    %c0_66 = arith.constant 0 : index
    %272 = vector.load %arg4[%271, %c0_65, %c0_66] : memref<8x2x64xf32, #tpu.memory_space<vmem>>, vector<1x2x32xf32>
    %273 = vector.shape_cast %272 : vector<1x2x32xf32> to vector<2x32xf32>
    %274 = vector.shape_cast %245 : vector<2x32xf32> to vector<1x2x32xf32>
    tpu.vector_store %arg4[%271, %c0_65, %c0_66], %274 {strides = array<i32>} : memref<8x2x64xf32, #tpu.memory_space<vmem>>, vector<1x2x32xf32>,
    %275 = arith.index_cast %210 : i32 to index
    %c0_67 = arith.constant 0 : index
    %c32_68 = arith.constant 32 : index
    %276 = vector.load %arg4[%275, %c0_67, %c32_68] : memref<8x2x64xf32, #tpu.memory_space<vmem>>, vector<1x2x32xf32>
    %277 = vector.shape_cast %276 : vector<1x2x32xf32> to vector<2x32xf32>
    %278 = vector.shape_cast %270 : vector<2x32xf32> to vector<1x2x32xf32>
    tpu.vector_store %arg4[%275, %c0_67, %c32_68], %278 {strides = array<i32>} : memref<8x2x64xf32, #tpu.memory_space<vmem>>, vector<1x2x32xf32>,
    %c4_i32 = arith.constant 4 : i32
    %c7_i32_69 = arith.constant 7 : i32
    %279 = arith.subi %c7_i32_69, %c4_i32 : i32
    %280 = arith.index_cast %c4_i32 : i32 to index
    %c0_70 = arith.constant 0 : index
    %c0_71 = arith.constant 0 : index
    %281 = vector.load %arg0[%280, %c0_70, %c0_71] : memref<8x2x128xf32, #tpu.memory_space<vmem>>, vector<1x2x128xf32>
    %282 = vector.shape_cast %281 : vector<1x2x128xf32> to vector<2x128xf32>
    %cst_72 = arith.constant dense<0.000000e+00> : vector<2x128xf32>
    %283 = tpu.matmul %245, %0, %cst_72 {dimension_numbers = #tpu.dot_dimension_numbers<[1], [0], [0], [1], [0, 0, 1, 1], [], []>} : vector<2x32xf32>, vector<32x128xf32>, vector<2x128xf32> -> vector<2x128xf32>
    %284 = arith.addf %282, %283 : vector<2x128xf32>
    %285 = arith.index_cast %279 : i32 to index
    %c0_73 = arith.constant 0 : index
    %c0_74 = arith.constant 0 : index
    %286 = vector.load %arg1[%285, %c0_73, %c0_74] : memref<8x2x128xf32, #tpu.memory_space<vmem>>, vector<1x2x128xf32>
    %287 = vector.shape_cast %286 : vector<1x2x128xf32> to vector<2x128xf32>
    %cst_75 = arith.constant dense<0.000000e+00> : vector<2x128xf32>
    %288 = tpu.matmul %270, %1, %cst_75 {dimension_numbers = #tpu.dot_dimension_numbers<[1], [0], [0], [1], [0, 0, 1, 1], [], []>} : vector<2x32xf32>, vector<32x128xf32>, vector<2x128xf32> -> vector<2x128xf32>
    %289 = arith.addf %287, %288 : vector<2x128xf32>
    %290 = vector.extract_strided_slice %284 {offsets = [0, 0], sizes = [2, 32], strides = [1, 1]} : vector<2x128xf32> to vector<2x32xf32>
    %291 = arith.negf %290 : vector<2x32xf32>
    %292 = math.exp %291 : vector<2x32xf32>
    %cst_76 = arith.constant 1.000000e+00 : f32
    %293 = vector.broadcast %cst_76 : f32 to vector<2x32xf32>
    %294 = arith.addf %293, %292 : vector<2x32xf32>
    %295 = arith.divf %293, %294 : vector<2x32xf32>
    %296 = vector.extract_strided_slice %284 {offsets = [0, 32], sizes = [2, 32], strides = [1, 1]} : vector<2x128xf32> to vector<2x32xf32>
    %297 = arith.negf %296 : vector<2x32xf32>
    %298 = math.exp %297 : vector<2x32xf32>
    %cst_77 = arith.constant 1.000000e+00 : f32
    %299 = vector.broadcast %cst_77 : f32 to vector<2x32xf32>
    %300 = arith.addf %299, %298 : vector<2x32xf32>
    %301 = arith.divf %299, %300 : vector<2x32xf32>
    %302 = vector.extract_strided_slice %284 {offsets = [0, 64], sizes = [2, 32], strides = [1, 1]} : vector<2x128xf32> to vector<2x32xf32>
    %303 = math.tanh %302 : vector<2x32xf32>
    %304 = vector.extract_strided_slice %284 {offsets = [0, 96], sizes = [2, 32], strides = [1, 1]} : vector<2x128xf32> to vector<2x32xf32>
    %305 = arith.negf %304 : vector<2x32xf32>
    %306 = math.exp %305 : vector<2x32xf32>
    %cst_78 = arith.constant 1.000000e+00 : f32
    %307 = vector.broadcast %cst_78 : f32 to vector<2x32xf32>
    %308 = arith.addf %307, %306 : vector<2x32xf32>
    %309 = arith.divf %307, %308 : vector<2x32xf32>
    %310 = arith.mulf %301, %243 : vector<2x32xf32>
    %311 = arith.mulf %295, %303 : vector<2x32xf32>
    %312 = arith.addf %310, %311 : vector<2x32xf32>
    %313 = math.tanh %312 : vector<2x32xf32>
    %314 = arith.mulf %309, %313 : vector<2x32xf32>
    %315 = vector.extract_strided_slice %289 {offsets = [0, 0], sizes = [2, 32], strides = [1, 1]} : vector<2x128xf32> to vector<2x32xf32>
    %316 = arith.negf %315 : vector<2x32xf32>
    %317 = math.exp %316 : vector<2x32xf32>
    %cst_79 = arith.constant 1.000000e+00 : f32
    %318 = vector.broadcast %cst_79 : f32 to vector<2x32xf32>
    %319 = arith.addf %318, %317 : vector<2x32xf32>
    %320 = arith.divf %318, %319 : vector<2x32xf32>
    %321 = vector.extract_strided_slice %289 {offsets = [0, 32], sizes = [2, 32], strides = [1, 1]} : vector<2x128xf32> to vector<2x32xf32>
    %322 = arith.negf %321 : vector<2x32xf32>
    %323 = math.exp %322 : vector<2x32xf32>
    %cst_80 = arith.constant 1.000000e+00 : f32
    %324 = vector.broadcast %cst_80 : f32 to vector<2x32xf32>
    %325 = arith.addf %324, %323 : vector<2x32xf32>
    %326 = arith.divf %324, %325 : vector<2x32xf32>
    %327 = vector.extract_strided_slice %289 {offsets = [0, 64], sizes = [2, 32], strides = [1, 1]} : vector<2x128xf32> to vector<2x32xf32>
    %328 = math.tanh %327 : vector<2x32xf32>
    %329 = vector.extract_strided_slice %289 {offsets = [0, 96], sizes = [2, 32], strides = [1, 1]} : vector<2x128xf32> to vector<2x32xf32>
    %330 = arith.negf %329 : vector<2x32xf32>
    %331 = math.exp %330 : vector<2x32xf32>
    %cst_81 = arith.constant 1.000000e+00 : f32
    %332 = vector.broadcast %cst_81 : f32 to vector<2x32xf32>
    %333 = arith.addf %332, %331 : vector<2x32xf32>
    %334 = arith.divf %332, %333 : vector<2x32xf32>
    %335 = arith.mulf %326, %268 : vector<2x32xf32>
    %336 = arith.mulf %320, %328 : vector<2x32xf32>
    %337 = arith.addf %335, %336 : vector<2x32xf32>
    %338 = math.tanh %337 : vector<2x32xf32>
    %339 = arith.mulf %334, %338 : vector<2x32xf32>
    %340 = arith.index_cast %c4_i32 : i32 to index
    %c0_82 = arith.constant 0 : index
    %c0_83 = arith.constant 0 : index
    %341 = vector.load %arg4[%340, %c0_82, %c0_83] : memref<8x2x64xf32, #tpu.memory_space<vmem>>, vector<1x2x32xf32>
    %342 = vector.shape_cast %341 : vector<1x2x32xf32> to vector<2x32xf32>
    %343 = vector.shape_cast %314 : vector<2x32xf32> to vector<1x2x32xf32>
    tpu.vector_store %arg4[%340, %c0_82, %c0_83], %343 {strides = array<i32>} : memref<8x2x64xf32, #tpu.memory_space<vmem>>, vector<1x2x32xf32>,
    %344 = arith.index_cast %279 : i32 to index
    %c0_84 = arith.constant 0 : index
    %c32_85 = arith.constant 32 : index
    %345 = vector.load %arg4[%344, %c0_84, %c32_85] : memref<8x2x64xf32, #tpu.memory_space<vmem>>, vector<1x2x32xf32>
    %346 = vector.shape_cast %345 : vector<1x2x32xf32> to vector<2x32xf32>
    %347 = vector.shape_cast %339 : vector<2x32xf32> to vector<1x2x32xf32>
    tpu.vector_store %arg4[%344, %c0_84, %c32_85], %347 {strides = array<i32>} : memref<8x2x64xf32, #tpu.memory_space<vmem>>, vector<1x2x32xf32>,
    %c5_i32 = arith.constant 5 : i32
    %c7_i32_86 = arith.constant 7 : i32
    %348 = arith.subi %c7_i32_86, %c5_i32 : i32
    %349 = arith.index_cast %c5_i32 : i32 to index
    %c0_87 = arith.constant 0 : index
    %c0_88 = arith.constant 0 : index
    %350 = vector.load %arg0[%349, %c0_87, %c0_88] : memref<8x2x128xf32, #tpu.memory_space<vmem>>, vector<1x2x128xf32>
    %351 = vector.shape_cast %350 : vector<1x2x128xf32> to vector<2x128xf32>
    %cst_89 = arith.constant dense<0.000000e+00> : vector<2x128xf32>
    %352 = tpu.matmul %314, %0, %cst_89 {dimension_numbers = #tpu.dot_dimension_numbers<[1], [0], [0], [1], [0, 0, 1, 1], [], []>} : vector<2x32xf32>, vector<32x128xf32>, vector<2x128xf32> -> vector<2x128xf32>
    %353 = arith.addf %351, %352 : vector<2x128xf32>
    %354 = arith.index_cast %348 : i32 to index
    %c0_90 = arith.constant 0 : index
    %c0_91 = arith.constant 0 : index
    %355 = vector.load %arg1[%354, %c0_90, %c0_91] : memref<8x2x128xf32, #tpu.memory_space<vmem>>, vector<1x2x128xf32>
    %356 = vector.shape_cast %355 : vector<1x2x128xf32> to vector<2x128xf32>
    %cst_92 = arith.constant dense<0.000000e+00> : vector<2x128xf32>
    %357 = tpu.matmul %339, %1, %cst_92 {dimension_numbers = #tpu.dot_dimension_numbers<[1], [0], [0], [1], [0, 0, 1, 1], [], []>} : vector<2x32xf32>, vector<32x128xf32>, vector<2x128xf32> -> vector<2x128xf32>
    %358 = arith.addf %356, %357 : vector<2x128xf32>
    %359 = vector.extract_strided_slice %353 {offsets = [0, 0], sizes = [2, 32], strides = [1, 1]} : vector<2x128xf32> to vector<2x32xf32>
    %360 = arith.negf %359 : vector<2x32xf32>
    %361 = math.exp %360 : vector<2x32xf32>
    %cst_93 = arith.constant 1.000000e+00 : f32
    %362 = vector.broadcast %cst_93 : f32 to vector<2x32xf32>
    %363 = arith.addf %362, %361 : vector<2x32xf32>
    %364 = arith.divf %362, %363 : vector<2x32xf32>
    %365 = vector.extract_strided_slice %353 {offsets = [0, 32], sizes = [2, 32], strides = [1, 1]} : vector<2x128xf32> to vector<2x32xf32>
    %366 = arith.negf %365 : vector<2x32xf32>
    %367 = math.exp %366 : vector<2x32xf32>
    %cst_94 = arith.constant 1.000000e+00 : f32
    %368 = vector.broadcast %cst_94 : f32 to vector<2x32xf32>
    %369 = arith.addf %368, %367 : vector<2x32xf32>
    %370 = arith.divf %368, %369 : vector<2x32xf32>
    %371 = vector.extract_strided_slice %353 {offsets = [0, 64], sizes = [2, 32], strides = [1, 1]} : vector<2x128xf32> to vector<2x32xf32>
    %372 = math.tanh %371 : vector<2x32xf32>
    %373 = vector.extract_strided_slice %353 {offsets = [0, 96], sizes = [2, 32], strides = [1, 1]} : vector<2x128xf32> to vector<2x32xf32>
    %374 = arith.negf %373 : vector<2x32xf32>
    %375 = math.exp %374 : vector<2x32xf32>
    %cst_95 = arith.constant 1.000000e+00 : f32
    %376 = vector.broadcast %cst_95 : f32 to vector<2x32xf32>
    %377 = arith.addf %376, %375 : vector<2x32xf32>
    %378 = arith.divf %376, %377 : vector<2x32xf32>
    %379 = arith.mulf %370, %312 : vector<2x32xf32>
    %380 = arith.mulf %364, %372 : vector<2x32xf32>
    %381 = arith.addf %379, %380 : vector<2x32xf32>
    %382 = math.tanh %381 : vector<2x32xf32>
    %383 = arith.mulf %378, %382 : vector<2x32xf32>
    %384 = vector.extract_strided_slice %358 {offsets = [0, 0], sizes = [2, 32], strides = [1, 1]} : vector<2x128xf32> to vector<2x32xf32>
    %385 = arith.negf %384 : vector<2x32xf32>
    %386 = math.exp %385 : vector<2x32xf32>
    %cst_96 = arith.constant 1.000000e+00 : f32
    %387 = vector.broadcast %cst_96 : f32 to vector<2x32xf32>
    %388 = arith.addf %387, %386 : vector<2x32xf32>
    %389 = arith.divf %387, %388 : vector<2x32xf32>
    %390 = vector.extract_strided_slice %358 {offsets = [0, 32], sizes = [2, 32], strides = [1, 1]} : vector<2x128xf32> to vector<2x32xf32>
    %391 = arith.negf %390 : vector<2x32xf32>
    %392 = math.exp %391 : vector<2x32xf32>
    %cst_97 = arith.constant 1.000000e+00 : f32
    %393 = vector.broadcast %cst_97 : f32 to vector<2x32xf32>
    %394 = arith.addf %393, %392 : vector<2x32xf32>
    %395 = arith.divf %393, %394 : vector<2x32xf32>
    %396 = vector.extract_strided_slice %358 {offsets = [0, 64], sizes = [2, 32], strides = [1, 1]} : vector<2x128xf32> to vector<2x32xf32>
    %397 = math.tanh %396 : vector<2x32xf32>
    %398 = vector.extract_strided_slice %358 {offsets = [0, 96], sizes = [2, 32], strides = [1, 1]} : vector<2x128xf32> to vector<2x32xf32>
    %399 = arith.negf %398 : vector<2x32xf32>
    %400 = math.exp %399 : vector<2x32xf32>
    %cst_98 = arith.constant 1.000000e+00 : f32
    %401 = vector.broadcast %cst_98 : f32 to vector<2x32xf32>
    %402 = arith.addf %401, %400 : vector<2x32xf32>
    %403 = arith.divf %401, %402 : vector<2x32xf32>
    %404 = arith.mulf %395, %337 : vector<2x32xf32>
    %405 = arith.mulf %389, %397 : vector<2x32xf32>
    %406 = arith.addf %404, %405 : vector<2x32xf32>
    %407 = math.tanh %406 : vector<2x32xf32>
    %408 = arith.mulf %403, %407 : vector<2x32xf32>
    %409 = arith.index_cast %c5_i32 : i32 to index
    %c0_99 = arith.constant 0 : index
    %c0_100 = arith.constant 0 : index
    %410 = vector.load %arg4[%409, %c0_99, %c0_100] : memref<8x2x64xf32, #tpu.memory_space<vmem>>, vector<1x2x32xf32>
    %411 = vector.shape_cast %410 : vector<1x2x32xf32> to vector<2x32xf32>
    %412 = vector.shape_cast %383 : vector<2x32xf32> to vector<1x2x32xf32>
    tpu.vector_store %arg4[%409, %c0_99, %c0_100], %412 {strides = array<i32>} : memref<8x2x64xf32, #tpu.memory_space<vmem>>, vector<1x2x32xf32>,
    %413 = arith.index_cast %348 : i32 to index
    %c0_101 = arith.constant 0 : index
    %c32_102 = arith.constant 32 : index
    %414 = vector.load %arg4[%413, %c0_101, %c32_102] : memref<8x2x64xf32, #tpu.memory_space<vmem>>, vector<1x2x32xf32>
    %415 = vector.shape_cast %414 : vector<1x2x32xf32> to vector<2x32xf32>
    %416 = vector.shape_cast %408 : vector<2x32xf32> to vector<1x2x32xf32>
    tpu.vector_store %arg4[%413, %c0_101, %c32_102], %416 {strides = array<i32>} : memref<8x2x64xf32, #tpu.memory_space<vmem>>, vector<1x2x32xf32>,
    %c6_i32 = arith.constant 6 : i32
    %c7_i32_103 = arith.constant 7 : i32
    %417 = arith.subi %c7_i32_103, %c6_i32 : i32
    %418 = arith.index_cast %c6_i32 : i32 to index
    %c0_104 = arith.constant 0 : index
    %c0_105 = arith.constant 0 : index
    %419 = vector.load %arg0[%418, %c0_104, %c0_105] : memref<8x2x128xf32, #tpu.memory_space<vmem>>, vector<1x2x128xf32>
    %420 = vector.shape_cast %419 : vector<1x2x128xf32> to vector<2x128xf32>
    %cst_106 = arith.constant dense<0.000000e+00> : vector<2x128xf32>
    %421 = tpu.matmul %383, %0, %cst_106 {dimension_numbers = #tpu.dot_dimension_numbers<[1], [0], [0], [1], [0, 0, 1, 1], [], []>} : vector<2x32xf32>, vector<32x128xf32>, vector<2x128xf32> -> vector<2x128xf32>
    %422 = arith.addf %420, %421 : vector<2x128xf32>
    %423 = arith.index_cast %417 : i32 to index
    %c0_107 = arith.constant 0 : index
    %c0_108 = arith.constant 0 : index
    %424 = vector.load %arg1[%423, %c0_107, %c0_108] : memref<8x2x128xf32, #tpu.memory_space<vmem>>, vector<1x2x128xf32>
    %425 = vector.shape_cast %424 : vector<1x2x128xf32> to vector<2x128xf32>
    %cst_109 = arith.constant dense<0.000000e+00> : vector<2x128xf32>
    %426 = tpu.matmul %408, %1, %cst_109 {dimension_numbers = #tpu.dot_dimension_numbers<[1], [0], [0], [1], [0, 0, 1, 1], [], []>} : vector<2x32xf32>, vector<32x128xf32>, vector<2x128xf32> -> vector<2x128xf32>
    %427 = arith.addf %425, %426 : vector<2x128xf32>
    %428 = vector.extract_strided_slice %422 {offsets = [0, 0], sizes = [2, 32], strides = [1, 1]} : vector<2x128xf32> to vector<2x32xf32>
    %429 = arith.negf %428 : vector<2x32xf32>
    %430 = math.exp %429 : vector<2x32xf32>
    %cst_110 = arith.constant 1.000000e+00 : f32
    %431 = vector.broadcast %cst_110 : f32 to vector<2x32xf32>
    %432 = arith.addf %431, %430 : vector<2x32xf32>
    %433 = arith.divf %431, %432 : vector<2x32xf32>
    %434 = vector.extract_strided_slice %422 {offsets = [0, 32], sizes = [2, 32], strides = [1, 1]} : vector<2x128xf32> to vector<2x32xf32>
    %435 = arith.negf %434 : vector<2x32xf32>
    %436 = math.exp %435 : vector<2x32xf32>
    %cst_111 = arith.constant 1.000000e+00 : f32
    %437 = vector.broadcast %cst_111 : f32 to vector<2x32xf32>
    %438 = arith.addf %437, %436 : vector<2x32xf32>
    %439 = arith.divf %437, %438 : vector<2x32xf32>
    %440 = vector.extract_strided_slice %422 {offsets = [0, 64], sizes = [2, 32], strides = [1, 1]} : vector<2x128xf32> to vector<2x32xf32>
    %441 = math.tanh %440 : vector<2x32xf32>
    %442 = vector.extract_strided_slice %422 {offsets = [0, 96], sizes = [2, 32], strides = [1, 1]} : vector<2x128xf32> to vector<2x32xf32>
    %443 = arith.negf %442 : vector<2x32xf32>
    %444 = math.exp %443 : vector<2x32xf32>
    %cst_112 = arith.constant 1.000000e+00 : f32
    %445 = vector.broadcast %cst_112 : f32 to vector<2x32xf32>
    %446 = arith.addf %445, %444 : vector<2x32xf32>
    %447 = arith.divf %445, %446 : vector<2x32xf32>
    %448 = arith.mulf %439, %381 : vector<2x32xf32>
    %449 = arith.mulf %433, %441 : vector<2x32xf32>
    %450 = arith.addf %448, %449 : vector<2x32xf32>
    %451 = math.tanh %450 : vector<2x32xf32>
    %452 = arith.mulf %447, %451 : vector<2x32xf32>
    %453 = vector.extract_strided_slice %427 {offsets = [0, 0], sizes = [2, 32], strides = [1, 1]} : vector<2x128xf32> to vector<2x32xf32>
    %454 = arith.negf %453 : vector<2x32xf32>
    %455 = math.exp %454 : vector<2x32xf32>
    %cst_113 = arith.constant 1.000000e+00 : f32
    %456 = vector.broadcast %cst_113 : f32 to vector<2x32xf32>
    %457 = arith.addf %456, %455 : vector<2x32xf32>
    %458 = arith.divf %456, %457 : vector<2x32xf32>
    %459 = vector.extract_strided_slice %427 {offsets = [0, 32], sizes = [2, 32], strides = [1, 1]} : vector<2x128xf32> to vector<2x32xf32>
    %460 = arith.negf %459 : vector<2x32xf32>
    %461 = math.exp %460 : vector<2x32xf32>
    %cst_114 = arith.constant 1.000000e+00 : f32
    %462 = vector.broadcast %cst_114 : f32 to vector<2x32xf32>
    %463 = arith.addf %462, %461 : vector<2x32xf32>
    %464 = arith.divf %462, %463 : vector<2x32xf32>
    %465 = vector.extract_strided_slice %427 {offsets = [0, 64], sizes = [2, 32], strides = [1, 1]} : vector<2x128xf32> to vector<2x32xf32>
    %466 = math.tanh %465 : vector<2x32xf32>
    %467 = vector.extract_strided_slice %427 {offsets = [0, 96], sizes = [2, 32], strides = [1, 1]} : vector<2x128xf32> to vector<2x32xf32>
    %468 = arith.negf %467 : vector<2x32xf32>
    %469 = math.exp %468 : vector<2x32xf32>
    %cst_115 = arith.constant 1.000000e+00 : f32
    %470 = vector.broadcast %cst_115 : f32 to vector<2x32xf32>
    %471 = arith.addf %470, %469 : vector<2x32xf32>
    %472 = arith.divf %470, %471 : vector<2x32xf32>
    %473 = arith.mulf %464, %406 : vector<2x32xf32>
    %474 = arith.mulf %458, %466 : vector<2x32xf32>
    %475 = arith.addf %473, %474 : vector<2x32xf32>
    %476 = math.tanh %475 : vector<2x32xf32>
    %477 = arith.mulf %472, %476 : vector<2x32xf32>
    %478 = arith.index_cast %c6_i32 : i32 to index
    %c0_116 = arith.constant 0 : index
    %c0_117 = arith.constant 0 : index
    %479 = vector.load %arg4[%478, %c0_116, %c0_117] : memref<8x2x64xf32, #tpu.memory_space<vmem>>, vector<1x2x32xf32>
    %480 = vector.shape_cast %479 : vector<1x2x32xf32> to vector<2x32xf32>
    %481 = vector.shape_cast %452 : vector<2x32xf32> to vector<1x2x32xf32>
    tpu.vector_store %arg4[%478, %c0_116, %c0_117], %481 {strides = array<i32>} : memref<8x2x64xf32, #tpu.memory_space<vmem>>, vector<1x2x32xf32>,
    %482 = arith.index_cast %417 : i32 to index
    %c0_118 = arith.constant 0 : index
    %c32_119 = arith.constant 32 : index
    %483 = vector.load %arg4[%482, %c0_118, %c32_119] : memref<8x2x64xf32, #tpu.memory_space<vmem>>, vector<1x2x32xf32>
    %484 = vector.shape_cast %483 : vector<1x2x32xf32> to vector<2x32xf32>
    %485 = vector.shape_cast %477 : vector<2x32xf32> to vector<1x2x32xf32>
    tpu.vector_store %arg4[%482, %c0_118, %c32_119], %485 {strides = array<i32>} : memref<8x2x64xf32, #tpu.memory_space<vmem>>, vector<1x2x32xf32>,
    %c7_i32_120 = arith.constant 7 : i32
    %c7_i32_121 = arith.constant 7 : i32
    %486 = arith.subi %c7_i32_121, %c7_i32_120 : i32
    %487 = arith.index_cast %c7_i32_120 : i32 to index
    %c0_122 = arith.constant 0 : index
    %c0_123 = arith.constant 0 : index
    %488 = vector.load %arg0[%487, %c0_122, %c0_123] : memref<8x2x128xf32, #tpu.memory_space<vmem>>, vector<1x2x128xf32>
    %489 = vector.shape_cast %488 : vector<1x2x128xf32> to vector<2x128xf32>
    %cst_124 = arith.constant dense<0.000000e+00> : vector<2x128xf32>
    %490 = tpu.matmul %452, %0, %cst_124 {dimension_numbers = #tpu.dot_dimension_numbers<[1], [0], [0], [1], [0, 0, 1, 1], [], []>} : vector<2x32xf32>, vector<32x128xf32>, vector<2x128xf32> -> vector<2x128xf32>
    %491 = arith.addf %489, %490 : vector<2x128xf32>
    %492 = arith.index_cast %486 : i32 to index
    %c0_125 = arith.constant 0 : index
    %c0_126 = arith.constant 0 : index
    %493 = vector.load %arg1[%492, %c0_125, %c0_126] : memref<8x2x128xf32, #tpu.memory_space<vmem>>, vector<1x2x128xf32>
    %494 = vector.shape_cast %493 : vector<1x2x128xf32> to vector<2x128xf32>
    %cst_127 = arith.constant dense<0.000000e+00> : vector<2x128xf32>
    %495 = tpu.matmul %477, %1, %cst_127 {dimension_numbers = #tpu.dot_dimension_numbers<[1], [0], [0], [1], [0, 0, 1, 1], [], []>} : vector<2x32xf32>, vector<32x128xf32>, vector<2x128xf32> -> vector<2x128xf32>
    %496 = arith.addf %494, %495 : vector<2x128xf32>
    %497 = vector.extract_strided_slice %491 {offsets = [0, 0], sizes = [2, 32], strides = [1, 1]} : vector<2x128xf32> to vector<2x32xf32>
    %498 = arith.negf %497 : vector<2x32xf32>
    %499 = math.exp %498 : vector<2x32xf32>
    %cst_128 = arith.constant 1.000000e+00 : f32
    %500 = vector.broadcast %cst_128 : f32 to vector<2x32xf32>
    %501 = arith.addf %500, %499 : vector<2x32xf32>
    %502 = arith.divf %500, %501 : vector<2x32xf32>
    %503 = vector.extract_strided_slice %491 {offsets = [0, 32], sizes = [2, 32], strides = [1, 1]} : vector<2x128xf32> to vector<2x32xf32>
    %504 = arith.negf %503 : vector<2x32xf32>
    %505 = math.exp %504 : vector<2x32xf32>
    %cst_129 = arith.constant 1.000000e+00 : f32
    %506 = vector.broadcast %cst_129 : f32 to vector<2x32xf32>
    %507 = arith.addf %506, %505 : vector<2x32xf32>
    %508 = arith.divf %506, %507 : vector<2x32xf32>
    %509 = vector.extract_strided_slice %491 {offsets = [0, 64], sizes = [2, 32], strides = [1, 1]} : vector<2x128xf32> to vector<2x32xf32>
    %510 = math.tanh %509 : vector<2x32xf32>
    %511 = vector.extract_strided_slice %491 {offsets = [0, 96], sizes = [2, 32], strides = [1, 1]} : vector<2x128xf32> to vector<2x32xf32>
    %512 = arith.negf %511 : vector<2x32xf32>
    %513 = math.exp %512 : vector<2x32xf32>
    %cst_130 = arith.constant 1.000000e+00 : f32
    %514 = vector.broadcast %cst_130 : f32 to vector<2x32xf32>
    %515 = arith.addf %514, %513 : vector<2x32xf32>
    %516 = arith.divf %514, %515 : vector<2x32xf32>
    %517 = arith.mulf %508, %450 : vector<2x32xf32>
    %518 = arith.mulf %502, %510 : vector<2x32xf32>
    %519 = arith.addf %517, %518 : vector<2x32xf32>
    %520 = math.tanh %519 : vector<2x32xf32>
    %521 = arith.mulf %516, %520 : vector<2x32xf32>
    %522 = vector.extract_strided_slice %496 {offsets = [0, 0], sizes = [2, 32], strides = [1, 1]} : vector<2x128xf32> to vector<2x32xf32>
    %523 = arith.negf %522 : vector<2x32xf32>
    %524 = math.exp %523 : vector<2x32xf32>
    %cst_131 = arith.constant 1.000000e+00 : f32
    %525 = vector.broadcast %cst_131 : f32 to vector<2x32xf32>
    %526 = arith.addf %525, %524 : vector<2x32xf32>
    %527 = arith.divf %525, %526 : vector<2x32xf32>
    %528 = vector.extract_strided_slice %496 {offsets = [0, 32], sizes = [2, 32], strides = [1, 1]} : vector<2x128xf32> to vector<2x32xf32>
    %529 = arith.negf %528 : vector<2x32xf32>
    %530 = math.exp %529 : vector<2x32xf32>
    %cst_132 = arith.constant 1.000000e+00 : f32
    %531 = vector.broadcast %cst_132 : f32 to vector<2x32xf32>
    %532 = arith.addf %531, %530 : vector<2x32xf32>
    %533 = arith.divf %531, %532 : vector<2x32xf32>
    %534 = vector.extract_strided_slice %496 {offsets = [0, 64], sizes = [2, 32], strides = [1, 1]} : vector<2x128xf32> to vector<2x32xf32>
    %535 = math.tanh %534 : vector<2x32xf32>
    %536 = vector.extract_strided_slice %496 {offsets = [0, 96], sizes = [2, 32], strides = [1, 1]} : vector<2x128xf32> to vector<2x32xf32>
    %537 = arith.negf %536 : vector<2x32xf32>
    %538 = math.exp %537 : vector<2x32xf32>
    %cst_133 = arith.constant 1.000000e+00 : f32
    %539 = vector.broadcast %cst_133 : f32 to vector<2x32xf32>
    %540 = arith.addf %539, %538 : vector<2x32xf32>
    %541 = arith.divf %539, %540 : vector<2x32xf32>
    %542 = arith.mulf %533, %475 : vector<2x32xf32>
    %543 = arith.mulf %527, %535 : vector<2x32xf32>
    %544 = arith.addf %542, %543 : vector<2x32xf32>
    %545 = math.tanh %544 : vector<2x32xf32>
    %546 = arith.mulf %541, %545 : vector<2x32xf32>
    %547 = arith.index_cast %c7_i32_120 : i32 to index
    %c0_134 = arith.constant 0 : index
    %c0_135 = arith.constant 0 : index
    %548 = vector.load %arg4[%547, %c0_134, %c0_135] : memref<8x2x64xf32, #tpu.memory_space<vmem>>, vector<1x2x32xf32>
    %549 = vector.shape_cast %548 : vector<1x2x32xf32> to vector<2x32xf32>
    %550 = vector.shape_cast %521 : vector<2x32xf32> to vector<1x2x32xf32>
    tpu.vector_store %arg4[%547, %c0_134, %c0_135], %550 {strides = array<i32>} : memref<8x2x64xf32, #tpu.memory_space<vmem>>, vector<1x2x32xf32>,
    %551 = arith.index_cast %486 : i32 to index
    %c0_136 = arith.constant 0 : index
    %c32_137 = arith.constant 32 : index
    %552 = vector.load %arg4[%551, %c0_136, %c32_137] : memref<8x2x64xf32, #tpu.memory_space<vmem>>, vector<1x2x32xf32>
    %553 = vector.shape_cast %552 : vector<1x2x32xf32> to vector<2x32xf32>
    %554 = vector.shape_cast %546 : vector<2x32xf32> to vector<1x2x32xf32>
    tpu.vector_store %arg4[%551, %c0_136, %c32_137], %554 {strides = array<i32>} : memref<8x2x64xf32, #tpu.memory_space<vmem>>, vector<1x2x32xf32>,
    %c8_i32 = arith.constant 8 : i32
    return
  }
}

module attributes {stable_mosaic.version = 11 : i64} {
  func.func @_bilstm_linear_kernel(%arg0: memref<8x2x128xf32, #tpu.memory_space<vmem>>, %arg1: memref<8x2x128xf32, #tpu.memory_space<vmem>>, %arg2: memref<32x128xf32, #tpu.memory_space<vmem>>, %arg3: memref<32x128xf32, #tpu.memory_space<vmem>>, %arg4: memref<64x8xf32, #tpu.memory_space<vmem>>, %arg5: memref<1x8xf32, #tpu.memory_space<vmem>>, %arg6: memref<8x2x64xf32, #tpu.memory_space<vmem>>, %arg7: memref<2x8xf32, #tpu.memory_space<vmem>>) attributes {dimension_semantics = [], scalar_prefetch = 0 : i64, scratch_operands = 0 : i64, tpu.core_type = #tpu.core_type<tc>} {
    %c0 = arith.constant 0 : index
    %c0_0 = arith.constant 0 : index
    %0 = vector.load %arg2[%c0, %c0_0] : memref<32x128xf32, #tpu.memory_space<vmem>>, vector<32x128xf32>
    %c0_1 = arith.constant 0 : index
    %c0_2 = arith.constant 0 : index
    %1 = vector.load %arg3[%c0_1, %c0_2] : memref<32x128xf32, #tpu.memory_space<vmem>>, vector<32x128xf32>
    %cst = arith.constant 0.000000e+00 : f32
    %2 = vector.broadcast %cst : f32 to vector<2x32xf32>
    %c0_i32 = arith.constant 0 : i32
    %c7_i32 = arith.constant 7 : i32
    %3 = arith.subi %c7_i32, %c0_i32 : i32
    %4 = arith.index_cast %c0_i32 : i32 to index
    %c0_3 = arith.constant 0 : index
    %c0_4 = arith.constant 0 : index
    %5 = vector.load %arg0[%4, %c0_3, %c0_4] : memref<8x2x128xf32, #tpu.memory_space<vmem>>, vector<1x2x128xf32>
    %6 = vector.shape_cast %5 : vector<1x2x128xf32> to vector<2x128xf32>
    %cst_5 = arith.constant dense<0.000000e+00> : vector<2x128xf32>
    %7 = tpu.matmul %2, %0, %cst_5 {dimension_numbers = #tpu.dot_dimension_numbers<[1], [0], [0], [1], [0, 0, 1, 1], [], []>} : vector<2x32xf32>, vector<32x128xf32>, vector<2x128xf32> -> vector<2x128xf32>
    %8 = arith.addf %6, %7 : vector<2x128xf32>
    %9 = arith.index_cast %3 : i32 to index
    %c0_6 = arith.constant 0 : index
    %c0_7 = arith.constant 0 : index
    %10 = vector.load %arg1[%9, %c0_6, %c0_7] : memref<8x2x128xf32, #tpu.memory_space<vmem>>, vector<1x2x128xf32>
    %11 = vector.shape_cast %10 : vector<1x2x128xf32> to vector<2x128xf32>
    %cst_8 = arith.constant dense<0.000000e+00> : vector<2x128xf32>
    %12 = tpu.matmul %2, %1, %cst_8 {dimension_numbers = #tpu.dot_dimension_numbers<[1], [0], [0], [1], [0, 0, 1, 1], [], []>} : vector<2x32xf32>, vector<32x128xf32>, vector<2x128xf32> -> vector<2x128xf32>
    %13 = arith.addf %11, %12 : vector<2x128xf32>
    %14 = vector.extract_strided_slice %8 {offsets = [0, 0], sizes = [2, 32], strides = [1, 1]} : vector<2x128xf32> to vector<2x32xf32>
    %15 = arith.negf %14 : vector<2x32xf32>
    %16 = math.exp %15 : vector<2x32xf32>
    %cst_9 = arith.constant 1.000000e+00 : f32
    %17 = vector.broadcast %cst_9 : f32 to vector<2x32xf32>
    %18 = arith.addf %17, %16 : vector<2x32xf32>
    %19 = arith.divf %17, %18 : vector<2x32xf32>
    %20 = vector.extract_strided_slice %8 {offsets = [0, 32], sizes = [2, 32], strides = [1, 1]} : vector<2x128xf32> to vector<2x32xf32>
    %21 = arith.negf %20 : vector<2x32xf32>
    %22 = math.exp %21 : vector<2x32xf32>
    %cst_10 = arith.constant 1.000000e+00 : f32
    %23 = vector.broadcast %cst_10 : f32 to vector<2x32xf32>
    %24 = arith.addf %23, %22 : vector<2x32xf32>
    %25 = arith.divf %23, %24 : vector<2x32xf32>
    %26 = vector.extract_strided_slice %8 {offsets = [0, 64], sizes = [2, 32], strides = [1, 1]} : vector<2x128xf32> to vector<2x32xf32>
    %27 = math.tanh %26 : vector<2x32xf32>
    %28 = vector.extract_strided_slice %8 {offsets = [0, 96], sizes = [2, 32], strides = [1, 1]} : vector<2x128xf32> to vector<2x32xf32>
    %29 = arith.negf %28 : vector<2x32xf32>
    %30 = math.exp %29 : vector<2x32xf32>
    %cst_11 = arith.constant 1.000000e+00 : f32
    %31 = vector.broadcast %cst_11 : f32 to vector<2x32xf32>
    %32 = arith.addf %31, %30 : vector<2x32xf32>
    %33 = arith.divf %31, %32 : vector<2x32xf32>
    %34 = arith.mulf %25, %2 : vector<2x32xf32>
    %35 = arith.mulf %19, %27 : vector<2x32xf32>
    %36 = arith.addf %34, %35 : vector<2x32xf32>
    %37 = math.tanh %36 : vector<2x32xf32>
    %38 = arith.mulf %33, %37 : vector<2x32xf32>
    %39 = vector.extract_strided_slice %13 {offsets = [0, 0], sizes = [2, 32], strides = [1, 1]} : vector<2x128xf32> to vector<2x32xf32>
    %40 = arith.negf %39 : vector<2x32xf32>
    %41 = math.exp %40 : vector<2x32xf32>
    %cst_12 = arith.constant 1.000000e+00 : f32
    %42 = vector.broadcast %cst_12 : f32 to vector<2x32xf32>
    %43 = arith.addf %42, %41 : vector<2x32xf32>
    %44 = arith.divf %42, %43 : vector<2x32xf32>
    %45 = vector.extract_strided_slice %13 {offsets = [0, 32], sizes = [2, 32], strides = [1, 1]} : vector<2x128xf32> to vector<2x32xf32>
    %46 = arith.negf %45 : vector<2x32xf32>
    %47 = math.exp %46 : vector<2x32xf32>
    %cst_13 = arith.constant 1.000000e+00 : f32
    %48 = vector.broadcast %cst_13 : f32 to vector<2x32xf32>
    %49 = arith.addf %48, %47 : vector<2x32xf32>
    %50 = arith.divf %48, %49 : vector<2x32xf32>
    %51 = vector.extract_strided_slice %13 {offsets = [0, 64], sizes = [2, 32], strides = [1, 1]} : vector<2x128xf32> to vector<2x32xf32>
    %52 = math.tanh %51 : vector<2x32xf32>
    %53 = vector.extract_strided_slice %13 {offsets = [0, 96], sizes = [2, 32], strides = [1, 1]} : vector<2x128xf32> to vector<2x32xf32>
    %54 = arith.negf %53 : vector<2x32xf32>
    %55 = math.exp %54 : vector<2x32xf32>
    %cst_14 = arith.constant 1.000000e+00 : f32
    %56 = vector.broadcast %cst_14 : f32 to vector<2x32xf32>
    %57 = arith.addf %56, %55 : vector<2x32xf32>
    %58 = arith.divf %56, %57 : vector<2x32xf32>
    %59 = arith.mulf %50, %2 : vector<2x32xf32>
    %60 = arith.mulf %44, %52 : vector<2x32xf32>
    %61 = arith.addf %59, %60 : vector<2x32xf32>
    %62 = math.tanh %61 : vector<2x32xf32>
    %63 = arith.mulf %58, %62 : vector<2x32xf32>
    %64 = arith.index_cast %c0_i32 : i32 to index
    %c0_15 = arith.constant 0 : index
    %c0_16 = arith.constant 0 : index
    %65 = vector.load %arg6[%64, %c0_15, %c0_16] : memref<8x2x64xf32, #tpu.memory_space<vmem>>, vector<1x2x32xf32>
    %66 = vector.shape_cast %65 : vector<1x2x32xf32> to vector<2x32xf32>
    %67 = vector.shape_cast %38 : vector<2x32xf32> to vector<1x2x32xf32>
    tpu.vector_store %arg6[%64, %c0_15, %c0_16], %67 {strides = array<i32>} : memref<8x2x64xf32, #tpu.memory_space<vmem>>, vector<1x2x32xf32>,
    %68 = arith.index_cast %3 : i32 to index
    %c0_17 = arith.constant 0 : index
    %c32 = arith.constant 32 : index
    %69 = vector.load %arg6[%68, %c0_17, %c32] : memref<8x2x64xf32, #tpu.memory_space<vmem>>, vector<1x2x32xf32>
    %70 = vector.shape_cast %69 : vector<1x2x32xf32> to vector<2x32xf32>
    %71 = vector.shape_cast %63 : vector<2x32xf32> to vector<1x2x32xf32>
    tpu.vector_store %arg6[%68, %c0_17, %c32], %71 {strides = array<i32>} : memref<8x2x64xf32, #tpu.memory_space<vmem>>, vector<1x2x32xf32>,
    %c1_i32 = arith.constant 1 : i32
    %c7_i32_18 = arith.constant 7 : i32
    %72 = arith.subi %c7_i32_18, %c1_i32 : i32
    %73 = arith.index_cast %c1_i32 : i32 to index
    %c0_19 = arith.constant 0 : index
    %c0_20 = arith.constant 0 : index
    %74 = vector.load %arg0[%73, %c0_19, %c0_20] : memref<8x2x128xf32, #tpu.memory_space<vmem>>, vector<1x2x128xf32>
    %75 = vector.shape_cast %74 : vector<1x2x128xf32> to vector<2x128xf32>
    %cst_21 = arith.constant dense<0.000000e+00> : vector<2x128xf32>
    %76 = tpu.matmul %38, %0, %cst_21 {dimension_numbers = #tpu.dot_dimension_numbers<[1], [0], [0], [1], [0, 0, 1, 1], [], []>} : vector<2x32xf32>, vector<32x128xf32>, vector<2x128xf32> -> vector<2x128xf32>
    %77 = arith.addf %75, %76 : vector<2x128xf32>
    %78 = arith.index_cast %72 : i32 to index
    %c0_22 = arith.constant 0 : index
    %c0_23 = arith.constant 0 : index
    %79 = vector.load %arg1[%78, %c0_22, %c0_23] : memref<8x2x128xf32, #tpu.memory_space<vmem>>, vector<1x2x128xf32>
    %80 = vector.shape_cast %79 : vector<1x2x128xf32> to vector<2x128xf32>
    %cst_24 = arith.constant dense<0.000000e+00> : vector<2x128xf32>
    %81 = tpu.matmul %63, %1, %cst_24 {dimension_numbers = #tpu.dot_dimension_numbers<[1], [0], [0], [1], [0, 0, 1, 1], [], []>} : vector<2x32xf32>, vector<32x128xf32>, vector<2x128xf32> -> vector<2x128xf32>
    %82 = arith.addf %80, %81 : vector<2x128xf32>
    %83 = vector.extract_strided_slice %77 {offsets = [0, 0], sizes = [2, 32], strides = [1, 1]} : vector<2x128xf32> to vector<2x32xf32>
    %84 = arith.negf %83 : vector<2x32xf32>
    %85 = math.exp %84 : vector<2x32xf32>
    %cst_25 = arith.constant 1.000000e+00 : f32
    %86 = vector.broadcast %cst_25 : f32 to vector<2x32xf32>
    %87 = arith.addf %86, %85 : vector<2x32xf32>
    %88 = arith.divf %86, %87 : vector<2x32xf32>
    %89 = vector.extract_strided_slice %77 {offsets = [0, 32], sizes = [2, 32], strides = [1, 1]} : vector<2x128xf32> to vector<2x32xf32>
    %90 = arith.negf %89 : vector<2x32xf32>
    %91 = math.exp %90 : vector<2x32xf32>
    %cst_26 = arith.constant 1.000000e+00 : f32
    %92 = vector.broadcast %cst_26 : f32 to vector<2x32xf32>
    %93 = arith.addf %92, %91 : vector<2x32xf32>
    %94 = arith.divf %92, %93 : vector<2x32xf32>
    %95 = vector.extract_strided_slice %77 {offsets = [0, 64], sizes = [2, 32], strides = [1, 1]} : vector<2x128xf32> to vector<2x32xf32>
    %96 = math.tanh %95 : vector<2x32xf32>
    %97 = vector.extract_strided_slice %77 {offsets = [0, 96], sizes = [2, 32], strides = [1, 1]} : vector<2x128xf32> to vector<2x32xf32>
    %98 = arith.negf %97 : vector<2x32xf32>
    %99 = math.exp %98 : vector<2x32xf32>
    %cst_27 = arith.constant 1.000000e+00 : f32
    %100 = vector.broadcast %cst_27 : f32 to vector<2x32xf32>
    %101 = arith.addf %100, %99 : vector<2x32xf32>
    %102 = arith.divf %100, %101 : vector<2x32xf32>
    %103 = arith.mulf %94, %36 : vector<2x32xf32>
    %104 = arith.mulf %88, %96 : vector<2x32xf32>
    %105 = arith.addf %103, %104 : vector<2x32xf32>
    %106 = math.tanh %105 : vector<2x32xf32>
    %107 = arith.mulf %102, %106 : vector<2x32xf32>
    %108 = vector.extract_strided_slice %82 {offsets = [0, 0], sizes = [2, 32], strides = [1, 1]} : vector<2x128xf32> to vector<2x32xf32>
    %109 = arith.negf %108 : vector<2x32xf32>
    %110 = math.exp %109 : vector<2x32xf32>
    %cst_28 = arith.constant 1.000000e+00 : f32
    %111 = vector.broadcast %cst_28 : f32 to vector<2x32xf32>
    %112 = arith.addf %111, %110 : vector<2x32xf32>
    %113 = arith.divf %111, %112 : vector<2x32xf32>
    %114 = vector.extract_strided_slice %82 {offsets = [0, 32], sizes = [2, 32], strides = [1, 1]} : vector<2x128xf32> to vector<2x32xf32>
    %115 = arith.negf %114 : vector<2x32xf32>
    %116 = math.exp %115 : vector<2x32xf32>
    %cst_29 = arith.constant 1.000000e+00 : f32
    %117 = vector.broadcast %cst_29 : f32 to vector<2x32xf32>
    %118 = arith.addf %117, %116 : vector<2x32xf32>
    %119 = arith.divf %117, %118 : vector<2x32xf32>
    %120 = vector.extract_strided_slice %82 {offsets = [0, 64], sizes = [2, 32], strides = [1, 1]} : vector<2x128xf32> to vector<2x32xf32>
    %121 = math.tanh %120 : vector<2x32xf32>
    %122 = vector.extract_strided_slice %82 {offsets = [0, 96], sizes = [2, 32], strides = [1, 1]} : vector<2x128xf32> to vector<2x32xf32>
    %123 = arith.negf %122 : vector<2x32xf32>
    %124 = math.exp %123 : vector<2x32xf32>
    %cst_30 = arith.constant 1.000000e+00 : f32
    %125 = vector.broadcast %cst_30 : f32 to vector<2x32xf32>
    %126 = arith.addf %125, %124 : vector<2x32xf32>
    %127 = arith.divf %125, %126 : vector<2x32xf32>
    %128 = arith.mulf %119, %61 : vector<2x32xf32>
    %129 = arith.mulf %113, %121 : vector<2x32xf32>
    %130 = arith.addf %128, %129 : vector<2x32xf32>
    %131 = math.tanh %130 : vector<2x32xf32>
    %132 = arith.mulf %127, %131 : vector<2x32xf32>
    %133 = arith.index_cast %c1_i32 : i32 to index
    %c0_31 = arith.constant 0 : index
    %c0_32 = arith.constant 0 : index
    %134 = vector.load %arg6[%133, %c0_31, %c0_32] : memref<8x2x64xf32, #tpu.memory_space<vmem>>, vector<1x2x32xf32>
    %135 = vector.shape_cast %134 : vector<1x2x32xf32> to vector<2x32xf32>
    %136 = vector.shape_cast %107 : vector<2x32xf32> to vector<1x2x32xf32>
    tpu.vector_store %arg6[%133, %c0_31, %c0_32], %136 {strides = array<i32>} : memref<8x2x64xf32, #tpu.memory_space<vmem>>, vector<1x2x32xf32>,
    %137 = arith.index_cast %72 : i32 to index
    %c0_33 = arith.constant 0 : index
    %c32_34 = arith.constant 32 : index
    %138 = vector.load %arg6[%137, %c0_33, %c32_34] : memref<8x2x64xf32, #tpu.memory_space<vmem>>, vector<1x2x32xf32>
    %139 = vector.shape_cast %138 : vector<1x2x32xf32> to vector<2x32xf32>
    %140 = vector.shape_cast %132 : vector<2x32xf32> to vector<1x2x32xf32>
    tpu.vector_store %arg6[%137, %c0_33, %c32_34], %140 {strides = array<i32>} : memref<8x2x64xf32, #tpu.memory_space<vmem>>, vector<1x2x32xf32>,
    %c2_i32 = arith.constant 2 : i32
    %c7_i32_35 = arith.constant 7 : i32
    %141 = arith.subi %c7_i32_35, %c2_i32 : i32
    %142 = arith.index_cast %c2_i32 : i32 to index
    %c0_36 = arith.constant 0 : index
    %c0_37 = arith.constant 0 : index
    %143 = vector.load %arg0[%142, %c0_36, %c0_37] : memref<8x2x128xf32, #tpu.memory_space<vmem>>, vector<1x2x128xf32>
    %144 = vector.shape_cast %143 : vector<1x2x128xf32> to vector<2x128xf32>
    %cst_38 = arith.constant dense<0.000000e+00> : vector<2x128xf32>
    %145 = tpu.matmul %107, %0, %cst_38 {dimension_numbers = #tpu.dot_dimension_numbers<[1], [0], [0], [1], [0, 0, 1, 1], [], []>} : vector<2x32xf32>, vector<32x128xf32>, vector<2x128xf32> -> vector<2x128xf32>
    %146 = arith.addf %144, %145 : vector<2x128xf32>
    %147 = arith.index_cast %141 : i32 to index
    %c0_39 = arith.constant 0 : index
    %c0_40 = arith.constant 0 : index
    %148 = vector.load %arg1[%147, %c0_39, %c0_40] : memref<8x2x128xf32, #tpu.memory_space<vmem>>, vector<1x2x128xf32>
    %149 = vector.shape_cast %148 : vector<1x2x128xf32> to vector<2x128xf32>
    %cst_41 = arith.constant dense<0.000000e+00> : vector<2x128xf32>
    %150 = tpu.matmul %132, %1, %cst_41 {dimension_numbers = #tpu.dot_dimension_numbers<[1], [0], [0], [1], [0, 0, 1, 1], [], []>} : vector<2x32xf32>, vector<32x128xf32>, vector<2x128xf32> -> vector<2x128xf32>
    %151 = arith.addf %149, %150 : vector<2x128xf32>
    %152 = vector.extract_strided_slice %146 {offsets = [0, 0], sizes = [2, 32], strides = [1, 1]} : vector<2x128xf32> to vector<2x32xf32>
    %153 = arith.negf %152 : vector<2x32xf32>
    %154 = math.exp %153 : vector<2x32xf32>
    %cst_42 = arith.constant 1.000000e+00 : f32
    %155 = vector.broadcast %cst_42 : f32 to vector<2x32xf32>
    %156 = arith.addf %155, %154 : vector<2x32xf32>
    %157 = arith.divf %155, %156 : vector<2x32xf32>
    %158 = vector.extract_strided_slice %146 {offsets = [0, 32], sizes = [2, 32], strides = [1, 1]} : vector<2x128xf32> to vector<2x32xf32>
    %159 = arith.negf %158 : vector<2x32xf32>
    %160 = math.exp %159 : vector<2x32xf32>
    %cst_43 = arith.constant 1.000000e+00 : f32
    %161 = vector.broadcast %cst_43 : f32 to vector<2x32xf32>
    %162 = arith.addf %161, %160 : vector<2x32xf32>
    %163 = arith.divf %161, %162 : vector<2x32xf32>
    %164 = vector.extract_strided_slice %146 {offsets = [0, 64], sizes = [2, 32], strides = [1, 1]} : vector<2x128xf32> to vector<2x32xf32>
    %165 = math.tanh %164 : vector<2x32xf32>
    %166 = vector.extract_strided_slice %146 {offsets = [0, 96], sizes = [2, 32], strides = [1, 1]} : vector<2x128xf32> to vector<2x32xf32>
    %167 = arith.negf %166 : vector<2x32xf32>
    %168 = math.exp %167 : vector<2x32xf32>
    %cst_44 = arith.constant 1.000000e+00 : f32
    %169 = vector.broadcast %cst_44 : f32 to vector<2x32xf32>
    %170 = arith.addf %169, %168 : vector<2x32xf32>
    %171 = arith.divf %169, %170 : vector<2x32xf32>
    %172 = arith.mulf %163, %105 : vector<2x32xf32>
    %173 = arith.mulf %157, %165 : vector<2x32xf32>
    %174 = arith.addf %172, %173 : vector<2x32xf32>
    %175 = math.tanh %174 : vector<2x32xf32>
    %176 = arith.mulf %171, %175 : vector<2x32xf32>
    %177 = vector.extract_strided_slice %151 {offsets = [0, 0], sizes = [2, 32], strides = [1, 1]} : vector<2x128xf32> to vector<2x32xf32>
    %178 = arith.negf %177 : vector<2x32xf32>
    %179 = math.exp %178 : vector<2x32xf32>
    %cst_45 = arith.constant 1.000000e+00 : f32
    %180 = vector.broadcast %cst_45 : f32 to vector<2x32xf32>
    %181 = arith.addf %180, %179 : vector<2x32xf32>
    %182 = arith.divf %180, %181 : vector<2x32xf32>
    %183 = vector.extract_strided_slice %151 {offsets = [0, 32], sizes = [2, 32], strides = [1, 1]} : vector<2x128xf32> to vector<2x32xf32>
    %184 = arith.negf %183 : vector<2x32xf32>
    %185 = math.exp %184 : vector<2x32xf32>
    %cst_46 = arith.constant 1.000000e+00 : f32
    %186 = vector.broadcast %cst_46 : f32 to vector<2x32xf32>
    %187 = arith.addf %186, %185 : vector<2x32xf32>
    %188 = arith.divf %186, %187 : vector<2x32xf32>
    %189 = vector.extract_strided_slice %151 {offsets = [0, 64], sizes = [2, 32], strides = [1, 1]} : vector<2x128xf32> to vector<2x32xf32>
    %190 = math.tanh %189 : vector<2x32xf32>
    %191 = vector.extract_strided_slice %151 {offsets = [0, 96], sizes = [2, 32], strides = [1, 1]} : vector<2x128xf32> to vector<2x32xf32>
    %192 = arith.negf %191 : vector<2x32xf32>
    %193 = math.exp %192 : vector<2x32xf32>
    %cst_47 = arith.constant 1.000000e+00 : f32
    %194 = vector.broadcast %cst_47 : f32 to vector<2x32xf32>
    %195 = arith.addf %194, %193 : vector<2x32xf32>
    %196 = arith.divf %194, %195 : vector<2x32xf32>
    %197 = arith.mulf %188, %130 : vector<2x32xf32>
    %198 = arith.mulf %182, %190 : vector<2x32xf32>
    %199 = arith.addf %197, %198 : vector<2x32xf32>
    %200 = math.tanh %199 : vector<2x32xf32>
    %201 = arith.mulf %196, %200 : vector<2x32xf32>
    %202 = arith.index_cast %c2_i32 : i32 to index
    %c0_48 = arith.constant 0 : index
    %c0_49 = arith.constant 0 : index
    %203 = vector.load %arg6[%202, %c0_48, %c0_49] : memref<8x2x64xf32, #tpu.memory_space<vmem>>, vector<1x2x32xf32>
    %204 = vector.shape_cast %203 : vector<1x2x32xf32> to vector<2x32xf32>
    %205 = vector.shape_cast %176 : vector<2x32xf32> to vector<1x2x32xf32>
    tpu.vector_store %arg6[%202, %c0_48, %c0_49], %205 {strides = array<i32>} : memref<8x2x64xf32, #tpu.memory_space<vmem>>, vector<1x2x32xf32>,
    %206 = arith.index_cast %141 : i32 to index
    %c0_50 = arith.constant 0 : index
    %c32_51 = arith.constant 32 : index
    %207 = vector.load %arg6[%206, %c0_50, %c32_51] : memref<8x2x64xf32, #tpu.memory_space<vmem>>, vector<1x2x32xf32>
    %208 = vector.shape_cast %207 : vector<1x2x32xf32> to vector<2x32xf32>
    %209 = vector.shape_cast %201 : vector<2x32xf32> to vector<1x2x32xf32>
    tpu.vector_store %arg6[%206, %c0_50, %c32_51], %209 {strides = array<i32>} : memref<8x2x64xf32, #tpu.memory_space<vmem>>, vector<1x2x32xf32>,
    %c3_i32 = arith.constant 3 : i32
    %c7_i32_52 = arith.constant 7 : i32
    %210 = arith.subi %c7_i32_52, %c3_i32 : i32
    %211 = arith.index_cast %c3_i32 : i32 to index
    %c0_53 = arith.constant 0 : index
    %c0_54 = arith.constant 0 : index
    %212 = vector.load %arg0[%211, %c0_53, %c0_54] : memref<8x2x128xf32, #tpu.memory_space<vmem>>, vector<1x2x128xf32>
    %213 = vector.shape_cast %212 : vector<1x2x128xf32> to vector<2x128xf32>
    %cst_55 = arith.constant dense<0.000000e+00> : vector<2x128xf32>
    %214 = tpu.matmul %176, %0, %cst_55 {dimension_numbers = #tpu.dot_dimension_numbers<[1], [0], [0], [1], [0, 0, 1, 1], [], []>} : vector<2x32xf32>, vector<32x128xf32>, vector<2x128xf32> -> vector<2x128xf32>
    %215 = arith.addf %213, %214 : vector<2x128xf32>
    %216 = arith.index_cast %210 : i32 to index
    %c0_56 = arith.constant 0 : index
    %c0_57 = arith.constant 0 : index
    %217 = vector.load %arg1[%216, %c0_56, %c0_57] : memref<8x2x128xf32, #tpu.memory_space<vmem>>, vector<1x2x128xf32>
    %218 = vector.shape_cast %217 : vector<1x2x128xf32> to vector<2x128xf32>
    %cst_58 = arith.constant dense<0.000000e+00> : vector<2x128xf32>
    %219 = tpu.matmul %201, %1, %cst_58 {dimension_numbers = #tpu.dot_dimension_numbers<[1], [0], [0], [1], [0, 0, 1, 1], [], []>} : vector<2x32xf32>, vector<32x128xf32>, vector<2x128xf32> -> vector<2x128xf32>
    %220 = arith.addf %218, %219 : vector<2x128xf32>
    %221 = vector.extract_strided_slice %215 {offsets = [0, 0], sizes = [2, 32], strides = [1, 1]} : vector<2x128xf32> to vector<2x32xf32>
    %222 = arith.negf %221 : vector<2x32xf32>
    %223 = math.exp %222 : vector<2x32xf32>
    %cst_59 = arith.constant 1.000000e+00 : f32
    %224 = vector.broadcast %cst_59 : f32 to vector<2x32xf32>
    %225 = arith.addf %224, %223 : vector<2x32xf32>
    %226 = arith.divf %224, %225 : vector<2x32xf32>
    %227 = vector.extract_strided_slice %215 {offsets = [0, 32], sizes = [2, 32], strides = [1, 1]} : vector<2x128xf32> to vector<2x32xf32>
    %228 = arith.negf %227 : vector<2x32xf32>
    %229 = math.exp %228 : vector<2x32xf32>
    %cst_60 = arith.constant 1.000000e+00 : f32
    %230 = vector.broadcast %cst_60 : f32 to vector<2x32xf32>
    %231 = arith.addf %230, %229 : vector<2x32xf32>
    %232 = arith.divf %230, %231 : vector<2x32xf32>
    %233 = vector.extract_strided_slice %215 {offsets = [0, 64], sizes = [2, 32], strides = [1, 1]} : vector<2x128xf32> to vector<2x32xf32>
    %234 = math.tanh %233 : vector<2x32xf32>
    %235 = vector.extract_strided_slice %215 {offsets = [0, 96], sizes = [2, 32], strides = [1, 1]} : vector<2x128xf32> to vector<2x32xf32>
    %236 = arith.negf %235 : vector<2x32xf32>
    %237 = math.exp %236 : vector<2x32xf32>
    %cst_61 = arith.constant 1.000000e+00 : f32
    %238 = vector.broadcast %cst_61 : f32 to vector<2x32xf32>
    %239 = arith.addf %238, %237 : vector<2x32xf32>
    %240 = arith.divf %238, %239 : vector<2x32xf32>
    %241 = arith.mulf %232, %174 : vector<2x32xf32>
    %242 = arith.mulf %226, %234 : vector<2x32xf32>
    %243 = arith.addf %241, %242 : vector<2x32xf32>
    %244 = math.tanh %243 : vector<2x32xf32>
    %245 = arith.mulf %240, %244 : vector<2x32xf32>
    %246 = vector.extract_strided_slice %220 {offsets = [0, 0], sizes = [2, 32], strides = [1, 1]} : vector<2x128xf32> to vector<2x32xf32>
    %247 = arith.negf %246 : vector<2x32xf32>
    %248 = math.exp %247 : vector<2x32xf32>
    %cst_62 = arith.constant 1.000000e+00 : f32
    %249 = vector.broadcast %cst_62 : f32 to vector<2x32xf32>
    %250 = arith.addf %249, %248 : vector<2x32xf32>
    %251 = arith.divf %249, %250 : vector<2x32xf32>
    %252 = vector.extract_strided_slice %220 {offsets = [0, 32], sizes = [2, 32], strides = [1, 1]} : vector<2x128xf32> to vector<2x32xf32>
    %253 = arith.negf %252 : vector<2x32xf32>
    %254 = math.exp %253 : vector<2x32xf32>
    %cst_63 = arith.constant 1.000000e+00 : f32
    %255 = vector.broadcast %cst_63 : f32 to vector<2x32xf32>
    %256 = arith.addf %255, %254 : vector<2x32xf32>
    %257 = arith.divf %255, %256 : vector<2x32xf32>
    %258 = vector.extract_strided_slice %220 {offsets = [0, 64], sizes = [2, 32], strides = [1, 1]} : vector<2x128xf32> to vector<2x32xf32>
    %259 = math.tanh %258 : vector<2x32xf32>
    %260 = vector.extract_strided_slice %220 {offsets = [0, 96], sizes = [2, 32], strides = [1, 1]} : vector<2x128xf32> to vector<2x32xf32>
    %261 = arith.negf %260 : vector<2x32xf32>
    %262 = math.exp %261 : vector<2x32xf32>
    %cst_64 = arith.constant 1.000000e+00 : f32
    %263 = vector.broadcast %cst_64 : f32 to vector<2x32xf32>
    %264 = arith.addf %263, %262 : vector<2x32xf32>
    %265 = arith.divf %263, %264 : vector<2x32xf32>
    %266 = arith.mulf %257, %199 : vector<2x32xf32>
    %267 = arith.mulf %251, %259 : vector<2x32xf32>
    %268 = arith.addf %266, %267 : vector<2x32xf32>
    %269 = math.tanh %268 : vector<2x32xf32>
    %270 = arith.mulf %265, %269 : vector<2x32xf32>
    %271 = arith.index_cast %c3_i32 : i32 to index
    %c0_65 = arith.constant 0 : index
    %c0_66 = arith.constant 0 : index
    %272 = vector.load %arg6[%271, %c0_65, %c0_66] : memref<8x2x64xf32, #tpu.memory_space<vmem>>, vector<1x2x32xf32>
    %273 = vector.shape_cast %272 : vector<1x2x32xf32> to vector<2x32xf32>
    %274 = vector.shape_cast %245 : vector<2x32xf32> to vector<1x2x32xf32>
    tpu.vector_store %arg6[%271, %c0_65, %c0_66], %274 {strides = array<i32>} : memref<8x2x64xf32, #tpu.memory_space<vmem>>, vector<1x2x32xf32>,
    %275 = arith.index_cast %210 : i32 to index
    %c0_67 = arith.constant 0 : index
    %c32_68 = arith.constant 32 : index
    %276 = vector.load %arg6[%275, %c0_67, %c32_68] : memref<8x2x64xf32, #tpu.memory_space<vmem>>, vector<1x2x32xf32>
    %277 = vector.shape_cast %276 : vector<1x2x32xf32> to vector<2x32xf32>
    %278 = vector.shape_cast %270 : vector<2x32xf32> to vector<1x2x32xf32>
    tpu.vector_store %arg6[%275, %c0_67, %c32_68], %278 {strides = array<i32>} : memref<8x2x64xf32, #tpu.memory_space<vmem>>, vector<1x2x32xf32>,
    %c4_i32 = arith.constant 4 : i32
    %c7_i32_69 = arith.constant 7 : i32
    %279 = arith.subi %c7_i32_69, %c4_i32 : i32
    %280 = arith.index_cast %c4_i32 : i32 to index
    %c0_70 = arith.constant 0 : index
    %c0_71 = arith.constant 0 : index
    %281 = vector.load %arg0[%280, %c0_70, %c0_71] : memref<8x2x128xf32, #tpu.memory_space<vmem>>, vector<1x2x128xf32>
    %282 = vector.shape_cast %281 : vector<1x2x128xf32> to vector<2x128xf32>
    %cst_72 = arith.constant dense<0.000000e+00> : vector<2x128xf32>
    %283 = tpu.matmul %245, %0, %cst_72 {dimension_numbers = #tpu.dot_dimension_numbers<[1], [0], [0], [1], [0, 0, 1, 1], [], []>} : vector<2x32xf32>, vector<32x128xf32>, vector<2x128xf32> -> vector<2x128xf32>
    %284 = arith.addf %282, %283 : vector<2x128xf32>
    %285 = arith.index_cast %279 : i32 to index
    %c0_73 = arith.constant 0 : index
    %c0_74 = arith.constant 0 : index
    %286 = vector.load %arg1[%285, %c0_73, %c0_74] : memref<8x2x128xf32, #tpu.memory_space<vmem>>, vector<1x2x128xf32>
    %287 = vector.shape_cast %286 : vector<1x2x128xf32> to vector<2x128xf32>
    %cst_75 = arith.constant dense<0.000000e+00> : vector<2x128xf32>
    %288 = tpu.matmul %270, %1, %cst_75 {dimension_numbers = #tpu.dot_dimension_numbers<[1], [0], [0], [1], [0, 0, 1, 1], [], []>} : vector<2x32xf32>, vector<32x128xf32>, vector<2x128xf32> -> vector<2x128xf32>
    %289 = arith.addf %287, %288 : vector<2x128xf32>
    %290 = vector.extract_strided_slice %284 {offsets = [0, 0], sizes = [2, 32], strides = [1, 1]} : vector<2x128xf32> to vector<2x32xf32>
    %291 = arith.negf %290 : vector<2x32xf32>
    %292 = math.exp %291 : vector<2x32xf32>
    %cst_76 = arith.constant 1.000000e+00 : f32
    %293 = vector.broadcast %cst_76 : f32 to vector<2x32xf32>
    %294 = arith.addf %293, %292 : vector<2x32xf32>
    %295 = arith.divf %293, %294 : vector<2x32xf32>
    %296 = vector.extract_strided_slice %284 {offsets = [0, 32], sizes = [2, 32], strides = [1, 1]} : vector<2x128xf32> to vector<2x32xf32>
    %297 = arith.negf %296 : vector<2x32xf32>
    %298 = math.exp %297 : vector<2x32xf32>
    %cst_77 = arith.constant 1.000000e+00 : f32
    %299 = vector.broadcast %cst_77 : f32 to vector<2x32xf32>
    %300 = arith.addf %299, %298 : vector<2x32xf32>
    %301 = arith.divf %299, %300 : vector<2x32xf32>
    %302 = vector.extract_strided_slice %284 {offsets = [0, 64], sizes = [2, 32], strides = [1, 1]} : vector<2x128xf32> to vector<2x32xf32>
    %303 = math.tanh %302 : vector<2x32xf32>
    %304 = vector.extract_strided_slice %284 {offsets = [0, 96], sizes = [2, 32], strides = [1, 1]} : vector<2x128xf32> to vector<2x32xf32>
    %305 = arith.negf %304 : vector<2x32xf32>
    %306 = math.exp %305 : vector<2x32xf32>
    %cst_78 = arith.constant 1.000000e+00 : f32
    %307 = vector.broadcast %cst_78 : f32 to vector<2x32xf32>
    %308 = arith.addf %307, %306 : vector<2x32xf32>
    %309 = arith.divf %307, %308 : vector<2x32xf32>
    %310 = arith.mulf %301, %243 : vector<2x32xf32>
    %311 = arith.mulf %295, %303 : vector<2x32xf32>
    %312 = arith.addf %310, %311 : vector<2x32xf32>
    %313 = math.tanh %312 : vector<2x32xf32>
    %314 = arith.mulf %309, %313 : vector<2x32xf32>
    %315 = vector.extract_strided_slice %289 {offsets = [0, 0], sizes = [2, 32], strides = [1, 1]} : vector<2x128xf32> to vector<2x32xf32>
    %316 = arith.negf %315 : vector<2x32xf32>
    %317 = math.exp %316 : vector<2x32xf32>
    %cst_79 = arith.constant 1.000000e+00 : f32
    %318 = vector.broadcast %cst_79 : f32 to vector<2x32xf32>
    %319 = arith.addf %318, %317 : vector<2x32xf32>
    %320 = arith.divf %318, %319 : vector<2x32xf32>
    %321 = vector.extract_strided_slice %289 {offsets = [0, 32], sizes = [2, 32], strides = [1, 1]} : vector<2x128xf32> to vector<2x32xf32>
    %322 = arith.negf %321 : vector<2x32xf32>
    %323 = math.exp %322 : vector<2x32xf32>
    %cst_80 = arith.constant 1.000000e+00 : f32
    %324 = vector.broadcast %cst_80 : f32 to vector<2x32xf32>
    %325 = arith.addf %324, %323 : vector<2x32xf32>
    %326 = arith.divf %324, %325 : vector<2x32xf32>
    %327 = vector.extract_strided_slice %289 {offsets = [0, 64], sizes = [2, 32], strides = [1, 1]} : vector<2x128xf32> to vector<2x32xf32>
    %328 = math.tanh %327 : vector<2x32xf32>
    %329 = vector.extract_strided_slice %289 {offsets = [0, 96], sizes = [2, 32], strides = [1, 1]} : vector<2x128xf32> to vector<2x32xf32>
    %330 = arith.negf %329 : vector<2x32xf32>
    %331 = math.exp %330 : vector<2x32xf32>
    %cst_81 = arith.constant 1.000000e+00 : f32
    %332 = vector.broadcast %cst_81 : f32 to vector<2x32xf32>
    %333 = arith.addf %332, %331 : vector<2x32xf32>
    %334 = arith.divf %332, %333 : vector<2x32xf32>
    %335 = arith.mulf %326, %268 : vector<2x32xf32>
    %336 = arith.mulf %320, %328 : vector<2x32xf32>
    %337 = arith.addf %335, %336 : vector<2x32xf32>
    %338 = math.tanh %337 : vector<2x32xf32>
    %339 = arith.mulf %334, %338 : vector<2x32xf32>
    %340 = arith.index_cast %c4_i32 : i32 to index
    %c0_82 = arith.constant 0 : index
    %c0_83 = arith.constant 0 : index
    %341 = vector.load %arg6[%340, %c0_82, %c0_83] : memref<8x2x64xf32, #tpu.memory_space<vmem>>, vector<1x2x32xf32>
    %342 = vector.shape_cast %341 : vector<1x2x32xf32> to vector<2x32xf32>
    %343 = vector.shape_cast %314 : vector<2x32xf32> to vector<1x2x32xf32>
    tpu.vector_store %arg6[%340, %c0_82, %c0_83], %343 {strides = array<i32>} : memref<8x2x64xf32, #tpu.memory_space<vmem>>, vector<1x2x32xf32>,
    %344 = arith.index_cast %279 : i32 to index
    %c0_84 = arith.constant 0 : index
    %c32_85 = arith.constant 32 : index
    %345 = vector.load %arg6[%344, %c0_84, %c32_85] : memref<8x2x64xf32, #tpu.memory_space<vmem>>, vector<1x2x32xf32>
    %346 = vector.shape_cast %345 : vector<1x2x32xf32> to vector<2x32xf32>
    %347 = vector.shape_cast %339 : vector<2x32xf32> to vector<1x2x32xf32>
    tpu.vector_store %arg6[%344, %c0_84, %c32_85], %347 {strides = array<i32>} : memref<8x2x64xf32, #tpu.memory_space<vmem>>, vector<1x2x32xf32>,
    %c5_i32 = arith.constant 5 : i32
    %c7_i32_86 = arith.constant 7 : i32
    %348 = arith.subi %c7_i32_86, %c5_i32 : i32
    %349 = arith.index_cast %c5_i32 : i32 to index
    %c0_87 = arith.constant 0 : index
    %c0_88 = arith.constant 0 : index
    %350 = vector.load %arg0[%349, %c0_87, %c0_88] : memref<8x2x128xf32, #tpu.memory_space<vmem>>, vector<1x2x128xf32>
    %351 = vector.shape_cast %350 : vector<1x2x128xf32> to vector<2x128xf32>
    %cst_89 = arith.constant dense<0.000000e+00> : vector<2x128xf32>
    %352 = tpu.matmul %314, %0, %cst_89 {dimension_numbers = #tpu.dot_dimension_numbers<[1], [0], [0], [1], [0, 0, 1, 1], [], []>} : vector<2x32xf32>, vector<32x128xf32>, vector<2x128xf32> -> vector<2x128xf32>
    %353 = arith.addf %351, %352 : vector<2x128xf32>
    %354 = arith.index_cast %348 : i32 to index
    %c0_90 = arith.constant 0 : index
    %c0_91 = arith.constant 0 : index
    %355 = vector.load %arg1[%354, %c0_90, %c0_91] : memref<8x2x128xf32, #tpu.memory_space<vmem>>, vector<1x2x128xf32>
    %356 = vector.shape_cast %355 : vector<1x2x128xf32> to vector<2x128xf32>
    %cst_92 = arith.constant dense<0.000000e+00> : vector<2x128xf32>
    %357 = tpu.matmul %339, %1, %cst_92 {dimension_numbers = #tpu.dot_dimension_numbers<[1], [0], [0], [1], [0, 0, 1, 1], [], []>} : vector<2x32xf32>, vector<32x128xf32>, vector<2x128xf32> -> vector<2x128xf32>
    %358 = arith.addf %356, %357 : vector<2x128xf32>
    %359 = vector.extract_strided_slice %353 {offsets = [0, 0], sizes = [2, 32], strides = [1, 1]} : vector<2x128xf32> to vector<2x32xf32>
    %360 = arith.negf %359 : vector<2x32xf32>
    %361 = math.exp %360 : vector<2x32xf32>
    %cst_93 = arith.constant 1.000000e+00 : f32
    %362 = vector.broadcast %cst_93 : f32 to vector<2x32xf32>
    %363 = arith.addf %362, %361 : vector<2x32xf32>
    %364 = arith.divf %362, %363 : vector<2x32xf32>
    %365 = vector.extract_strided_slice %353 {offsets = [0, 32], sizes = [2, 32], strides = [1, 1]} : vector<2x128xf32> to vector<2x32xf32>
    %366 = arith.negf %365 : vector<2x32xf32>
    %367 = math.exp %366 : vector<2x32xf32>
    %cst_94 = arith.constant 1.000000e+00 : f32
    %368 = vector.broadcast %cst_94 : f32 to vector<2x32xf32>
    %369 = arith.addf %368, %367 : vector<2x32xf32>
    %370 = arith.divf %368, %369 : vector<2x32xf32>
    %371 = vector.extract_strided_slice %353 {offsets = [0, 64], sizes = [2, 32], strides = [1, 1]} : vector<2x128xf32> to vector<2x32xf32>
    %372 = math.tanh %371 : vector<2x32xf32>
    %373 = vector.extract_strided_slice %353 {offsets = [0, 96], sizes = [2, 32], strides = [1, 1]} : vector<2x128xf32> to vector<2x32xf32>
    %374 = arith.negf %373 : vector<2x32xf32>
    %375 = math.exp %374 : vector<2x32xf32>
    %cst_95 = arith.constant 1.000000e+00 : f32
    %376 = vector.broadcast %cst_95 : f32 to vector<2x32xf32>
    %377 = arith.addf %376, %375 : vector<2x32xf32>
    %378 = arith.divf %376, %377 : vector<2x32xf32>
    %379 = arith.mulf %370, %312 : vector<2x32xf32>
    %380 = arith.mulf %364, %372 : vector<2x32xf32>
    %381 = arith.addf %379, %380 : vector<2x32xf32>
    %382 = math.tanh %381 : vector<2x32xf32>
    %383 = arith.mulf %378, %382 : vector<2x32xf32>
    %384 = vector.extract_strided_slice %358 {offsets = [0, 0], sizes = [2, 32], strides = [1, 1]} : vector<2x128xf32> to vector<2x32xf32>
    %385 = arith.negf %384 : vector<2x32xf32>
    %386 = math.exp %385 : vector<2x32xf32>
    %cst_96 = arith.constant 1.000000e+00 : f32
    %387 = vector.broadcast %cst_96 : f32 to vector<2x32xf32>
    %388 = arith.addf %387, %386 : vector<2x32xf32>
    %389 = arith.divf %387, %388 : vector<2x32xf32>
    %390 = vector.extract_strided_slice %358 {offsets = [0, 32], sizes = [2, 32], strides = [1, 1]} : vector<2x128xf32> to vector<2x32xf32>
    %391 = arith.negf %390 : vector<2x32xf32>
    %392 = math.exp %391 : vector<2x32xf32>
    %cst_97 = arith.constant 1.000000e+00 : f32
    %393 = vector.broadcast %cst_97 : f32 to vector<2x32xf32>
    %394 = arith.addf %393, %392 : vector<2x32xf32>
    %395 = arith.divf %393, %394 : vector<2x32xf32>
    %396 = vector.extract_strided_slice %358 {offsets = [0, 64], sizes = [2, 32], strides = [1, 1]} : vector<2x128xf32> to vector<2x32xf32>
    %397 = math.tanh %396 : vector<2x32xf32>
    %398 = vector.extract_strided_slice %358 {offsets = [0, 96], sizes = [2, 32], strides = [1, 1]} : vector<2x128xf32> to vector<2x32xf32>
    %399 = arith.negf %398 : vector<2x32xf32>
    %400 = math.exp %399 : vector<2x32xf32>
    %cst_98 = arith.constant 1.000000e+00 : f32
    %401 = vector.broadcast %cst_98 : f32 to vector<2x32xf32>
    %402 = arith.addf %401, %400 : vector<2x32xf32>
    %403 = arith.divf %401, %402 : vector<2x32xf32>
    %404 = arith.mulf %395, %337 : vector<2x32xf32>
    %405 = arith.mulf %389, %397 : vector<2x32xf32>
    %406 = arith.addf %404, %405 : vector<2x32xf32>
    %407 = math.tanh %406 : vector<2x32xf32>
    %408 = arith.mulf %403, %407 : vector<2x32xf32>
    %409 = arith.index_cast %c5_i32 : i32 to index
    %c0_99 = arith.constant 0 : index
    %c0_100 = arith.constant 0 : index
    %410 = vector.load %arg6[%409, %c0_99, %c0_100] : memref<8x2x64xf32, #tpu.memory_space<vmem>>, vector<1x2x32xf32>
    %411 = vector.shape_cast %410 : vector<1x2x32xf32> to vector<2x32xf32>
    %412 = vector.shape_cast %383 : vector<2x32xf32> to vector<1x2x32xf32>
    tpu.vector_store %arg6[%409, %c0_99, %c0_100], %412 {strides = array<i32>} : memref<8x2x64xf32, #tpu.memory_space<vmem>>, vector<1x2x32xf32>,
    %413 = arith.index_cast %348 : i32 to index
    %c0_101 = arith.constant 0 : index
    %c32_102 = arith.constant 32 : index
    %414 = vector.load %arg6[%413, %c0_101, %c32_102] : memref<8x2x64xf32, #tpu.memory_space<vmem>>, vector<1x2x32xf32>
    %415 = vector.shape_cast %414 : vector<1x2x32xf32> to vector<2x32xf32>
    %416 = vector.shape_cast %408 : vector<2x32xf32> to vector<1x2x32xf32>
    tpu.vector_store %arg6[%413, %c0_101, %c32_102], %416 {strides = array<i32>} : memref<8x2x64xf32, #tpu.memory_space<vmem>>, vector<1x2x32xf32>,
    %c6_i32 = arith.constant 6 : i32
    %c7_i32_103 = arith.constant 7 : i32
    %417 = arith.subi %c7_i32_103, %c6_i32 : i32
    %418 = arith.index_cast %c6_i32 : i32 to index
    %c0_104 = arith.constant 0 : index
    %c0_105 = arith.constant 0 : index
    %419 = vector.load %arg0[%418, %c0_104, %c0_105] : memref<8x2x128xf32, #tpu.memory_space<vmem>>, vector<1x2x128xf32>
    %420 = vector.shape_cast %419 : vector<1x2x128xf32> to vector<2x128xf32>
    %cst_106 = arith.constant dense<0.000000e+00> : vector<2x128xf32>
    %421 = tpu.matmul %383, %0, %cst_106 {dimension_numbers = #tpu.dot_dimension_numbers<[1], [0], [0], [1], [0, 0, 1, 1], [], []>} : vector<2x32xf32>, vector<32x128xf32>, vector<2x128xf32> -> vector<2x128xf32>
    %422 = arith.addf %420, %421 : vector<2x128xf32>
    %423 = arith.index_cast %417 : i32 to index
    %c0_107 = arith.constant 0 : index
    %c0_108 = arith.constant 0 : index
    %424 = vector.load %arg1[%423, %c0_107, %c0_108] : memref<8x2x128xf32, #tpu.memory_space<vmem>>, vector<1x2x128xf32>
    %425 = vector.shape_cast %424 : vector<1x2x128xf32> to vector<2x128xf32>
    %cst_109 = arith.constant dense<0.000000e+00> : vector<2x128xf32>
    %426 = tpu.matmul %408, %1, %cst_109 {dimension_numbers = #tpu.dot_dimension_numbers<[1], [0], [0], [1], [0, 0, 1, 1], [], []>} : vector<2x32xf32>, vector<32x128xf32>, vector<2x128xf32> -> vector<2x128xf32>
    %427 = arith.addf %425, %426 : vector<2x128xf32>
    %428 = vector.extract_strided_slice %422 {offsets = [0, 0], sizes = [2, 32], strides = [1, 1]} : vector<2x128xf32> to vector<2x32xf32>
    %429 = arith.negf %428 : vector<2x32xf32>
    %430 = math.exp %429 : vector<2x32xf32>
    %cst_110 = arith.constant 1.000000e+00 : f32
    %431 = vector.broadcast %cst_110 : f32 to vector<2x32xf32>
    %432 = arith.addf %431, %430 : vector<2x32xf32>
    %433 = arith.divf %431, %432 : vector<2x32xf32>
    %434 = vector.extract_strided_slice %422 {offsets = [0, 32], sizes = [2, 32], strides = [1, 1]} : vector<2x128xf32> to vector<2x32xf32>
    %435 = arith.negf %434 : vector<2x32xf32>
    %436 = math.exp %435 : vector<2x32xf32>
    %cst_111 = arith.constant 1.000000e+00 : f32
    %437 = vector.broadcast %cst_111 : f32 to vector<2x32xf32>
    %438 = arith.addf %437, %436 : vector<2x32xf32>
    %439 = arith.divf %437, %438 : vector<2x32xf32>
    %440 = vector.extract_strided_slice %422 {offsets = [0, 64], sizes = [2, 32], strides = [1, 1]} : vector<2x128xf32> to vector<2x32xf32>
    %441 = math.tanh %440 : vector<2x32xf32>
    %442 = vector.extract_strided_slice %422 {offsets = [0, 96], sizes = [2, 32], strides = [1, 1]} : vector<2x128xf32> to vector<2x32xf32>
    %443 = arith.negf %442 : vector<2x32xf32>
    %444 = math.exp %443 : vector<2x32xf32>
    %cst_112 = arith.constant 1.000000e+00 : f32
    %445 = vector.broadcast %cst_112 : f32 to vector<2x32xf32>
    %446 = arith.addf %445, %444 : vector<2x32xf32>
    %447 = arith.divf %445, %446 : vector<2x32xf32>
    %448 = arith.mulf %439, %381 : vector<2x32xf32>
    %449 = arith.mulf %433, %441 : vector<2x32xf32>
    %450 = arith.addf %448, %449 : vector<2x32xf32>
    %451 = math.tanh %450 : vector<2x32xf32>
    %452 = arith.mulf %447, %451 : vector<2x32xf32>
    %453 = vector.extract_strided_slice %427 {offsets = [0, 0], sizes = [2, 32], strides = [1, 1]} : vector<2x128xf32> to vector<2x32xf32>
    %454 = arith.negf %453 : vector<2x32xf32>
    %455 = math.exp %454 : vector<2x32xf32>
    %cst_113 = arith.constant 1.000000e+00 : f32
    %456 = vector.broadcast %cst_113 : f32 to vector<2x32xf32>
    %457 = arith.addf %456, %455 : vector<2x32xf32>
    %458 = arith.divf %456, %457 : vector<2x32xf32>
    %459 = vector.extract_strided_slice %427 {offsets = [0, 32], sizes = [2, 32], strides = [1, 1]} : vector<2x128xf32> to vector<2x32xf32>
    %460 = arith.negf %459 : vector<2x32xf32>
    %461 = math.exp %460 : vector<2x32xf32>
    %cst_114 = arith.constant 1.000000e+00 : f32
    %462 = vector.broadcast %cst_114 : f32 to vector<2x32xf32>
    %463 = arith.addf %462, %461 : vector<2x32xf32>
    %464 = arith.divf %462, %463 : vector<2x32xf32>
    %465 = vector.extract_strided_slice %427 {offsets = [0, 64], sizes = [2, 32], strides = [1, 1]} : vector<2x128xf32> to vector<2x32xf32>
    %466 = math.tanh %465 : vector<2x32xf32>
    %467 = vector.extract_strided_slice %427 {offsets = [0, 96], sizes = [2, 32], strides = [1, 1]} : vector<2x128xf32> to vector<2x32xf32>
    %468 = arith.negf %467 : vector<2x32xf32>
    %469 = math.exp %468 : vector<2x32xf32>
    %cst_115 = arith.constant 1.000000e+00 : f32
    %470 = vector.broadcast %cst_115 : f32 to vector<2x32xf32>
    %471 = arith.addf %470, %469 : vector<2x32xf32>
    %472 = arith.divf %470, %471 : vector<2x32xf32>
    %473 = arith.mulf %464, %406 : vector<2x32xf32>
    %474 = arith.mulf %458, %466 : vector<2x32xf32>
    %475 = arith.addf %473, %474 : vector<2x32xf32>
    %476 = math.tanh %475 : vector<2x32xf32>
    %477 = arith.mulf %472, %476 : vector<2x32xf32>
    %478 = arith.index_cast %c6_i32 : i32 to index
    %c0_116 = arith.constant 0 : index
    %c0_117 = arith.constant 0 : index
    %479 = vector.load %arg6[%478, %c0_116, %c0_117] : memref<8x2x64xf32, #tpu.memory_space<vmem>>, vector<1x2x32xf32>
    %480 = vector.shape_cast %479 : vector<1x2x32xf32> to vector<2x32xf32>
    %481 = vector.shape_cast %452 : vector<2x32xf32> to vector<1x2x32xf32>
    tpu.vector_store %arg6[%478, %c0_116, %c0_117], %481 {strides = array<i32>} : memref<8x2x64xf32, #tpu.memory_space<vmem>>, vector<1x2x32xf32>,
    %482 = arith.index_cast %417 : i32 to index
    %c0_118 = arith.constant 0 : index
    %c32_119 = arith.constant 32 : index
    %483 = vector.load %arg6[%482, %c0_118, %c32_119] : memref<8x2x64xf32, #tpu.memory_space<vmem>>, vector<1x2x32xf32>
    %484 = vector.shape_cast %483 : vector<1x2x32xf32> to vector<2x32xf32>
    %485 = vector.shape_cast %477 : vector<2x32xf32> to vector<1x2x32xf32>
    tpu.vector_store %arg6[%482, %c0_118, %c32_119], %485 {strides = array<i32>} : memref<8x2x64xf32, #tpu.memory_space<vmem>>, vector<1x2x32xf32>,
    %c7_i32_120 = arith.constant 7 : i32
    %c7_i32_121 = arith.constant 7 : i32
    %486 = arith.subi %c7_i32_121, %c7_i32_120 : i32
    %487 = arith.index_cast %c7_i32_120 : i32 to index
    %c0_122 = arith.constant 0 : index
    %c0_123 = arith.constant 0 : index
    %488 = vector.load %arg0[%487, %c0_122, %c0_123] : memref<8x2x128xf32, #tpu.memory_space<vmem>>, vector<1x2x128xf32>
    %489 = vector.shape_cast %488 : vector<1x2x128xf32> to vector<2x128xf32>
    %cst_124 = arith.constant dense<0.000000e+00> : vector<2x128xf32>
    %490 = tpu.matmul %452, %0, %cst_124 {dimension_numbers = #tpu.dot_dimension_numbers<[1], [0], [0], [1], [0, 0, 1, 1], [], []>} : vector<2x32xf32>, vector<32x128xf32>, vector<2x128xf32> -> vector<2x128xf32>
    %491 = arith.addf %489, %490 : vector<2x128xf32>
    %492 = arith.index_cast %486 : i32 to index
    %c0_125 = arith.constant 0 : index
    %c0_126 = arith.constant 0 : index
    %493 = vector.load %arg1[%492, %c0_125, %c0_126] : memref<8x2x128xf32, #tpu.memory_space<vmem>>, vector<1x2x128xf32>
    %494 = vector.shape_cast %493 : vector<1x2x128xf32> to vector<2x128xf32>
    %cst_127 = arith.constant dense<0.000000e+00> : vector<2x128xf32>
    %495 = tpu.matmul %477, %1, %cst_127 {dimension_numbers = #tpu.dot_dimension_numbers<[1], [0], [0], [1], [0, 0, 1, 1], [], []>} : vector<2x32xf32>, vector<32x128xf32>, vector<2x128xf32> -> vector<2x128xf32>
    %496 = arith.addf %494, %495 : vector<2x128xf32>
    %497 = vector.extract_strided_slice %491 {offsets = [0, 0], sizes = [2, 32], strides = [1, 1]} : vector<2x128xf32> to vector<2x32xf32>
    %498 = arith.negf %497 : vector<2x32xf32>
    %499 = math.exp %498 : vector<2x32xf32>
    %cst_128 = arith.constant 1.000000e+00 : f32
    %500 = vector.broadcast %cst_128 : f32 to vector<2x32xf32>
    %501 = arith.addf %500, %499 : vector<2x32xf32>
    %502 = arith.divf %500, %501 : vector<2x32xf32>
    %503 = vector.extract_strided_slice %491 {offsets = [0, 32], sizes = [2, 32], strides = [1, 1]} : vector<2x128xf32> to vector<2x32xf32>
    %504 = arith.negf %503 : vector<2x32xf32>
    %505 = math.exp %504 : vector<2x32xf32>
    %cst_129 = arith.constant 1.000000e+00 : f32
    %506 = vector.broadcast %cst_129 : f32 to vector<2x32xf32>
    %507 = arith.addf %506, %505 : vector<2x32xf32>
    %508 = arith.divf %506, %507 : vector<2x32xf32>
    %509 = vector.extract_strided_slice %491 {offsets = [0, 64], sizes = [2, 32], strides = [1, 1]} : vector<2x128xf32> to vector<2x32xf32>
    %510 = math.tanh %509 : vector<2x32xf32>
    %511 = vector.extract_strided_slice %491 {offsets = [0, 96], sizes = [2, 32], strides = [1, 1]} : vector<2x128xf32> to vector<2x32xf32>
    %512 = arith.negf %511 : vector<2x32xf32>
    %513 = math.exp %512 : vector<2x32xf32>
    %cst_130 = arith.constant 1.000000e+00 : f32
    %514 = vector.broadcast %cst_130 : f32 to vector<2x32xf32>
    %515 = arith.addf %514, %513 : vector<2x32xf32>
    %516 = arith.divf %514, %515 : vector<2x32xf32>
    %517 = arith.mulf %508, %450 : vector<2x32xf32>
    %518 = arith.mulf %502, %510 : vector<2x32xf32>
    %519 = arith.addf %517, %518 : vector<2x32xf32>
    %520 = math.tanh %519 : vector<2x32xf32>
    %521 = arith.mulf %516, %520 : vector<2x32xf32>
    %522 = vector.extract_strided_slice %496 {offsets = [0, 0], sizes = [2, 32], strides = [1, 1]} : vector<2x128xf32> to vector<2x32xf32>
    %523 = arith.negf %522 : vector<2x32xf32>
    %524 = math.exp %523 : vector<2x32xf32>
    %cst_131 = arith.constant 1.000000e+00 : f32
    %525 = vector.broadcast %cst_131 : f32 to vector<2x32xf32>
    %526 = arith.addf %525, %524 : vector<2x32xf32>
    %527 = arith.divf %525, %526 : vector<2x32xf32>
    %528 = vector.extract_strided_slice %496 {offsets = [0, 32], sizes = [2, 32], strides = [1, 1]} : vector<2x128xf32> to vector<2x32xf32>
    %529 = arith.negf %528 : vector<2x32xf32>
    %530 = math.exp %529 : vector<2x32xf32>
    %cst_132 = arith.constant 1.000000e+00 : f32
    %531 = vector.broadcast %cst_132 : f32 to vector<2x32xf32>
    %532 = arith.addf %531, %530 : vector<2x32xf32>
    %533 = arith.divf %531, %532 : vector<2x32xf32>
    %534 = vector.extract_strided_slice %496 {offsets = [0, 64], sizes = [2, 32], strides = [1, 1]} : vector<2x128xf32> to vector<2x32xf32>
    %535 = math.tanh %534 : vector<2x32xf32>
    %536 = vector.extract_strided_slice %496 {offsets = [0, 96], sizes = [2, 32], strides = [1, 1]} : vector<2x128xf32> to vector<2x32xf32>
    %537 = arith.negf %536 : vector<2x32xf32>
    %538 = math.exp %537 : vector<2x32xf32>
    %cst_133 = arith.constant 1.000000e+00 : f32
    %539 = vector.broadcast %cst_133 : f32 to vector<2x32xf32>
    %540 = arith.addf %539, %538 : vector<2x32xf32>
    %541 = arith.divf %539, %540 : vector<2x32xf32>
    %542 = arith.mulf %533, %475 : vector<2x32xf32>
    %543 = arith.mulf %527, %535 : vector<2x32xf32>
    %544 = arith.addf %542, %543 : vector<2x32xf32>
    %545 = math.tanh %544 : vector<2x32xf32>
    %546 = arith.mulf %541, %545 : vector<2x32xf32>
    %547 = arith.index_cast %c7_i32_120 : i32 to index
    %c0_134 = arith.constant 0 : index
    %c0_135 = arith.constant 0 : index
    %548 = vector.load %arg6[%547, %c0_134, %c0_135] : memref<8x2x64xf32, #tpu.memory_space<vmem>>, vector<1x2x32xf32>
    %549 = vector.shape_cast %548 : vector<1x2x32xf32> to vector<2x32xf32>
    %550 = vector.shape_cast %521 : vector<2x32xf32> to vector<1x2x32xf32>
    tpu.vector_store %arg6[%547, %c0_134, %c0_135], %550 {strides = array<i32>} : memref<8x2x64xf32, #tpu.memory_space<vmem>>, vector<1x2x32xf32>,
    %551 = arith.index_cast %486 : i32 to index
    %c0_136 = arith.constant 0 : index
    %c32_137 = arith.constant 32 : index
    %552 = vector.load %arg6[%551, %c0_136, %c32_137] : memref<8x2x64xf32, #tpu.memory_space<vmem>>, vector<1x2x32xf32>
    %553 = vector.shape_cast %552 : vector<1x2x32xf32> to vector<2x32xf32>
    %554 = vector.shape_cast %546 : vector<2x32xf32> to vector<1x2x32xf32>
    tpu.vector_store %arg6[%551, %c0_136, %c32_137], %554 {strides = array<i32>} : memref<8x2x64xf32, #tpu.memory_space<vmem>>, vector<1x2x32xf32>,
    %c8_i32 = arith.constant 8 : i32
    %c7 = arith.constant 7 : index
    %c0_138 = arith.constant 0 : index
    %c0_139 = arith.constant 0 : index
    %555 = vector.load %arg6[%c7, %c0_138, %c0_139] : memref<8x2x64xf32, #tpu.memory_space<vmem>>, vector<1x2x64xf32>
    %556 = vector.shape_cast %555 : vector<1x2x64xf32> to vector<2x64xf32>
    %c0_140 = arith.constant 0 : index
    %c0_141 = arith.constant 0 : index
    %557 = vector.load %arg4[%c0_140, %c0_141] : memref<64x8xf32, #tpu.memory_space<vmem>>, vector<64x8xf32>
    %cst_142 = arith.constant dense<0.000000e+00> : vector<2x8xf32>
    %558 = tpu.matmul %556, %557, %cst_142 {dimension_numbers = #tpu.dot_dimension_numbers<[1], [0], [0], [1], [0, 0, 1, 1], [], []>} : vector<2x64xf32>, vector<64x8xf32>, vector<2x8xf32> -> vector<2x8xf32>
    %c0_143 = arith.constant 0 : index
    %c0_144 = arith.constant 0 : index
    %559 = vector.load %arg5[%c0_143, %c0_144] : memref<1x8xf32, #tpu.memory_space<vmem>>, vector<1x8xf32>
    %560 = vector.broadcast %559 : vector<1x8xf32> to vector<2x8xf32>
    %561 = arith.addf %558, %560 : vector<2x8xf32>
    %c0_145 = arith.constant 0 : index
    %c0_146 = arith.constant 0 : index
    %562 = vector.load %arg7[%c0_145, %c0_146] : memref<2x8xf32, #tpu.memory_space<vmem>>, vector<2x8xf32>
    tpu.vector_store %arg7[%c0_145, %c0_146], %561 {strides = array<i32>} : memref<2x8xf32, #tpu.memory_space<vmem>>, vector<2x8xf32>,
    return
  }
}

</mosaic_0001>

<llo_original>
// kernel: lstm_model_forward.2
$region0: #{lstm_model_forward.2}
  #allocation0 [shape = 'u32[]', space=smem, size = 0x4, offset = 0x4, fixed_abs, tag = 'smem constant byte address 0x4 - core index']
  #allocation1 [shape = 'u32[144,128]{1,0:T(1,128)}', space=vmem, size = 0x12000, scoped, tag = 'internal scratch']
  %s0 = inlined_call_operand.vmem [shape: f32[8,2,128], index: 0, kind: input, shape index: {}]
  %s1 = inlined_call_operand.vmem [shape: f32[8,2,128], index: 1, kind: input, shape index: {}]
  %s2 = inlined_call_operand.vmem [shape: f32[32,128], index: 2, kind: input, shape index: {}]
  %s3 = inlined_call_operand.vmem [shape: f32[32,128], index: 3, kind: input, shape index: {}]
  %s4 = inlined_call_operand.vmem [shape: f32[8,2,64], index: 4, kind: output, shape index: {}]
  %s5 = sld [smem:[#allocation0]]
  $region26: #{lstm_model_forward.2} parent=0
    _
  %s7 = ssub.s32 1, %s5
  %s8 = scalar_select 0, %s7, %s5
  // Predicated region
  $region2: #{lstm_model_forward.2} parent=0 // pred_check
    _
  $region3: #{lstm_model_forward.2} parent=0 // pred_check_branch
    %10 = sbr.rel (0) target = $region5
  $region4: #{lstm_model_forward.2} parent=0 // pred_region
    _
  $region5: #{lstm_model_forward.2} parent=0 // pred_fallthru
    _
  // Predicated region
  $region6: #{lstm_model_forward.2} parent=0 // pred_check
    _
  $region7: #{lstm_model_forward.2} parent=0 // pred_check_branch
    %12 = sbr.rel (0) target = $region9
  $region8: #{lstm_model_forward.2} parent=0 // pred_region
    _
  $region9: #{lstm_model_forward.2} parent=0 // pred_fallthru
    _
  // Predicated region
  $region10: #{lstm_model_forward.2} parent=0 // pred_check
    _
  $region11: #{lstm_model_forward.2} parent=0 // pred_check_branch
    %14 = sbr.rel (0) target = $region13
  $region12: #{lstm_model_forward.2} parent=0 // pred_region
    _
  $region13: #{lstm_model_forward.2} parent=0 // pred_fallthru
    _
  // Predicated region
  $region14: #{lstm_model_forward.2} parent=0 // pred_check
    _
  $region15: #{lstm_model_forward.2} parent=0 // pred_check_branch
    %16 = sbr.rel (0) target = $region17
  $region16: #{lstm_model_forward.2} parent=0 // pred_region
    _
  $region17: #{lstm_model_forward.2} parent=0 // pred_fallthru
    _
  %v17 = vld [vmem:[%s2] sm:$0xff]
  %v18 = vld [vmem:[%s2 + $0x8] sm:$0xff]
  %v19 = vld [vmem:[%s2 + $0x10] sm:$0xff]
  %v20 = vld [vmem:[%s2 + $0x18] sm:$0xff]
  %v21 = vld [vmem:[%s3] sm:$0xff]
  %v22 = vld [vmem:[%s3 + $0x8] sm:$0xff]
  %v23 = vld [vmem:[%s3 + $0x10] sm:$0xff]
  %v24 = vld [vmem:[%s3 + $0x18] sm:$0xff]
  %v25 = vld [vmem:[%s0] sm:$0x3]
  %vm26 = vcmask 261120
  %v28 = vsel %vm26, 0.0, 0
  %30 = vmatprep.subr.mxu0 0.0
  %31 = vmatpush1.msra.mxu0 0.0
  %32 = vmatprep.subr.mxu0 0.0
  %33 = vmatpush1.msra.mxu0 0.0
  %34 = vmatprep.subr.mxu0 0.0
  %35 = vmatpush1.msra.mxu0 0.0
  %36 = vmatprep.subr.mxu0 0.0
  %37 = vmatpush1.msra.mxu0 0.0
  %38 = vmatprep.subr.mxu0 0.0
  %39 = vmatpush1.msra.mxu0 0.0
  %40 = vmatprep.subr.mxu0 0.0
  %41 = vmatpush1.msra.mxu0 0.0
  %42 = vmatprep.subr.mxu0 0.0
  %43 = vmatpush1.msra.mxu0 0.0
  %44 = vmatprep.subr.mxu0 0.0
  %45 = vmatpush1.msra.mxu0 0.0
  %46 = vmatprep.subr.mxu0 0.0
  %47 = vmatpush1.msra.mxu0 0.0
  %48 = vmatprep.subr.mxu0 0.0
  %49 = vmatpush1.msra.mxu0 0.0
  %50 = vmatprep.subr.mxu0 0.0
  %51 = vmatpush1.msra.mxu0 0.0
  %52 = vmatprep.subr.mxu0 0.0
  %53 = vmatpush1.msra.mxu0 0.0
  %54 = vmatprep.subr.mxu0 0.0
  %55 = vmatpush1.msra.mxu0 %v20
  %56 = vmatprep.subr.mxu0 0.0
  %57 = vmatpush1.msra.mxu0 %v19
  %58 = vmatprep.subr.mxu0 0.0
  %59 = vmatpush1.msra.mxu0 %v18
  %60 = vmatprep.subr.mxu0 0.0
  %61 = vmatpush1.msra.mxu0 %v17
  %62 = vmatprep.subr.mxu0 0.0
  %63 = vmatpush2.msra.mxu0 0.0
  %64 = vmatprep.subr.mxu0 0.0
  %65 = vmatpush2.msra.mxu0 0.0
  %66 = vmatprep.subr.mxu0 0.0
  %67 = vmatpush2.msra.mxu0 0.0
  %68 = vmatprep.subr.mxu0 0.0
  %69 = vmatpush2.msra.mxu0 0.0
  %70 = vmatprep.subr.mxu0 0.0
  %71 = vmatpush2.msra.mxu0 0.0
  %72 = vmatprep.subr.mxu0 0.0
  %73 = vmatpush2.msra.mxu0 0.0
  %74 = vmatprep.subr.mxu0 0.0
  %75 = vmatpush2.msra.mxu0 0.0
  %76 = vmatprep.subr.mxu0 0.0
  %77 = vmatpush2.msra.mxu0 0.0
  %78 = vmatprep.subr.mxu0 0.0
  %79 = vmatpush2.msra.mxu0 0.0
  %80 = vmatprep.subr.mxu0 0.0
  %81 = vmatpush2.msra.mxu0 0.0
  %82 = vmatprep.subr.mxu0 0.0
  %83 = vmatpush2.msra.mxu0 0.0
  %84 = vmatprep.subr.mxu0 0.0
  %85 = vmatpush2.msra.mxu0 0.0
  %86 = vmatprep.subr.mxu0 0.0
  %87 = vmatpush2.msra.mxu0 0.0
  %88 = vmatprep.subr.mxu0 0.0
  %89 = vmatpush2.msra.mxu0 0.0
  %90 = vmatprep.subr.mxu0 0.0
  %91 = vmatpush2.msra.mxu0 0.0
  %92 = vmatprep.subr.mxu0 0.0
  %93 = vmatpush2.msra.mxu0 0.0
  %94 = vmatprep.mubr.f32.mxu0 0.0
  %95 = vmatmul.mubr.f32.gmra.mxu0 %v28
  %v96 = vpop.f32.mrf.mxu0
  %v97 = vadd.f32 0.0, %v96
  %v98 = vpop.f32.mrf.mxu0
  %99 = vdwg.mxu0
  %v100 = vadd.f32 %v25, %v97
  %s101 = scalar_lea.vmem %s1, 14
  %v102 = vld [vmem:[%s101] sm:$0x3]
  %103 = vmatprep.subr.mxu0 0.0
  %104 = vmatpush1.msra.mxu0 0.0
  %105 = vmatprep.subr.mxu0 0.0
  %106 = vmatpush1.msra.mxu0 0.0
  %107 = vmatprep.subr.mxu0 0.0
  %108 = vmatpush1.msra.mxu0 0.0
  %109 = vmatprep.subr.mxu0 0.0
  %110 = vmatpush1.msra.mxu0 0.0
  %111 = vmatprep.subr.mxu0 0.0
  %112 = vmatpush1.msra.mxu0 0.0
  %113 = vmatprep.subr.mxu0 0.0
  %114 = vmatpush1.msra.mxu0 0.0
  %115 = vmatprep.subr.mxu0 0.0
  %116 = vmatpush1.msra.mxu0 0.0
  %117 = vmatprep.subr.mxu0 0.0
  %118 = vmatpush1.msra.mxu0 0.0
  %119 = vmatprep.subr.mxu0 0.0
  %120 = vmatpush1.msra.mxu0 0.0
  %121 = vmatprep.subr.mxu0 0.0
  %122 = vmatpush1.msra.mxu0 0.0
  %123 = vmatprep.subr.mxu0 0.0
  %124 = vmatpush1.msra.mxu0 0.0
  %125 = vmatprep.subr.mxu0 0.0
  %126 = vmatpush1.msra.mxu0 0.0
  %127 = vmatprep.subr.mxu0 0.0
  %128 = vmatpush1.msra.mxu0 %v24
  %129 = vmatprep.subr.mxu0 0.0
  %130 = vmatpush1.msra.mxu0 %v23
  %131 = vmatprep.subr.mxu0 0.0
  %132 = vmatpush1.msra.mxu0 %v22
  %133 = vmatprep.subr.mxu0 0.0
  %134 = vmatpush1.msra.mxu0 %v21
  %135 = vmatprep.subr.mxu0 0.0
  %136 = vmatpush2.msra.mxu0 0.0
  %137 = vmatprep.subr.mxu0 0.0
  %138 = vmatpush2.msra.mxu0 0.0
  %139 = vmatprep.subr.mxu0 0.0
  %140 = vmatpush2.msra.mxu0 0.0
  %141 = vmatprep.subr.mxu0 0.0
  %142 = vmatpush2.msra.mxu0 0.0
  %143 = vmatprep.subr.mxu0 0.0
  %144 = vmatpush2.msra.mxu0 0.0
  %145 = vmatprep.subr.mxu0 0.0
  %146 = vmatpush2.msra.mxu0 0.0
  %147 = vmatprep.subr.mxu0 0.0
  %148 = vmatpush2.msra.mxu0 0.0
  %149 = vmatprep.subr.mxu0 0.0
  %150 = vmatpush2.msra.mxu0 0.0
  %151 = vmatprep.subr.mxu0 0.0
  %152 = vmatpush2.msra.mxu0 0.0
  %153 = vmatprep.subr.mxu0 0.0
  %154 = vmatpush2.msra.mxu0 0.0
  %155 = vmatprep.subr.mxu0 0.0
  %156 = vmatpush2.msra.mxu0 0.0
  %157 = vmatprep.subr.mxu0 0.0
  %158 = vmatpush2.msra.mxu0 0.0
  %159 = vmatprep.subr.mxu0 0.0
  %160 = vmatpush2.msra.mxu0 0.0
  %161 = vmatprep.subr.mxu0 0.0
  %162 = vmatpush2.msra.mxu0 0.0
  %163 = vmatprep.subr.mxu0 0.0
  %164 = vmatpush2.msra.mxu0 0.0
  %165 = vmatprep.subr.mxu0 0.0
  %166 = vmatpush2.msra.mxu0 0.0
  %167 = vmatprep.mubr.f32.mxu0 0.0
  %168 = vmatmul.mubr.f32.gmra.mxu0 %v28
  %v169 = vpop.f32.mrf.mxu0
  %v170 = vadd.f32 0.0, %v169
  %v171 = vpop.f32.mrf.mxu0
  %172 = vdwg.mxu0
  %v173 = vadd.f32 %v102, %v170
  %v174 = vxor.u32 %v100, 2147483648
  %v175 = vmul.f32 %v174, 1.442695
  %v176 = vpow.pop %v175
  %v177 = vadd.f32 %v176, 1.0
  %v178 = vrcp.pop %v177
  %v179 = vmul.f32 1.0, %v178
  %v180 = vtanh.pop %v100
  %v181 = vmul.f32 %v179, 0.0
  %183 = vrot.lane.b32.xlu0 %v180, 64
  %v184 = vpop.permute.xlu0 %183
  %v186 = vmul.f32 %v179, %v184
  %188 = vrot.lane.b32.xlu0 %v186, 32
  %v189 = vpop.permute.xlu0 %188
  %v191 = vadd.f32 %v181, %v189
  %v192 = vtanh.pop %v191
  %194 = vrot.lane.b32.xlu0 %v192, 64
  %v195 = vpop.permute.xlu0 %194
  %v197 = vmul.f32 %v179, %v195
  %v198 = vxor.u32 %v173, 2147483648
  %v199 = vmul.f32 %v198, 1.442695
  %v200 = vpow.pop %v199
  %v201 = vadd.f32 %v200, 1.0
  %v202 = vrcp.pop %v201
  %v203 = vmul.f32 1.0, %v202
  %v204 = vtanh.pop %v173
  %v205 = vmul.f32 %v203, 0.0
  %207 = vrot.lane.b32.xlu0 %v204, 64
  %v208 = vpop.permute.xlu0 %207
  %v210 = vmul.f32 %v203, %v208
  %212 = vrot.lane.b32.xlu0 %v210, 32
  %v213 = vpop.permute.xlu0 %212
  %v215 = vadd.f32 %v205, %v213
  %v216 = vtanh.pop %v215
  %218 = vrot.lane.b32.xlu0 %v216, 64
  %v219 = vpop.permute.xlu0 %218
  %v221 = vmul.f32 %v203, %v219
  %223 = vrot.lane.b32.xlu0 %v197, 32
  %v224 = vpop.permute.xlu0 %223
  %vm226 = vcmask 254976
  %227 = vst.msk [vmem:[%s4] sm:$0x3] %vm226, %v224
  %229 = vrot.lane.b32.xlu0 %v221, 64
  %v230 = vpop.permute.xlu0 %229
  %s232 = scalar_lea.vmem %s4, 14
  %vm233 = vcmask 517376
  %234 = vst.msk [vmem:[%s232] sm:$0x3] %vm233, %v230
  %s235 = scalar_lea.vmem %s0, 2
  %v236 = vld [vmem:[%s235] sm:$0x3]
  %v237 = vsel %vm26, %v224, 0
  %239 = vmatprep.subr.mxu0 0.0
  %240 = vmatpush1.msra.mxu0 0.0
  %241 = vmatprep.subr.mxu0 0.0
  %242 = vmatpush1.msra.mxu0 0.0
  %243 = vmatprep.subr.mxu0 0.0
  %244 = vmatpush1.msra.mxu0 0.0
  %245 = vmatprep.subr.mxu0 0.0
  %246 = vmatpush1.msra.mxu0 0.0
  %247 = vmatprep.subr.mxu0 0.0
  %248 = vmatpush1.msra.mxu0 0.0
  %249 = vmatprep.subr.mxu0 0.0
  %250 = vmatpush1.msra.mxu0 0.0
  %251 = vmatprep.subr.mxu0 0.0
  %252 = vmatpush1.msra.mxu0 0.0
  %253 = vmatprep.subr.mxu0 0.0
  %254 = vmatpush1.msra.mxu0 0.0
  %255 = vmatprep.subr.mxu0 0.0
  %256 = vmatpush1.msra.mxu0 0.0
  %257 = vmatprep.subr.mxu0 0.0
  %258 = vmatpush1.msra.mxu0 0.0
  %259 = vmatprep.subr.mxu0 0.0
  %260 = vmatpush1.msra.mxu0 0.0
  %261 = vmatprep.subr.mxu0 0.0
  %262 = vmatpush1.msra.mxu0 0.0
  %263 = vmatprep.subr.mxu0 0.0
  %264 = vmatpush1.msra.mxu0 %v20
  %265 = vmatprep.subr.mxu0 0.0
  %266 = vmatpush1.msra.mxu0 %v19
  %267 = vmatprep.subr.mxu0 0.0
  %268 = vmatpush1.msra.mxu0 %v18
  %269 = vmatprep.subr.mxu0 0.0
  %270 = vmatpush1.msra.mxu0 %v17
  %271 = vmatprep.subr.mxu0 0.0
  %272 = vmatpush2.msra.mxu0 0.0
  %273 = vmatprep.subr.mxu0 0.0
  %274 = vmatpush2.msra.mxu0 0.0
  %275 = vmatprep.subr.mxu0 0.0
  %276 = vmatpush2.msra.mxu0 0.0
  %277 = vmatprep.subr.mxu0 0.0
  %278 = vmatpush2.msra.mxu0 0.0
  %279 = vmatprep.subr.mxu0 0.0
  %280 = vmatpush2.msra.mxu0 0.0
  %281 = vmatprep.subr.mxu0 0.0
  %282 = vmatpush2.msra.mxu0 0.0
  %283 = vmatprep.subr.mxu0 0.0
  %284 = vmatpush2.msra.mxu0 0.0
  %285 = vmatprep.subr.mxu0 0.0
  %286 = vmatpush2.msra.mxu0 0.0
  %287 = vmatprep.subr.mxu0 0.0
  %288 = vmatpush2.msra.mxu0 0.0
  %289 = vmatprep.subr.mxu0 0.0
  %290 = vmatpush2.msra.mxu0 0.0
  %291 = vmatprep.subr.mxu0 0.0
  %292 = vmatpush2.msra.mxu0 0.0
  %293 = vmatprep.subr.mxu0 0.0
  %294 = vmatpush2.msra.mxu0 0.0
  %295 = vmatprep.subr.mxu0 0.0
  %296 = vmatpush2.msra.mxu0 0.0
  %297 = vmatprep.subr.mxu0 0.0
  %298 = vmatpush2.msra.mxu0 0.0
  %299 = vmatprep.subr.mxu0 0.0
  %300 = vmatpush2.msra.mxu0 0.0
  %301 = vmatprep.subr.mxu0 0.0
  %302 = vmatpush2.msra.mxu0 0.0
  %303 = vmatprep.mubr.f32.mxu0 0.0
  %304 = vmatmul.mubr.f32.gmra.mxu0 %v237
  %v305 = vpop.f32.mrf.mxu0
  %v306 = vadd.f32 0.0, %v305
  %v307 = vpop.f32.mrf.mxu0
  %308 = vdwg.mxu0
  %v309 = vadd.f32 %v236, %v306
  %s310 = scalar_lea.vmem %s1, 12
  %v311 = vld [vmem:[%s310] sm:$0x3]
  %312 = vrot.lane.b32.xlu0 %v221, 32
  %v313 = vpop.permute.xlu0 %312
  %v314 = vsel %vm26, %v313, 0
  %316 = vmatprep.subr.mxu0 0.0
  %317 = vmatpush1.msra.mxu0 0.0
  %318 = vmatprep.subr.mxu0 0.0
  %319 = vmatpush1.msra.mxu0 0.0
  %320 = vmatprep.subr.mxu0 0.0
  %321 = vmatpush1.msra.mxu0 0.0
  %322 = vmatprep.subr.mxu0 0.0
  %323 = vmatpush1.msra.mxu0 0.0
  %324 = vmatprep.subr.mxu0 0.0
  %325 = vmatpush1.msra.mxu0 0.0
  %326 = vmatprep.subr.mxu0 0.0
  %327 = vmatpush1.msra.mxu0 0.0
  %328 = vmatprep.subr.mxu0 0.0
  %329 = vmatpush1.msra.mxu0 0.0
  %330 = vmatprep.subr.mxu0 0.0
  %331 = vmatpush1.msra.mxu0 0.0
  %332 = vmatprep.subr.mxu0 0.0
  %333 = vmatpush1.msra.mxu0 0.0
  %334 = vmatprep.subr.mxu0 0.0
  %335 = vmatpush1.msra.mxu0 0.0
  %336 = vmatprep.subr.mxu0 0.0
  %337 = vmatpush1.msra.mxu0 0.0
  %338 = vmatprep.subr.mxu0 0.0
  %339 = vmatpush1.msra.mxu0 0.0
  %340 = vmatprep.subr.mxu0 0.0
  %341 = vmatpush1.msra.mxu0 %v24
  %342 = vmatprep.subr.mxu0 0.0
  %343 = vmatpush1.msra.mxu0 %v23
  %344 = vmatprep.subr.mxu0 0.0
  %345 = vmatpush1.msra.mxu0 %v22
  %346 = vmatprep.subr.mxu0 0.0
  %347 = vmatpush1.msra.mxu0 %v21
  %348 = vmatprep.subr.mxu0 0.0
  %349 = vmatpush2.msra.mxu0 0.0
  %350 = vmatprep.subr.mxu0 0.0
  %351 = vmatpush2.msra.mxu0 0.0
  %352 = vmatprep.subr.mxu0 0.0
  %353 = vmatpush2.msra.mxu0 0.0
  %354 = vmatprep.subr.mxu0 0.0
  %355 = vmatpush2.msra.mxu0 0.0
  %356 = vmatprep.subr.mxu0 0.0
  %357 = vmatpush2.msra.mxu0 0.0
  %358 = vmatprep.subr.mxu0 0.0
  %359 = vmatpush2.msra.mxu0 0.0
  %360 = vmatprep.subr.mxu0 0.0
  %361 = vmatpush2.msra.mxu0 0.0
  %362 = vmatprep.subr.mxu0 0.0
  %363 = vmatpush2.msra.mxu0 0.0
  %364 = vmatprep.subr.mxu0 0.0
  %365 = vmatpush2.msra.mxu0 0.0
  %366 = vmatprep.subr.mxu0 0.0
  %367 = vmatpush2.msra.mxu0 0.0
  %368 = vmatprep.subr.mxu0 0.0
  %369 = vmatpush2.msra.mxu0 0.0
  %370 = vmatprep.subr.mxu0 0.0
  %371 = vmatpush2.msra.mxu0 0.0
  %372 = vmatprep.subr.mxu0 0.0
  %373 = vmatpush2.msra.mxu0 0.0
  %374 = vmatprep.subr.mxu0 0.0
  %375 = vmatpush2.msra.mxu0 0.0
  %376 = vmatprep.subr.mxu0 0.0
  %377 = vmatpush2.msra.mxu0 0.0
  %378 = vmatprep.subr.mxu0 0.0
  %379 = vmatpush2.msra.mxu0 0.0
  %380 = vmatprep.mubr.f32.mxu0 0.0
  %381 = vmatmul.mubr.f32.gmra.mxu0 %v314
  %v382 = vpop.f32.mrf.mxu0
  %v383 = vadd.f32 0.0, %v382
  %v384 = vpop.f32.mrf.mxu0
  %385 = vdwg.mxu0
  %v386 = vadd.f32 %v311, %v383
  %v387 = vxor.u32 %v309, 2147483648
  %v388 = vmul.f32 %v387, 1.442695
  %v389 = vpow.pop %v388
  %v390 = vadd.f32 %v389, 1.0
  %v391 = vrcp.pop %v390
  %v392 = vmul.f32 1.0, %v391
  %v393 = vtanh.pop %v309
  %v394 = vmul.f32 %v392, %v191
  %396 = vrot.lane.b32.xlu0 %v393, 64
  %v397 = vpop.permute.xlu0 %396
  %v399 = vmul.f32 %v392, %v397
  %401 = vrot.lane.b32.xlu0 %v399, 32
  %v402 = vpop.permute.xlu0 %401
  %v404 = vadd.f32 %v394, %v402
  %v405 = vtanh.pop %v404
  %407 = vrot.lane.b32.xlu0 %v405, 64
  %v408 = vpop.permute.xlu0 %407
  %v410 = vmul.f32 %v392, %v408
  %v411 = vxor.u32 %v386, 2147483648
  %v412 = vmul.f32 %v411, 1.442695
  %v413 = vpow.pop %v412
  %v414 = vadd.f32 %v413, 1.0
  %v415 = vrcp.pop %v414
  %v416 = vmul.f32 1.0, %v415
  %v417 = vtanh.pop %v386
  %v418 = vmul.f32 %v416, %v215
  %420 = vrot.lane.b32.xlu0 %v417, 64
  %v421 = vpop.permute.xlu0 %420
  %v423 = vmul.f32 %v416, %v421
  %425 = vrot.lane.b32.xlu0 %v423, 32
  %v426 = vpop.permute.xlu0 %425
  %v428 = vadd.f32 %v418, %v426
  %v429 = vtanh.pop %v428
  %431 = vrot.lane.b32.xlu0 %v429, 64
  %v432 = vpop.permute.xlu0 %431
  %v434 = vmul.f32 %v416, %v432
  %436 = vrot.lane.b32.xlu0 %v410, 32
  %v437 = vpop.permute.xlu0 %436
  %s439 = scalar_lea.vmem %s4, 2
  %440 = vst.msk [vmem:[%s439] sm:$0x3] %vm226, %v437
  %442 = vrot.lane.b32.xlu0 %v434, 64
  %v443 = vpop.permute.xlu0 %442
  %s445 = scalar_lea.vmem %s4, 12
  %446 = vst.msk [vmem:[%s445] sm:$0x3] %vm233, %v443
  %s447 = scalar_lea.vmem %s0, 4
  %v448 = vld [vmem:[%s447] sm:$0x3]
  %v449 = vsel %vm26, %v437, 0
  %451 = vmatprep.subr.mxu0 0.0
  %452 = vmatpush1.msra.mxu0 0.0
  %453 = vmatprep.subr.mxu0 0.0
  %454 = vmatpush1.msra.mxu0 0.0
  %455 = vmatprep.subr.mxu0 0.0
  %456 = vmatpush1.msra.mxu0 0.0
  %457 = vmatprep.subr.mxu0 0.0
  %458 = vmatpush1.msra.mxu0 0.0
  %459 = vmatprep.subr.mxu0 0.0
  %460 = vmatpush1.msra.mxu0 0.0
  %461 = vmatprep.subr.mxu0 0.0
  %462 = vmatpush1.msra.mxu0 0.0
  %463 = vmatprep.subr.mxu0 0.0
  %464 = vmatpush1.msra.mxu0 0.0
  %465 = vmatprep.subr.mxu0 0.0
  %466 = vmatpush1.msra.mxu0 0.0
  %467 = vmatprep.subr.mxu0 0.0
  %468 = vmatpush1.msra.mxu0 0.0
  %469 = vmatprep.subr.mxu0 0.0
  %470 = vmatpush1.msra.mxu0 0.0
  %471 = vmatprep.subr.mxu0 0.0
  %472 = vmatpush1.msra.mxu0 0.0
  %473 = vmatprep.subr.mxu0 0.0
  %474 = vmatpush1.msra.mxu0 0.0
  %475 = vmatprep.subr.mxu0 0.0
  %476 = vmatpush1.msra.mxu0 %v20
  %477 = vmatprep.subr.mxu0 0.0
  %478 = vmatpush1.msra.mxu0 %v19
  %479 = vmatprep.subr.mxu0 0.0
  %480 = vmatpush1.msra.mxu0 %v18
  %481 = vmatprep.subr.mxu0 0.0
  %482 = vmatpush1.msra.mxu0 %v17
  %483 = vmatprep.subr.mxu0 0.0
  %484 = vmatpush2.msra.mxu0 0.0
  %485 = vmatprep.subr.mxu0 0.0
  %486 = vmatpush2.msra.mxu0 0.0
  %487 = vmatprep.subr.mxu0 0.0
  %488 = vmatpush2.msra.mxu0 0.0
  %489 = vmatprep.subr.mxu0 0.0
  %490 = vmatpush2.msra.mxu0 0.0
  %491 = vmatprep.subr.mxu0 0.0
  %492 = vmatpush2.msra.mxu0 0.0
  %493 = vmatprep.subr.mxu0 0.0
  %494 = vmatpush2.msra.mxu0 0.0
  %495 = vmatprep.subr.mxu0 0.0
  %496 = vmatpush2.msra.mxu0 0.0
  %497 = vmatprep.subr.mxu0 0.0
  %498 = vmatpush2.msra.mxu0 0.0
  %499 = vmatprep.subr.mxu0 0.0
  %500 = vmatpush2.msra.mxu0 0.0
  %501 = vmatprep.subr.mxu0 0.0
  %502 = vmatpush2.msra.mxu0 0.0
  %503 = vmatprep.subr.mxu0 0.0
  %504 = vmatpush2.msra.mxu0 0.0
  %505 = vmatprep.subr.mxu0 0.0
  %506 = vmatpush2.msra.mxu0 0.0
  %507 = vmatprep.subr.mxu0 0.0
  %508 = vmatpush2.msra.mxu0 0.0
  %509 = vmatprep.subr.mxu0 0.0
  %510 = vmatpush2.msra.mxu0 0.0
  %511 = vmatprep.subr.mxu0 0.0
  %512 = vmatpush2.msra.mxu0 0.0
  %513 = vmatprep.subr.mxu0 0.0
  %514 = vmatpush2.msra.mxu0 0.0
  %515 = vmatprep.mubr.f32.mxu0 0.0
  %516 = vmatmul.mubr.f32.gmra.mxu0 %v449
  %v517 = vpop.f32.mrf.mxu0
  %v518 = vadd.f32 0.0, %v517
  %v519 = vpop.f32.mrf.mxu0
  %520 = vdwg.mxu0
  %v521 = vadd.f32 %v448, %v518
  %s522 = scalar_lea.vmem %s1, 10
  %v523 = vld [vmem:[%s522] sm:$0x3]
  %524 = vrot.lane.b32.xlu0 %v434, 32
  %v525 = vpop.permute.xlu0 %524
  %v526 = vsel %vm26, %v525, 0
  %528 = vmatprep.subr.mxu0 0.0
  %529 = vmatpush1.msra.mxu0 0.0
  %530 = vmatprep.subr.mxu0 0.0
  %531 = vmatpush1.msra.mxu0 0.0
  %532 = vmatprep.subr.mxu0 0.0
  %533 = vmatpush1.msra.mxu0 0.0
  %534 = vmatprep.subr.mxu0 0.0
  %535 = vmatpush1.msra.mxu0 0.0
  %536 = vmatprep.subr.mxu0 0.0
  %537 = vmatpush1.msra.mxu0 0.0
  %538 = vmatprep.subr.mxu0 0.0
  %539 = vmatpush1.msra.mxu0 0.0
  %540 = vmatprep.subr.mxu0 0.0
  %541 = vmatpush1.msra.mxu0 0.0
  %542 = vmatprep.subr.mxu0 0.0
  %543 = vmatpush1.msra.mxu0 0.0
  %544 = vmatprep.subr.mxu0 0.0
  %545 = vmatpush1.msra.mxu0 0.0
  %546 = vmatprep.subr.mxu0 0.0
  %547 = vmatpush1.msra.mxu0 0.0
  %548 = vmatprep.subr.mxu0 0.0
  %549 = vmatpush1.msra.mxu0 0.0
  %550 = vmatprep.subr.mxu0 0.0
  %551 = vmatpush1.msra.mxu0 0.0
  %552 = vmatprep.subr.mxu0 0.0
  %553 = vmatpush1.msra.mxu0 %v24
  %554 = vmatprep.subr.mxu0 0.0
  %555 = vmatpush1.msra.mxu0 %v23
  %556 = vmatprep.subr.mxu0 0.0
  %557 = vmatpush1.msra.mxu0 %v22
  %558 = vmatprep.subr.mxu0 0.0
  %559 = vmatpush1.msra.mxu0 %v21
  %560 = vmatprep.subr.mxu0 0.0
  %561 = vmatpush2.msra.mxu0 0.0
  %562 = vmatprep.subr.mxu0 0.0
  %563 = vmatpush2.msra.mxu0 0.0
  %564 = vmatprep.subr.mxu0 0.0
  %565 = vmatpush2.msra.mxu0 0.0
  %566 = vmatprep.subr.mxu0 0.0
  %567 = vmatpush2.msra.mxu0 0.0
  %568 = vmatprep.subr.mxu0 0.0
  %569 = vmatpush2.msra.mxu0 0.0
  %570 = vmatprep.subr.mxu0 0.0
  %571 = vmatpush2.msra.mxu0 0.0
  %572 = vmatprep.subr.mxu0 0.0
  %573 = vmatpush2.msra.mxu0 0.0
  %574 = vmatprep.subr.mxu0 0.0
  %575 = vmatpush2.msra.mxu0 0.0
  %576 = vmatprep.subr.mxu0 0.0
  %577 = vmatpush2.msra.mxu0 0.0
  %578 = vmatprep.subr.mxu0 0.0
  %579 = vmatpush2.msra.mxu0 0.0
  %580 = vmatprep.subr.mxu0 0.0
  %581 = vmatpush2.msra.mxu0 0.0
  %582 = vmatprep.subr.mxu0 0.0
  %583 = vmatpush2.msra.mxu0 0.0
  %584 = vmatprep.subr.mxu0 0.0
  %585 = vmatpush2.msra.mxu0 0.0
  %586 = vmatprep.subr.mxu0 0.0
  %587 = vmatpush2.msra.mxu0 0.0
  %588 = vmatprep.subr.mxu0 0.0
  %589 = vmatpush2.msra.mxu0 0.0
  %590 = vmatprep.subr.mxu0 0.0
  %591 = vmatpush2.msra.mxu0 0.0
  %592 = vmatprep.mubr.f32.mxu0 0.0
  %593 = vmatmul.mubr.f32.gmra.mxu0 %v526
  %v594 = vpop.f32.mrf.mxu0
  %v595 = vadd.f32 0.0, %v594
  %v596 = vpop.f32.mrf.mxu0
  %597 = vdwg.mxu0
  %v598 = vadd.f32 %v523, %v595
  %v599 = vxor.u32 %v521, 2147483648
  %v600 = vmul.f32 %v599, 1.442695
  %v601 = vpow.pop %v600
  %v602 = vadd.f32 %v601, 1.0
  %v603 = vrcp.pop %v602
  %v604 = vmul.f32 1.0, %v603
  %v605 = vtanh.pop %v521
  %v606 = vmul.f32 %v604, %v404
  %608 = vrot.lane.b32.xlu0 %v605, 64
  %v609 = vpop.permute.xlu0 %608
  %v611 = vmul.f32 %v604, %v609
  %613 = vrot.lane.b32.xlu0 %v611, 32
  %v614 = vpop.permute.xlu0 %613
  %v616 = vadd.f32 %v606, %v614
  %v617 = vtanh.pop %v616
  %619 = vrot.lane.b32.xlu0 %v617, 64
  %v620 = vpop.permute.xlu0 %619
  %v622 = vmul.f32 %v604, %v620
  %v623 = vxor.u32 %v598, 2147483648
  %v624 = vmul.f32 %v623, 1.442695
  %v625 = vpow.pop %v624
  %v626 = vadd.f32 %v625, 1.0
  %v627 = vrcp.pop %v626
  %v628 = vmul.f32 1.0, %v627
  %v629 = vtanh.pop %v598
  %v630 = vmul.f32 %v628, %v428
  %632 = vrot.lane.b32.xlu0 %v629, 64
  %v633 = vpop.permute.xlu0 %632
  %v635 = vmul.f32 %v628, %v633
  %637 = vrot.lane.b32.xlu0 %v635, 32
  %v638 = vpop.permute.xlu0 %637
  %v640 = vadd.f32 %v630, %v638
  %v641 = vtanh.pop %v640
  %643 = vrot.lane.b32.xlu0 %v641, 64
  %v644 = vpop.permute.xlu0 %643
  %v646 = vmul.f32 %v628, %v644
  %648 = vrot.lane.b32.xlu0 %v622, 32
  %v649 = vpop.permute.xlu0 %648
  %s651 = scalar_lea.vmem %s4, 4
  %652 = vst.msk [vmem:[%s651] sm:$0x3] %vm226, %v649
  %654 = vrot.lane.b32.xlu0 %v646, 64
  %v655 = vpop.permute.xlu0 %654
  %s657 = scalar_lea.vmem %s4, 10
  %658 = vst.msk [vmem:[%s657] sm:$0x3] %vm233, %v655
  %s659 = scalar_lea.vmem %s0, 6
  %v660 = vld [vmem:[%s659] sm:$0x3]
  %v661 = vsel %vm26, %v649, 0
  %663 = vmatprep.subr.mxu0 0.0
  %664 = vmatpush1.msra.mxu0 0.0
  %665 = vmatprep.subr.mxu0 0.0
  %666 = vmatpush1.msra.mxu0 0.0
  %667 = vmatprep.subr.mxu0 0.0
  %668 = vmatpush1.msra.mxu0 0.0
  %669 = vmatprep.subr.mxu0 0.0
  %670 = vmatpush1.msra.mxu0 0.0
  %671 = vmatprep.subr.mxu0 0.0
  %672 = vmatpush1.msra.mxu0 0.0
  %673 = vmatprep.subr.mxu0 0.0
  %674 = vmatpush1.msra.mxu0 0.0
  %675 = vmatprep.subr.mxu0 0.0
  %676 = vmatpush1.msra.mxu0 0.0
  %677 = vmatprep.subr.mxu0 0.0
  %678 = vmatpush1.msra.mxu0 0.0
  %679 = vmatprep.subr.mxu0 0.0
  %680 = vmatpush1.msra.mxu0 0.0
  %681 = vmatprep.subr.mxu0 0.0
  %682 = vmatpush1.msra.mxu0 0.0
  %683 = vmatprep.subr.mxu0 0.0
  %684 = vmatpush1.msra.mxu0 0.0
  %685 = vmatprep.subr.mxu0 0.0
  %686 = vmatpush1.msra.mxu0 0.0
  %687 = vmatprep.subr.mxu0 0.0
  %688 = vmatpush1.msra.mxu0 %v20
  %689 = vmatprep.subr.mxu0 0.0
  %690 = vmatpush1.msra.mxu0 %v19
  %691 = vmatprep.subr.mxu0 0.0
  %692 = vmatpush1.msra.mxu0 %v18
  %693 = vmatprep.subr.mxu0 0.0
  %694 = vmatpush1.msra.mxu0 %v17
  %695 = vmatprep.subr.mxu0 0.0
  %696 = vmatpush2.msra.mxu0 0.0
  %697 = vmatprep.subr.mxu0 0.0
  %698 = vmatpush2.msra.mxu0 0.0
  %699 = vmatprep.subr.mxu0 0.0
  %700 = vmatpush2.msra.mxu0 0.0
  %701 = vmatprep.subr.mxu0 0.0
  %702 = vmatpush2.msra.mxu0 0.0
  %703 = vmatprep.subr.mxu0 0.0
  %704 = vmatpush2.msra.mxu0 0.0
  %705 = vmatprep.subr.mxu0 0.0
  %706 = vmatpush2.msra.mxu0 0.0
  %707 = vmatprep.subr.mxu0 0.0
  %708 = vmatpush2.msra.mxu0 0.0
  %709 = vmatprep.subr.mxu0 0.0
  %710 = vmatpush2.msra.mxu0 0.0
  %711 = vmatprep.subr.mxu0 0.0
  %712 = vmatpush2.msra.mxu0 0.0
  %713 = vmatprep.subr.mxu0 0.0
  %714 = vmatpush2.msra.mxu0 0.0
  %715 = vmatprep.subr.mxu0 0.0
  %716 = vmatpush2.msra.mxu0 0.0
  %717 = vmatprep.subr.mxu0 0.0
  %718 = vmatpush2.msra.mxu0 0.0
  %719 = vmatprep.subr.mxu0 0.0
  %720 = vmatpush2.msra.mxu0 0.0
  %721 = vmatprep.subr.mxu0 0.0
  %722 = vmatpush2.msra.mxu0 0.0
  %723 = vmatprep.subr.mxu0 0.0
  %724 = vmatpush2.msra.mxu0 0.0
  %725 = vmatprep.subr.mxu0 0.0
  %726 = vmatpush2.msra.mxu0 0.0
  %727 = vmatprep.mubr.f32.mxu0 0.0
  %728 = vmatmul.mubr.f32.gmra.mxu0 %v661
  %v729 = vpop.f32.mrf.mxu0
  %v730 = vadd.f32 0.0, %v729
  %v731 = vpop.f32.mrf.mxu0
  %732 = vdwg.mxu0
  %v733 = vadd.f32 %v660, %v730
  %s734 = scalar_lea.vmem %s1, 8
  %v735 = vld [vmem:[%s734] sm:$0x3]
  %736 = vrot.lane.b32.xlu0 %v646, 32
  %v737 = vpop.permute.xlu0 %736
  %v738 = vsel %vm26, %v737, 0
  %740 = vmatprep.subr.mxu0 0.0
  %741 = vmatpush1.msra.mxu0 0.0
  %742 = vmatprep.subr.mxu0 0.0
  %743 = vmatpush1.msra.mxu0 0.0
  %744 = vmatprep.subr.mxu0 0.0
  %745 = vmatpush1.msra.mxu0 0.0
  %746 = vmatprep.subr.mxu0 0.0
  %747 = vmatpush1.msra.mxu0 0.0
  %748 = vmatprep.subr.mxu0 0.0
  %749 = vmatpush1.msra.mxu0 0.0
  %750 = vmatprep.subr.mxu0 0.0
  %751 = vmatpush1.msra.mxu0 0.0
  %752 = vmatprep.subr.mxu0 0.0
  %753 = vmatpush1.msra.mxu0 0.0
  %754 = vmatprep.subr.mxu0 0.0
  %755 = vmatpush1.msra.mxu0 0.0
  %756 = vmatprep.subr.mxu0 0.0
  %757 = vmatpush1.msra.mxu0 0.0
  %758 = vmatprep.subr.mxu0 0.0
  %759 = vmatpush1.msra.mxu0 0.0
  %760 = vmatprep.subr.mxu0 0.0
  %761 = vmatpush1.msra.mxu0 0.0
  %762 = vmatprep.subr.mxu0 0.0
  %763 = vmatpush1.msra.mxu0 0.0
  %764 = vmatprep.subr.mxu0 0.0
  %765 = vmatpush1.msra.mxu0 %v24
  %766 = vmatprep.subr.mxu0 0.0
  %767 = vmatpush1.msra.mxu0 %v23
  %768 = vmatprep.subr.mxu0 0.0
  %769 = vmatpush1.msra.mxu0 %v22
  %770 = vmatprep.subr.mxu0 0.0
  %771 = vmatpush1.msra.mxu0 %v21
  %772 = vmatprep.subr.mxu0 0.0
  %773 = vmatpush2.msra.mxu0 0.0
  %774 = vmatprep.subr.mxu0 0.0
  %775 = vmatpush2.msra.mxu0 0.0
  %776 = vmatprep.subr.mxu0 0.0
  %777 = vmatpush2.msra.mxu0 0.0
  %778 = vmatprep.subr.mxu0 0.0
  %779 = vmatpush2.msra.mxu0 0.0
  %780 = vmatprep.subr.mxu0 0.0
  %781 = vmatpush2.msra.mxu0 0.0
  %782 = vmatprep.subr.mxu0 0.0
  %783 = vmatpush2.msra.mxu0 0.0
  %784 = vmatprep.subr.mxu0 0.0
  %785 = vmatpush2.msra.mxu0 0.0
  %786 = vmatprep.subr.mxu0 0.0
  %787 = vmatpush2.msra.mxu0 0.0
  %788 = vmatprep.subr.mxu0 0.0
  %789 = vmatpush2.msra.mxu0 0.0
  %790 = vmatprep.subr.mxu0 0.0
  %791 = vmatpush2.msra.mxu0 0.0
  %792 = vmatprep.subr.mxu0 0.0
  %793 = vmatpush2.msra.mxu0 0.0
  %794 = vmatprep.subr.mxu0 0.0
  %795 = vmatpush2.msra.mxu0 0.0
  %796 = vmatprep.subr.mxu0 0.0
  %797 = vmatpush2.msra.mxu0 0.0
  %798 = vmatprep.subr.mxu0 0.0
  %799 = vmatpush2.msra.mxu0 0.0
  %800 = vmatprep.subr.mxu0 0.0
  %801 = vmatpush2.msra.mxu0 0.0
  %802 = vmatprep.subr.mxu0 0.0
  %803 = vmatpush2.msra.mxu0 0.0
  %804 = vmatprep.mubr.f32.mxu0 0.0
  %805 = vmatmul.mubr.f32.gmra.mxu0 %v738
  %v806 = vpop.f32.mrf.mxu0
  %v807 = vadd.f32 0.0, %v806
  %v808 = vpop.f32.mrf.mxu0
  %809 = vdwg.mxu0
  %v810 = vadd.f32 %v735, %v807
  %v811 = vxor.u32 %v733, 2147483648
  %v812 = vmul.f32 %v811, 1.442695
  %v813 = vpow.pop %v812
  %v814 = vadd.f32 %v813, 1.0
  %v815 = vrcp.pop %v814
  %v816 = vmul.f32 1.0, %v815
  %v817 = vtanh.pop %v733
  %v818 = vmul.f32 %v816, %v616
  %820 = vrot.lane.b32.xlu0 %v817, 64
  %v821 = vpop.permute.xlu0 %820
  %v823 = vmul.f32 %v816, %v821
  %825 = vrot.lane.b32.xlu0 %v823, 32
  %v826 = vpop.permute.xlu0 %825
  %v828 = vadd.f32 %v818, %v826
  %v829 = vtanh.pop %v828
  %831 = vrot.lane.b32.xlu0 %v829, 64
  %v832 = vpop.permute.xlu0 %831
  %v834 = vmul.f32 %v816, %v832
  %v835 = vxor.u32 %v810, 2147483648
  %v836 = vmul.f32 %v835, 1.442695
  %v837 = vpow.pop %v836
  %v838 = vadd.f32 %v837, 1.0
  %v839 = vrcp.pop %v838
  %v840 = vmul.f32 1.0, %v839
  %v841 = vtanh.pop %v810
  %v842 = vmul.f32 %v840, %v640
  %844 = vrot.lane.b32.xlu0 %v841, 64
  %v845 = vpop.permute.xlu0 %844
  %v847 = vmul.f32 %v840, %v845
  %849 = vrot.lane.b32.xlu0 %v847, 32
  %v850 = vpop.permute.xlu0 %849
  %v852 = vadd.f32 %v842, %v850
  %v853 = vtanh.pop %v852
  %855 = vrot.lane.b32.xlu0 %v853, 64
  %v856 = vpop.permute.xlu0 %855
  %v858 = vmul.f32 %v840, %v856
  %860 = vrot.lane.b32.xlu0 %v834, 32
  %v861 = vpop.permute.xlu0 %860
  %s863 = scalar_lea.vmem %s4, 6
  %864 = vst.msk [vmem:[%s863] sm:$0x3] %vm226, %v861
  %866 = vrot.lane.b32.xlu0 %v858, 64
  %v867 = vpop.permute.xlu0 %866
  %s869 = scalar_lea.vmem %s4, 8
  %870 = vst.msk [vmem:[%s869] sm:$0x3] %vm233, %v867
  %s871 = scalar_lea.vmem %s0, 8
  %v872 = vld [vmem:[%s871] sm:$0x3]
  %v873 = vsel %vm26, %v861, 0
  %875 = vmatprep.subr.mxu0 0.0
  %876 = vmatpush1.msra.mxu0 0.0
  %877 = vmatprep.subr.mxu0 0.0
  %878 = vmatpush1.msra.mxu0 0.0
  %879 = vmatprep.subr.mxu0 0.0
  %880 = vmatpush1.msra.mxu0 0.0
  %881 = vmatprep.subr.mxu0 0.0
  %882 = vmatpush1.msra.mxu0 0.0
  %883 = vmatprep.subr.mxu0 0.0
  %884 = vmatpush1.msra.mxu0 0.0
  %885 = vmatprep.subr.mxu0 0.0
  %886 = vmatpush1.msra.mxu0 0.0
  %887 = vmatprep.subr.mxu0 0.0
  %888 = vmatpush1.msra.mxu0 0.0
  %889 = vmatprep.subr.mxu0 0.0
  %890 = vmatpush1.msra.mxu0 0.0
  %891 = vmatprep.subr.mxu0 0.0
  %892 = vmatpush1.msra.mxu0 0.0
  %893 = vmatprep.subr.mxu0 0.0
  %894 = vmatpush1.msra.mxu0 0.0
  %895 = vmatprep.subr.mxu0 0.0
  %896 = vmatpush1.msra.mxu0 0.0
  %897 = vmatprep.subr.mxu0 0.0
  %898 = vmatpush1.msra.mxu0 0.0
  %899 = vmatprep.subr.mxu0 0.0
  %900 = vmatpush1.msra.mxu0 %v20
  %901 = vmatprep.subr.mxu0 0.0
  %902 = vmatpush1.msra.mxu0 %v19
  %903 = vmatprep.subr.mxu0 0.0
  %904 = vmatpush1.msra.mxu0 %v18
  %905 = vmatprep.subr.mxu0 0.0
  %906 = vmatpush1.msra.mxu0 %v17
  %907 = vmatprep.subr.mxu0 0.0
  %908 = vmatpush2.msra.mxu0 0.0
  %909 = vmatprep.subr.mxu0 0.0
  %910 = vmatpush2.msra.mxu0 0.0
  %911 = vmatprep.subr.mxu0 0.0
  %912 = vmatpush2.msra.mxu0 0.0
  %913 = vmatprep.subr.mxu0 0.0
  %914 = vmatpush2.msra.mxu0 0.0
  %915 = vmatprep.subr.mxu0 0.0
  %916 = vmatpush2.msra.mxu0 0.0
  %917 = vmatprep.subr.mxu0 0.0
  %918 = vmatpush2.msra.mxu0 0.0
  %919 = vmatprep.subr.mxu0 0.0
  %920 = vmatpush2.msra.mxu0 0.0
  %921 = vmatprep.subr.mxu0 0.0
  %922 = vmatpush2.msra.mxu0 0.0
  %923 = vmatprep.subr.mxu0 0.0
  %924 = vmatpush2.msra.mxu0 0.0
  %925 = vmatprep.subr.mxu0 0.0
  %926 = vmatpush2.msra.mxu0 0.0
  %927 = vmatprep.subr.mxu0 0.0
  %928 = vmatpush2.msra.mxu0 0.0
  %929 = vmatprep.subr.mxu0 0.0
  %930 = vmatpush2.msra.mxu0 0.0
  %931 = vmatprep.subr.mxu0 0.0
  %932 = vmatpush2.msra.mxu0 0.0
  %933 = vmatprep.subr.mxu0 0.0
  %934 = vmatpush2.msra.mxu0 0.0
  %935 = vmatprep.subr.mxu0 0.0
  %936 = vmatpush2.msra.mxu0 0.0
  %937 = vmatprep.subr.mxu0 0.0
  %938 = vmatpush2.msra.mxu0 0.0
  %939 = vmatprep.mubr.f32.mxu0 0.0
  %940 = vmatmul.mubr.f32.gmra.mxu0 %v873
  %v941 = vpop.f32.mrf.mxu0
  %v942 = vadd.f32 0.0, %v941
  %v943 = vpop.f32.mrf.mxu0
  %944 = vdwg.mxu0
  %v945 = vadd.f32 %v872, %v942
  %s946 = scalar_lea.vmem %s1, 6
  %v947 = vld [vmem:[%s946] sm:$0x3]
  %948 = vrot.lane.b32.xlu0 %v858, 32
  %v949 = vpop.permute.xlu0 %948
  %v950 = vsel %vm26, %v949, 0
  %952 = vmatprep.subr.mxu0 0.0
  %953 = vmatpush1.msra.mxu0 0.0
  %954 = vmatprep.subr.mxu0 0.0
  %955 = vmatpush1.msra.mxu0 0.0
  %956 = vmatprep.subr.mxu0 0.0
  %957 = vmatpush1.msra.mxu0 0.0
  %958 = vmatprep.subr.mxu0 0.0
  %959 = vmatpush1.msra.mxu0 0.0
  %960 = vmatprep.subr.mxu0 0.0
  %961 = vmatpush1.msra.mxu0 0.0
  %962 = vmatprep.subr.mxu0 0.0
  %963 = vmatpush1.msra.mxu0 0.0
  %964 = vmatprep.subr.mxu0 0.0
  %965 = vmatpush1.msra.mxu0 0.0
  %966 = vmatprep.subr.mxu0 0.0
  %967 = vmatpush1.msra.mxu0 0.0
  %968 = vmatprep.subr.mxu0 0.0
  %969 = vmatpush1.msra.mxu0 0.0
  %970 = vmatprep.subr.mxu0 0.0
  %971 = vmatpush1.msra.mxu0 0.0
  %972 = vmatprep.subr.mxu0 0.0
  %973 = vmatpush1.msra.mxu0 0.0
  %974 = vmatprep.subr.mxu0 0.0
  %975 = vmatpush1.msra.mxu0 0.0
  %976 = vmatprep.subr.mxu0 0.0
  %977 = vmatpush1.msra.mxu0 %v24
  %978 = vmatprep.subr.mxu0 0.0
  %979 = vmatpush1.msra.mxu0 %v23
  %980 = vmatprep.subr.mxu0 0.0
  %981 = vmatpush1.msra.mxu0 %v22
  %982 = vmatprep.subr.mxu0 0.0
  %983 = vmatpush1.msra.mxu0 %v21
  %984 = vmatprep.subr.mxu0 0.0
  %985 = vmatpush2.msra.mxu0 0.0
  %986 = vmatprep.subr.mxu0 0.0
  %987 = vmatpush2.msra.mxu0 0.0
  %988 = vmatprep.subr.mxu0 0.0
  %989 = vmatpush2.msra.mxu0 0.0
  %990 = vmatprep.subr.mxu0 0.0
  %991 = vmatpush2.msra.mxu0 0.0
  %992 = vmatprep.subr.mxu0 0.0
  %993 = vmatpush2.msra.mxu0 0.0
  %994 = vmatprep.subr.mxu0 0.0
  %995 = vmatpush2.msra.mxu0 0.0
  %996 = vmatprep.subr.mxu0 0.0
  %997 = vmatpush2.msra.mxu0 0.0
  %998 = vmatprep.subr.mxu0 0.0
  %999 = vmatpush2.msra.mxu0 0.0
  %1000 = vmatprep.subr.mxu0 0.0
  %1001 = vmatpush2.msra.mxu0 0.0
  %1002 = vmatprep.subr.mxu0 0.0
  %1003 = vmatpush2.msra.mxu0 0.0
  %1004 = vmatprep.subr.mxu0 0.0
  %1005 = vmatpush2.msra.mxu0 0.0
  %1006 = vmatprep.subr.mxu0 0.0
  %1007 = vmatpush2.msra.mxu0 0.0
  %1008 = vmatprep.subr.mxu0 0.0
  %1009 = vmatpush2.msra.mxu0 0.0
  %1010 = vmatprep.subr.mxu0 0.0
  %1011 = vmatpush2.msra.mxu0 0.0
  %1012 = vmatprep.subr.mxu0 0.0
  %1013 = vmatpush2.msra.mxu0 0.0
  %1014 = vmatprep.subr.mxu0 0.0
  %1015 = vmatpush2.msra.mxu0 0.0
  %1016 = vmatprep.mubr.f32.mxu0 0.0
  %1017 = vmatmul.mubr.f32.gmra.mxu0 %v950
  %v1018 = vpop.f32.mrf.mxu0
  %v1019 = vadd.f32 0.0, %v1018
  %v1020 = vpop.f32.mrf.mxu0
  %1021 = vdwg.mxu0
  %v1022 = vadd.f32 %v947, %v1019
  %v1023 = vxor.u32 %v945, 2147483648
  %v1024 = vmul.f32 %v1023, 1.442695
  %v1025 = vpow.pop %v1024
  %v1026 = vadd.f32 %v1025, 1.0
  %v1027 = vrcp.pop %v1026
  %v1028 = vmul.f32 1.0, %v1027
  %v1029 = vtanh.pop %v945
  %v1030 = vmul.f32 %v1028, %v828
  %1032 = vrot.lane.b32.xlu0 %v1029, 64
  %v1033 = vpop.permute.xlu0 %1032
  %v1035 = vmul.f32 %v1028, %v1033
  %1037 = vrot.lane.b32.xlu0 %v1035, 32
  %v1038 = vpop.permute.xlu0 %1037
  %v1040 = vadd.f32 %v1030, %v1038
  %v1041 = vtanh.pop %v1040
  %1043 = vrot.lane.b32.xlu0 %v1041, 64
  %v1044 = vpop.permute.xlu0 %1043
  %v1046 = vmul.f32 %v1028, %v1044
  %v1047 = vxor.u32 %v1022, 2147483648
  %v1048 = vmul.f32 %v1047, 1.442695
  %v1049 = vpow.pop %v1048
  %v1050 = vadd.f32 %v1049, 1.0
  %v1051 = vrcp.pop %v1050
  %v1052 = vmul.f32 1.0, %v1051
  %v1053 = vtanh.pop %v1022
  %v1054 = vmul.f32 %v1052, %v852
  %1056 = vrot.lane.b32.xlu0 %v1053, 64
  %v1057 = vpop.permute.xlu0 %1056
  %v1059 = vmul.f32 %v1052, %v1057
  %1061 = vrot.lane.b32.xlu0 %v1059, 32
  %v1062 = vpop.permute.xlu0 %1061
  %v1064 = vadd.f32 %v1054, %v1062
  %v1065 = vtanh.pop %v1064
  %1067 = vrot.lane.b32.xlu0 %v1065, 64
  %v1068 = vpop.permute.xlu0 %1067
  %v1070 = vmul.f32 %v1052, %v1068
  %1072 = vrot.lane.b32.xlu0 %v1046, 32
  %v1073 = vpop.permute.xlu0 %1072
  %1075 = vst.msk [vmem:[%s869] sm:$0x3] %vm226, %v1073
  %1077 = vrot.lane.b32.xlu0 %v1070, 64
  %v1078 = vpop.permute.xlu0 %1077
  %1080 = vst.msk [vmem:[%s863] sm:$0x3] %vm233, %v1078
  %s1081 = scalar_lea.vmem %s0, 10
  %v1082 = vld [vmem:[%s1081] sm:$0x3]
  %v1083 = vsel %vm26, %v1073, 0
  %1085 = vmatprep.subr.mxu0 0.0
  %1086 = vmatpush1.msra.mxu0 0.0
  %1087 = vmatprep.subr.mxu0 0.0
  %1088 = vmatpush1.msra.mxu0 0.0
  %1089 = vmatprep.subr.mxu0 0.0
  %1090 = vmatpush1.msra.mxu0 0.0
  %1091 = vmatprep.subr.mxu0 0.0
  %1092 = vmatpush1.msra.mxu0 0.0
  %1093 = vmatprep.subr.mxu0 0.0
  %1094 = vmatpush1.msra.mxu0 0.0
  %1095 = vmatprep.subr.mxu0 0.0
  %1096 = vmatpush1.msra.mxu0 0.0
  %1097 = vmatprep.subr.mxu0 0.0
  %1098 = vmatpush1.msra.mxu0 0.0
  %1099 = vmatprep.subr.mxu0 0.0
  %1100 = vmatpush1.msra.mxu0 0.0
  %1101 = vmatprep.subr.mxu0 0.0
  %1102 = vmatpush1.msra.mxu0 0.0
  %1103 = vmatprep.subr.mxu0 0.0
  %1104 = vmatpush1.msra.mxu0 0.0
  %1105 = vmatprep.subr.mxu0 0.0
  %1106 = vmatpush1.msra.mxu0 0.0
  %1107 = vmatprep.subr.mxu0 0.0
  %1108 = vmatpush1.msra.mxu0 0.0
  %1109 = vmatprep.subr.mxu0 0.0
  %1110 = vmatpush1.msra.mxu0 %v20
  %1111 = vmatprep.subr.mxu0 0.0
  %1112 = vmatpush1.msra.mxu0 %v19
  %1113 = vmatprep.subr.mxu0 0.0
  %1114 = vmatpush1.msra.mxu0 %v18
  %1115 = vmatprep.subr.mxu0 0.0
  %1116 = vmatpush1.msra.mxu0 %v17
  %1117 = vmatprep.subr.mxu0 0.0
  %1118 = vmatpush2.msra.mxu0 0.0
  %1119 = vmatprep.subr.mxu0 0.0
  %1120 = vmatpush2.msra.mxu0 0.0
  %1121 = vmatprep.subr.mxu0 0.0
  %1122 = vmatpush2.msra.mxu0 0.0
  %1123 = vmatprep.subr.mxu0 0.0
  %1124 = vmatpush2.msra.mxu0 0.0
  %1125 = vmatprep.subr.mxu0 0.0
  %1126 = vmatpush2.msra.mxu0 0.0
  %1127 = vmatprep.subr.mxu0 0.0
  %1128 = vmatpush2.msra.mxu0 0.0
  %1129 = vmatprep.subr.mxu0 0.0
  %1130 = vmatpush2.msra.mxu0 0.0
  %1131 = vmatprep.subr.mxu0 0.0
  %1132 = vmatpush2.msra.mxu0 0.0
  %1133 = vmatprep.subr.mxu0 0.0
  %1134 = vmatpush2.msra.mxu0 0.0
  %1135 = vmatprep.subr.mxu0 0.0
  %1136 = vmatpush2.msra.mxu0 0.0
  %1137 = vmatprep.subr.mxu0 0.0
  %1138 = vmatpush2.msra.mxu0 0.0
  %1139 = vmatprep.subr.mxu0 0.0
  %1140 = vmatpush2.msra.mxu0 0.0
  %1141 = vmatprep.subr.mxu0 0.0
  %1142 = vmatpush2.msra.mxu0 0.0
  %1143 = vmatprep.subr.mxu0 0.0
  %1144 = vmatpush2.msra.mxu0 0.0
  %1145 = vmatprep.subr.mxu0 0.0
  %1146 = vmatpush2.msra.mxu0 0.0
  %1147 = vmatprep.subr.mxu0 0.0
  %1148 = vmatpush2.msra.mxu0 0.0
  %1149 = vmatprep.mubr.f32.mxu0 0.0
  %1150 = vmatmul.mubr.f32.gmra.mxu0 %v1083
  %v1151 = vpop.f32.mrf.mxu0
  %v1152 = vadd.f32 0.0, %v1151
  %v1153 = vpop.f32.mrf.mxu0
  %1154 = vdwg.mxu0
  %v1155 = vadd.f32 %v1082, %v1152
  %s1156 = scalar_lea.vmem %s1, 4
  %v1157 = vld [vmem:[%s1156] sm:$0x3]
  %1158 = vrot.lane.b32.xlu0 %v1070, 32
  %v1159 = vpop.permute.xlu0 %1158
  %v1160 = vsel %vm26, %v1159, 0
  %1162 = vmatprep.subr.mxu0 0.0
  %1163 = vmatpush1.msra.mxu0 0.0
  %1164 = vmatprep.subr.mxu0 0.0
  %1165 = vmatpush1.msra.mxu0 0.0
  %1166 = vmatprep.subr.mxu0 0.0
  %1167 = vmatpush1.msra.mxu0 0.0
  %1168 = vmatprep.subr.mxu0 0.0
  %1169 = vmatpush1.msra.mxu0 0.0
  %1170 = vmatprep.subr.mxu0 0.0
  %1171 = vmatpush1.msra.mxu0 0.0
  %1172 = vmatprep.subr.mxu0 0.0
  %1173 = vmatpush1.msra.mxu0 0.0
  %1174 = vmatprep.subr.mxu0 0.0
  %1175 = vmatpush1.msra.mxu0 0.0
  %1176 = vmatprep.subr.mxu0 0.0
  %1177 = vmatpush1.msra.mxu0 0.0
  %1178 = vmatprep.subr.mxu0 0.0
  %1179 = vmatpush1.msra.mxu0 0.0
  %1180 = vmatprep.subr.mxu0 0.0
  %1181 = vmatpush1.msra.mxu0 0.0
  %1182 = vmatprep.subr.mxu0 0.0
  %1183 = vmatpush1.msra.mxu0 0.0
  %1184 = vmatprep.subr.mxu0 0.0
  %1185 = vmatpush1.msra.mxu0 0.0
  %1186 = vmatprep.subr.mxu0 0.0
  %1187 = vmatpush1.msra.mxu0 %v24
  %1188 = vmatprep.subr.mxu0 0.0
  %1189 = vmatpush1.msra.mxu0 %v23
  %1190 = vmatprep.subr.mxu0 0.0
  %1191 = vmatpush1.msra.mxu0 %v22
  %1192 = vmatprep.subr.mxu0 0.0
  %1193 = vmatpush1.msra.mxu0 %v21
  %1194 = vmatprep.subr.mxu0 0.0
  %1195 = vmatpush2.msra.mxu0 0.0
  %1196 = vmatprep.subr.mxu0 0.0
  %1197 = vmatpush2.msra.mxu0 0.0
  %1198 = vmatprep.subr.mxu0 0.0
  %1199 = vmatpush2.msra.mxu0 0.0
  %1200 = vmatprep.subr.mxu0 0.0
  %1201 = vmatpush2.msra.mxu0 0.0
  %1202 = vmatprep.subr.mxu0 0.0
  %1203 = vmatpush2.msra.mxu0 0.0
  %1204 = vmatprep.subr.mxu0 0.0
  %1205 = vmatpush2.msra.mxu0 0.0
  %1206 = vmatprep.subr.mxu0 0.0
  %1207 = vmatpush2.msra.mxu0 0.0
  %1208 = vmatprep.subr.mxu0 0.0
  %1209 = vmatpush2.msra.mxu0 0.0
  %1210 = vmatprep.subr.mxu0 0.0
  %1211 = vmatpush2.msra.mxu0 0.0
  %1212 = vmatprep.subr.mxu0 0.0
  %1213 = vmatpush2.msra.mxu0 0.0
  %1214 = vmatprep.subr.mxu0 0.0
  %1215 = vmatpush2.msra.mxu0 0.0
  %1216 = vmatprep.subr.mxu0 0.0
  %1217 = vmatpush2.msra.mxu0 0.0
  %1218 = vmatprep.subr.mxu0 0.0
  %1219 = vmatpush2.msra.mxu0 0.0
  %1220 = vmatprep.subr.mxu0 0.0
  %1221 = vmatpush2.msra.mxu0 0.0
  %1222 = vmatprep.subr.mxu0 0.0
  %1223 = vmatpush2.msra.mxu0 0.0
  %1224 = vmatprep.subr.mxu0 0.0
  %1225 = vmatpush2.msra.mxu0 0.0
  %1226 = vmatprep.mubr.f32.mxu0 0.0
  %1227 = vmatmul.mubr.f32.gmra.mxu0 %v1160
  %v1228 = vpop.f32.mrf.mxu0
  %v1229 = vadd.f32 0.0, %v1228
  %v1230 = vpop.f32.mrf.mxu0
  %1231 = vdwg.mxu0
  %v1232 = vadd.f32 %v1157, %v1229
  %v1233 = vxor.u32 %v1155, 2147483648
  %v1234 = vmul.f32 %v1233, 1.442695
  %v1235 = vpow.pop %v1234
  %v1236 = vadd.f32 %v1235, 1.0
  %v1237 = vrcp.pop %v1236
  %v1238 = vmul.f32 1.0, %v1237
  %v1239 = vtanh.pop %v1155
  %v1240 = vmul.f32 %v1238, %v1040
  %1242 = vrot.lane.b32.xlu0 %v1239, 64
  %v1243 = vpop.permute.xlu0 %1242
  %v1245 = vmul.f32 %v1238, %v1243
  %1247 = vrot.lane.b32.xlu0 %v1245, 32
  %v1248 = vpop.permute.xlu0 %1247
  %v1250 = vadd.f32 %v1240, %v1248
  %v1251 = vtanh.pop %v1250
  %1253 = vrot.lane.b32.xlu0 %v1251, 64
  %v1254 = vpop.permute.xlu0 %1253
  %v1256 = vmul.f32 %v1238, %v1254
  %v1257 = vxor.u32 %v1232, 2147483648
  %v1258 = vmul.f32 %v1257, 1.442695
  %v1259 = vpow.pop %v1258
  %v1260 = vadd.f32 %v1259, 1.0
  %v1261 = vrcp.pop %v1260
  %v1262 = vmul.f32 1.0, %v1261
  %v1263 = vtanh.pop %v1232
  %v1264 = vmul.f32 %v1262, %v1064
  %1266 = vrot.lane.b32.xlu0 %v1263, 64
  %v1267 = vpop.permute.xlu0 %1266
  %v1269 = vmul.f32 %v1262, %v1267
  %1271 = vrot.lane.b32.xlu0 %v1269, 32
  %v1272 = vpop.permute.xlu0 %1271
  %v1274 = vadd.f32 %v1264, %v1272
  %v1275 = vtanh.pop %v1274
  %1277 = vrot.lane.b32.xlu0 %v1275, 64
  %v1278 = vpop.permute.xlu0 %1277
  %v1280 = vmul.f32 %v1262, %v1278
  %1282 = vrot.lane.b32.xlu0 %v1256, 32
  %v1283 = vpop.permute.xlu0 %1282
  %1285 = vst.msk [vmem:[%s657] sm:$0x3] %vm226, %v1283
  %1287 = vrot.lane.b32.xlu0 %v1280, 64
  %v1288 = vpop.permute.xlu0 %1287
  %1290 = vst.msk [vmem:[%s651] sm:$0x3] %vm233, %v1288
  %s1291 = scalar_lea.vmem %s0, 12
  %v1292 = vld [vmem:[%s1291] sm:$0x3]
  %v1293 = vsel %vm26, %v1283, 0
  %1295 = vmatprep.subr.mxu0 0.0
  %1296 = vmatpush1.msra.mxu0 0.0
  %1297 = vmatprep.subr.mxu0 0.0
  %1298 = vmatpush1.msra.mxu0 0.0
  %1299 = vmatprep.subr.mxu0 0.0
  %1300 = vmatpush1.msra.mxu0 0.0
  %1301 = vmatprep.subr.mxu0 0.0
  %1302 = vmatpush1.msra.mxu0 0.0
  %1303 = vmatprep.subr.mxu0 0.0
  %1304 = vmatpush1.msra.mxu0 0.0
  %1305 = vmatprep.subr.mxu0 0.0
  %1306 = vmatpush1.msra.mxu0 0.0
  %1307 = vmatprep.subr.mxu0 0.0
  %1308 = vmatpush1.msra.mxu0 0.0
  %1309 = vmatprep.subr.mxu0 0.0
  %1310 = vmatpush1.msra.mxu0 0.0
  %1311 = vmatprep.subr.mxu0 0.0
  %1312 = vmatpush1.msra.mxu0 0.0
  %1313 = vmatprep.subr.mxu0 0.0
  %1314 = vmatpush1.msra.mxu0 0.0
  %1315 = vmatprep.subr.mxu0 0.0
  %1316 = vmatpush1.msra.mxu0 0.0
  %1317 = vmatprep.subr.mxu0 0.0
  %1318 = vmatpush1.msra.mxu0 0.0
  %1319 = vmatprep.subr.mxu0 0.0
  %1320 = vmatpush1.msra.mxu0 %v20
  %1321 = vmatprep.subr.mxu0 0.0
  %1322 = vmatpush1.msra.mxu0 %v19
  %1323 = vmatprep.subr.mxu0 0.0
  %1324 = vmatpush1.msra.mxu0 %v18
  %1325 = vmatprep.subr.mxu0 0.0
  %1326 = vmatpush1.msra.mxu0 %v17
  %1327 = vmatprep.subr.mxu0 0.0
  %1328 = vmatpush2.msra.mxu0 0.0
  %1329 = vmatprep.subr.mxu0 0.0
  %1330 = vmatpush2.msra.mxu0 0.0
  %1331 = vmatprep.subr.mxu0 0.0
  %1332 = vmatpush2.msra.mxu0 0.0
  %1333 = vmatprep.subr.mxu0 0.0
  %1334 = vmatpush2.msra.mxu0 0.0
  %1335 = vmatprep.subr.mxu0 0.0
  %1336 = vmatpush2.msra.mxu0 0.0
  %1337 = vmatprep.subr.mxu0 0.0
  %1338 = vmatpush2.msra.mxu0 0.0
  %1339 = vmatprep.subr.mxu0 0.0
  %1340 = vmatpush2.msra.mxu0 0.0
  %1341 = vmatprep.subr.mxu0 0.0
  %1342 = vmatpush2.msra.mxu0 0.0
  %1343 = vmatprep.subr.mxu0 0.0
  %1344 = vmatpush2.msra.mxu0 0.0
  %1345 = vmatprep.subr.mxu0 0.0
  %1346 = vmatpush2.msra.mxu0 0.0
  %1347 = vmatprep.subr.mxu0 0.0
  %1348 = vmatpush2.msra.mxu0 0.0
  %1349 = vmatprep.subr.mxu0 0.0
  %1350 = vmatpush2.msra.mxu0 0.0
  %1351 = vmatprep.subr.mxu0 0.0
  %1352 = vmatpush2.msra.mxu0 0.0
  %1353 = vmatprep.subr.mxu0 0.0
  %1354 = vmatpush2.msra.mxu0 0.0
  %1355 = vmatprep.subr.mxu0 0.0
  %1356 = vmatpush2.msra.mxu0 0.0
  %1357 = vmatprep.subr.mxu0 0.0
  %1358 = vmatpush2.msra.mxu0 0.0
  %1359 = vmatprep.mubr.f32.mxu0 0.0
  %1360 = vmatmul.mubr.f32.gmra.mxu0 %v1293
  %v1361 = vpop.f32.mrf.mxu0
  %v1362 = vadd.f32 0.0, %v1361
  %v1363 = vpop.f32.mrf.mxu0
  %1364 = vdwg.mxu0
  %v1365 = vadd.f32 %v1292, %v1362
  %s1366 = scalar_lea.vmem %s1, 2
  %v1367 = vld [vmem:[%s1366] sm:$0x3]
  %1368 = vrot.lane.b32.xlu0 %v1280, 32
  %v1369 = vpop.permute.xlu0 %1368
  %v1370 = vsel %vm26, %v1369, 0
  %1372 = vmatprep.subr.mxu0 0.0
  %1373 = vmatpush1.msra.mxu0 0.0
  %1374 = vmatprep.subr.mxu0 0.0
  %1375 = vmatpush1.msra.mxu0 0.0
  %1376 = vmatprep.subr.mxu0 0.0
  %1377 = vmatpush1.msra.mxu0 0.0
  %1378 = vmatprep.subr.mxu0 0.0
  %1379 = vmatpush1.msra.mxu0 0.0
  %1380 = vmatprep.subr.mxu0 0.0
  %1381 = vmatpush1.msra.mxu0 0.0
  %1382 = vmatprep.subr.mxu0 0.0
  %1383 = vmatpush1.msra.mxu0 0.0
  %1384 = vmatprep.subr.mxu0 0.0
  %1385 = vmatpush1.msra.mxu0 0.0
  %1386 = vmatprep.subr.mxu0 0.0
  %1387 = vmatpush1.msra.mxu0 0.0
  %1388 = vmatprep.subr.mxu0 0.0
  %1389 = vmatpush1.msra.mxu0 0.0
  %1390 = vmatprep.subr.mxu0 0.0
  %1391 = vmatpush1.msra.mxu0 0.0
  %1392 = vmatprep.subr.mxu0 0.0
  %1393 = vmatpush1.msra.mxu0 0.0
  %1394 = vmatprep.subr.mxu0 0.0
  %1395 = vmatpush1.msra.mxu0 0.0
  %1396 = vmatprep.subr.mxu0 0.0
  %1397 = vmatpush1.msra.mxu0 %v24
  %1398 = vmatprep.subr.mxu0 0.0
  %1399 = vmatpush1.msra.mxu0 %v23
  %1400 = vmatprep.subr.mxu0 0.0
  %1401 = vmatpush1.msra.mxu0 %v22
  %1402 = vmatprep.subr.mxu0 0.0
  %1403 = vmatpush1.msra.mxu0 %v21
  %1404 = vmatprep.subr.mxu0 0.0
  %1405 = vmatpush2.msra.mxu0 0.0
  %1406 = vmatprep.subr.mxu0 0.0
  %1407 = vmatpush2.msra.mxu0 0.0
  %1408 = vmatprep.subr.mxu0 0.0
  %1409 = vmatpush2.msra.mxu0 0.0
  %1410 = vmatprep.subr.mxu0 0.0
  %1411 = vmatpush2.msra.mxu0 0.0
  %1412 = vmatprep.subr.mxu0 0.0
  %1413 = vmatpush2.msra.mxu0 0.0
  %1414 = vmatprep.subr.mxu0 0.0
  %1415 = vmatpush2.msra.mxu0 0.0
  %1416 = vmatprep.subr.mxu0 0.0
  %1417 = vmatpush2.msra.mxu0 0.0
  %1418 = vmatprep.subr.mxu0 0.0
  %1419 = vmatpush2.msra.mxu0 0.0
  %1420 = vmatprep.subr.mxu0 0.0
  %1421 = vmatpush2.msra.mxu0 0.0
  %1422 = vmatprep.subr.mxu0 0.0
  %1423 = vmatpush2.msra.mxu0 0.0
  %1424 = vmatprep.subr.mxu0 0.0
  %1425 = vmatpush2.msra.mxu0 0.0
  %1426 = vmatprep.subr.mxu0 0.0
  %1427 = vmatpush2.msra.mxu0 0.0
  %1428 = vmatprep.subr.mxu0 0.0
  %1429 = vmatpush2.msra.mxu0 0.0
  %1430 = vmatprep.subr.mxu0 0.0
  %1431 = vmatpush2.msra.mxu0 0.0
  %1432 = vmatprep.subr.mxu0 0.0
  %1433 = vmatpush2.msra.mxu0 0.0
  %1434 = vmatprep.subr.mxu0 0.0
  %1435 = vmatpush2.msra.mxu0 0.0
  %1436 = vmatprep.mubr.f32.mxu0 0.0
  %1437 = vmatmul.mubr.f32.gmra.mxu0 %v1370
  %v1438 = vpop.f32.mrf.mxu0
  %v1439 = vadd.f32 0.0, %v1438
  %v1440 = vpop.f32.mrf.mxu0
  %1441 = vdwg.mxu0
  %v1442 = vadd.f32 %v1367, %v1439
  %v1443 = vxor.u32 %v1365, 2147483648
  %v1444 = vmul.f32 %v1443, 1.442695
  %v1445 = vpow.pop %v1444
  %v1446 = vadd.f32 %v1445, 1.0
  %v1447 = vrcp.pop %v1446
  %v1448 = vmul.f32 1.0, %v1447
  %v1449 = vtanh.pop %v1365
  %v1450 = vmul.f32 %v1448, %v1250
  %1452 = vrot.lane.b32.xlu0 %v1449, 64
  %v1453 = vpop.permute.xlu0 %1452
  %v1455 = vmul.f32 %v1448, %v1453
  %1457 = vrot.lane.b32.xlu0 %v1455, 32
  %v1458 = vpop.permute.xlu0 %1457
  %v1460 = vadd.f32 %v1450, %v1458
  %v1461 = vtanh.pop %v1460
  %1463 = vrot.lane.b32.xlu0 %v1461, 64
  %v1464 = vpop.permute.xlu0 %1463
  %v1466 = vmul.f32 %v1448, %v1464
  %v1467 = vxor.u32 %v1442, 2147483648
  %v1468 = vmul.f32 %v1467, 1.442695
  %v1469 = vpow.pop %v1468
  %v1470 = vadd.f32 %v1469, 1.0
  %v1471 = vrcp.pop %v1470
  %v1472 = vmul.f32 1.0, %v1471
  %v1473 = vtanh.pop %v1442
  %v1474 = vmul.f32 %v1472, %v1274
  %1476 = vrot.lane.b32.xlu0 %v1473, 64
  %v1477 = vpop.permute.xlu0 %1476
  %v1479 = vmul.f32 %v1472, %v1477
  %1481 = vrot.lane.b32.xlu0 %v1479, 32
  %v1482 = vpop.permute.xlu0 %1481
  %v1484 = vadd.f32 %v1474, %v1482
  %v1485 = vtanh.pop %v1484
  %1487 = vrot.lane.b32.xlu0 %v1485, 64
  %v1488 = vpop.permute.xlu0 %1487
  %v1490 = vmul.f32 %v1472, %v1488
  %1492 = vrot.lane.b32.xlu0 %v1466, 32
  %v1493 = vpop.permute.xlu0 %1492
  %1495 = vst.msk [vmem:[%s445] sm:$0x3] %vm226, %v1493
  %1497 = vrot.lane.b32.xlu0 %v1490, 64
  %v1498 = vpop.permute.xlu0 %1497
  %1500 = vst.msk [vmem:[%s439] sm:$0x3] %vm233, %v1498
  %s1501 = scalar_lea.vmem %s0, 14
  %v1502 = vld [vmem:[%s1501] sm:$0x3]
  %v1503 = vsel %vm26, %v1493, 0
  %1505 = vmatprep.subr.mxu0 0.0
  %1506 = vmatpush1.msra.mxu0 0.0
  %1507 = vmatprep.subr.mxu0 0.0
  %1508 = vmatpush1.msra.mxu0 0.0
  %1509 = vmatprep.subr.mxu0 0.0
  %1510 = vmatpush1.msra.mxu0 0.0
  %1511 = vmatprep.subr.mxu0 0.0
  %1512 = vmatpush1.msra.mxu0 0.0
  %1513 = vmatprep.subr.mxu0 0.0
  %1514 = vmatpush1.msra.mxu0 0.0
  %1515 = vmatprep.subr.mxu0 0.0
  %1516 = vmatpush1.msra.mxu0 0.0
  %1517 = vmatprep.subr.mxu0 0.0
  %1518 = vmatpush1.msra.mxu0 0.0
  %1519 = vmatprep.subr.mxu0 0.0
  %1520 = vmatpush1.msra.mxu0 0.0
  %1521 = vmatprep.subr.mxu0 0.0
  %1522 = vmatpush1.msra.mxu0 0.0
  %1523 = vmatprep.subr.mxu0 0.0
  %1524 = vmatpush1.msra.mxu0 0.0
  %1525 = vmatprep.subr.mxu0 0.0
  %1526 = vmatpush1.msra.mxu0 0.0
  %1527 = vmatprep.subr.mxu0 0.0
  %1528 = vmatpush1.msra.mxu0 0.0
  %1529 = vmatprep.subr.mxu0 0.0
  %1530 = vmatpush1.msra.mxu0 %v20
  %1531 = vmatprep.subr.mxu0 0.0
  %1532 = vmatpush1.msra.mxu0 %v19
  %1533 = vmatprep.subr.mxu0 0.0
  %1534 = vmatpush1.msra.mxu0 %v18
  %1535 = vmatprep.subr.mxu0 0.0
  %1536 = vmatpush1.msra.mxu0 %v17
  %1537 = vmatprep.subr.mxu0 0.0
  %1538 = vmatpush2.msra.mxu0 0.0
  %1539 = vmatprep.subr.mxu0 0.0
  %1540 = vmatpush2.msra.mxu0 0.0
  %1541 = vmatprep.subr.mxu0 0.0
  %1542 = vmatpush2.msra.mxu0 0.0
  %1543 = vmatprep.subr.mxu0 0.0
  %1544 = vmatpush2.msra.mxu0 0.0
  %1545 = vmatprep.subr.mxu0 0.0
  %1546 = vmatpush2.msra.mxu0 0.0
  %1547 = vmatprep.subr.mxu0 0.0
  %1548 = vmatpush2.msra.mxu0 0.0
  %1549 = vmatprep.subr.mxu0 0.0
  %1550 = vmatpush2.msra.mxu0 0.0
  %1551 = vmatprep.subr.mxu0 0.0
  %1552 = vmatpush2.msra.mxu0 0.0
  %1553 = vmatprep.subr.mxu0 0.0
  %1554 = vmatpush2.msra.mxu0 0.0
  %1555 = vmatprep.subr.mxu0 0.0
  %1556 = vmatpush2.msra.mxu0 0.0
  %1557 = vmatprep.subr.mxu0 0.0
  %1558 = vmatpush2.msra.mxu0 0.0
  %1559 = vmatprep.subr.mxu0 0.0
  %1560 = vmatpush2.msra.mxu0 0.0
  %1561 = vmatprep.subr.mxu0 0.0
  %1562 = vmatpush2.msra.mxu0 0.0
  %1563 = vmatprep.subr.mxu0 0.0
  %1564 = vmatpush2.msra.mxu0 0.0
  %1565 = vmatprep.subr.mxu0 0.0
  %1566 = vmatpush2.msra.mxu0 0.0
  %1567 = vmatprep.subr.mxu0 0.0
  %1568 = vmatpush2.msra.mxu0 0.0
  %1569 = vmatprep.mubr.f32.mxu0 0.0
  %1570 = vmatmul.mubr.f32.gmra.mxu0 %v1503
  %v1571 = vpop.f32.mrf.mxu0
  %v1572 = vadd.f32 0.0, %v1571
  %v1573 = vpop.f32.mrf.mxu0
  %1574 = vdwg.mxu0
  %v1575 = vadd.f32 %v1502, %v1572
  %v1576 = vld [vmem:[%s1] sm:$0x3]
  %1577 = vrot.lane.b32.xlu0 %v1490, 32
  %v1578 = vpop.permute.xlu0 %1577
  %v1579 = vsel %vm26, %v1578, 0
  %1581 = vmatprep.subr.mxu0 0.0
  %1582 = vmatpush1.msra.mxu0 0.0
  %1583 = vmatprep.subr.mxu0 0.0
  %1584 = vmatpush1.msra.mxu0 0.0
  %1585 = vmatprep.subr.mxu0 0.0
  %1586 = vmatpush1.msra.mxu0 0.0
  %1587 = vmatprep.subr.mxu0 0.0
  %1588 = vmatpush1.msra.mxu0 0.0
  %1589 = vmatprep.subr.mxu0 0.0
  %1590 = vmatpush1.msra.mxu0 0.0
  %1591 = vmatprep.subr.mxu0 0.0
  %1592 = vmatpush1.msra.mxu0 0.0
  %1593 = vmatprep.subr.mxu0 0.0
  %1594 = vmatpush1.msra.mxu0 0.0
  %1595 = vmatprep.subr.mxu0 0.0
  %1596 = vmatpush1.msra.mxu0 0.0
  %1597 = vmatprep.subr.mxu0 0.0
  %1598 = vmatpush1.msra.mxu0 0.0
  %1599 = vmatprep.subr.mxu0 0.0
  %1600 = vmatpush1.msra.mxu0 0.0
  %1601 = vmatprep.subr.mxu0 0.0
  %1602 = vmatpush1.msra.mxu0 0.0
  %1603 = vmatprep.subr.mxu0 0.0
  %1604 = vmatpush1.msra.mxu0 0.0
  %1605 = vmatprep.subr.mxu0 0.0
  %1606 = vmatpush1.msra.mxu0 %v24
  %1607 = vmatprep.subr.mxu0 0.0
  %1608 = vmatpush1.msra.mxu0 %v23
  %1609 = vmatprep.subr.mxu0 0.0
  %1610 = vmatpush1.msra.mxu0 %v22
  %1611 = vmatprep.subr.mxu0 0.0
  %1612 = vmatpush1.msra.mxu0 %v21
  %1613 = vmatprep.subr.mxu0 0.0
  %1614 = vmatpush2.msra.mxu0 0.0
  %1615 = vmatprep.subr.mxu0 0.0
  %1616 = vmatpush2.msra.mxu0 0.0
  %1617 = vmatprep.subr.mxu0 0.0
  %1618 = vmatpush2.msra.mxu0 0.0
  %1619 = vmatprep.subr.mxu0 0.0
  %1620 = vmatpush2.msra.mxu0 0.0
  %1621 = vmatprep.subr.mxu0 0.0
  %1622 = vmatpush2.msra.mxu0 0.0
  %1623 = vmatprep.subr.mxu0 0.0
  %1624 = vmatpush2.msra.mxu0 0.0
  %1625 = vmatprep.subr.mxu0 0.0
  %1626 = vmatpush2.msra.mxu0 0.0
  %1627 = vmatprep.subr.mxu0 0.0
  %1628 = vmatpush2.msra.mxu0 0.0
  %1629 = vmatprep.subr.mxu0 0.0
  %1630 = vmatpush2.msra.mxu0 0.0
  %1631 = vmatprep.subr.mxu0 0.0
  %1632 = vmatpush2.msra.mxu0 0.0
  %1633 = vmatprep.subr.mxu0 0.0
  %1634 = vmatpush2.msra.mxu0 0.0
  %1635 = vmatprep.subr.mxu0 0.0
  %1636 = vmatpush2.msra.mxu0 0.0
  %1637 = vmatprep.subr.mxu0 0.0
  %1638 = vmatpush2.msra.mxu0 0.0
  %1639 = vmatprep.subr.mxu0 0.0
  %1640 = vmatpush2.msra.mxu0 0.0
  %1641 = vmatprep.subr.mxu0 0.0
  %1642 = vmatpush2.msra.mxu0 0.0
  %1643 = vmatprep.subr.mxu0 0.0
  %1644 = vmatpush2.msra.mxu0 0.0
  %1645 = vmatprep.mubr.f32.mxu0 0.0
  %1646 = vmatmul.mubr.f32.gmra.mxu0 %v1579
  %v1647 = vpop.f32.mrf.mxu0
  %v1648 = vadd.f32 0.0, %v1647
  %v1649 = vpop.f32.mrf.mxu0
  %1650 = vdwg.mxu0
  %v1651 = vadd.f32 %v1576, %v1648
  %v1652 = vxor.u32 %v1575, 2147483648
  %v1653 = vmul.f32 %v1652, 1.442695
  %v1654 = vpow.pop %v1653
  %v1655 = vadd.f32 %v1654, 1.0
  %v1656 = vrcp.pop %v1655
  %v1657 = vmul.f32 1.0, %v1656
  %v1658 = vtanh.pop %v1575
  %v1659 = vmul.f32 %v1657, %v1460
  %1661 = vrot.lane.b32.xlu0 %v1658, 64
  %v1662 = vpop.permute.xlu0 %1661
  %v1664 = vmul.f32 %v1657, %v1662
  %1666 = vrot.lane.b32.xlu0 %v1664, 32
  %v1667 = vpop.permute.xlu0 %1666
  %v1669 = vadd.f32 %v1659, %v1667
  %v1670 = vtanh.pop %v1669
  %1672 = vrot.lane.b32.xlu0 %v1670, 64
  %v1673 = vpop.permute.xlu0 %1672
  %v1675 = vmul.f32 %v1657, %v1673
  %v1676 = vxor.u32 %v1651, 2147483648
  %v1677 = vmul.f32 %v1676, 1.442695
  %v1678 = vpow.pop %v1677
  %v1679 = vadd.f32 %v1678, 1.0
  %v1680 = vrcp.pop %v1679
  %v1681 = vmul.f32 1.0, %v1680
  %v1682 = vtanh.pop %v1651
  %v1683 = vmul.f32 %v1681, %v1484
  %1685 = vrot.lane.b32.xlu0 %v1682, 64
  %v1686 = vpop.permute.xlu0 %1685
  %v1688 = vmul.f32 %v1681, %v1686
  %1690 = vrot.lane.b32.xlu0 %v1688, 32
  %v1691 = vpop.permute.xlu0 %1690
  %v1693 = vadd.f32 %v1683, %v1691
  %v1694 = vtanh.pop %v1693
  %1696 = vrot.lane.b32.xlu0 %v1694, 64
  %v1697 = vpop.permute.xlu0 %1696
  %v1699 = vmul.f32 %v1681, %v1697
  %1701 = vrot.lane.b32.xlu0 %v1675, 32
  %v1702 = vpop.permute.xlu0 %1701
  %1704 = vst.msk [vmem:[%s232] sm:$0x3] %vm226, %v1702
  %1706 = vrot.lane.b32.xlu0 %v1699, 64
  %v1707 = vpop.permute.xlu0 %1706
  %1709 = vst.msk [vmem:[%s4] sm:$0x3] %vm233, %v1707
  // Predicated region
  $region18: #{lstm_model_forward.2} parent=0 // pred_check
    _
  $region19: #{lstm_model_forward.2} parent=0 // pred_check_branch
    %1711 = sbr.rel (0) target = $region21
  $region20: #{lstm_model_forward.2} parent=0 // pred_region
    _
  $region21: #{lstm_model_forward.2} parent=0 // pred_fallthru
    _
  // Predicated region
  $region22: #{lstm_model_forward.2} parent=0 // pred_check
    _
  $region23: #{lstm_model_forward.2} parent=0 // pred_check_branch
    %1713 = sbr.rel (0) target = $region25
  $region24: #{lstm_model_forward.2} parent=0 // pred_region
    _
  $region25: #{lstm_model_forward.2} parent=0 // pred_fallthru
    _

// kernel: lstm_model_forward.3
$region0: #{lstm_model_forward.3}
  #allocation0 [shape = 'u32[]', space=smem, size = 0x4, offset = 0x4, fixed_abs, tag = 'smem constant byte address 0x4 - core index']
  #allocation1 [shape = 'u32[144,128]{1,0:T(1,128)}', space=vmem, size = 0x12000, scoped, tag = 'internal scratch']
  %s0 = inlined_call_operand.vmem [shape: f32[8,2,128], index: 0, kind: input, shape index: {}]
  %s1 = inlined_call_operand.vmem [shape: f32[8,2,128], index: 1, kind: input, shape index: {}]
  %s2 = inlined_call_operand.vmem [shape: f32[32,128], index: 2, kind: input, shape index: {}]
  %s3 = inlined_call_operand.vmem [shape: f32[32,128], index: 3, kind: input, shape index: {}]
  %s4 = inlined_call_operand.vmem [shape: f32[64,8], index: 4, kind: input, shape index: {}]
  %s5 = inlined_call_operand.vmem [shape: f32[1,8], index: 5, kind: input, shape index: {}]
  %s6 = inlined_call_operand.vmem [shape: f32[8,2,64], index: 6, kind: output, shape index: {0}]
  %s7 = inlined_call_operand.hbm [shape: f32[2,8], index: 7, kind: output, shape index: {1}]
  %8 = xla_tuple %s6, %s7
  %s9 = sld [smem:[#allocation0]]
  $region42: #{lstm_model_forward.3} parent=0
    _
  %s11 = ssub.s32 1, %s9
  %s12 = scalar_select 0, %s11, %s9
  $region1: #{lstm_model_forward.3} parent=0
    #allocation2 [shape = 'u8[1024]{0}', space=vmem, size = 0x400, scoped, tag = 'output window, operand 1, single buffered']
    #allocation3 [shape = 's32[1]{0}', space=sflag, size = 0x4, scoped, tag = 'scoped memory for lstm_model_forward.3']
    %13 = vsyncpa [#allocation3], 0
    // Predicated region
    $region2: #{lstm_model_forward.3} parent=1 // pred_check
      _
    $region3: #{lstm_model_forward.3} parent=1 // pred_check_branch
      %15 = sbr.rel (0) target = $region5
    $region4: #{lstm_model_forward.3} parent=1 // pred_region
      _
    $region5: #{lstm_model_forward.3} parent=1 // pred_fallthru
      _
    // Predicated region
    $region6: #{lstm_model_forward.3} parent=1 // pred_check
      _
    $region7: #{lstm_model_forward.3} parent=1 // pred_check_branch
      %17 = sbr.rel (0) target = $region9
    $region8: #{lstm_model_forward.3} parent=1 // pred_region
      _
    $region9: #{lstm_model_forward.3} parent=1 // pred_fallthru
      _
    // Predicated region
    $region10: #{lstm_model_forward.3} parent=1 // pred_check
      _
    $region11: #{lstm_model_forward.3} parent=1 // pred_check_branch
      %19 = sbr.rel (0) target = $region13
    $region12: #{lstm_model_forward.3} parent=1 // pred_region
      _
    $region13: #{lstm_model_forward.3} parent=1 // pred_fallthru
      _
    // Predicated region
    $region14: #{lstm_model_forward.3} parent=1 // pred_check
      _
    $region15: #{lstm_model_forward.3} parent=1 // pred_check_branch
      %21 = sbr.rel (0) target = $region17
    $region16: #{lstm_model_forward.3} parent=1 // pred_region
      _
    $region17: #{lstm_model_forward.3} parent=1 // pred_fallthru
      _
    // Predicated region
    $region18: #{lstm_model_forward.3} parent=1 // pred_check
      _
    $region19: #{lstm_model_forward.3} parent=1 // pred_check_branch
      %23 = sbr.rel (0) target = $region21
    $region20: #{lstm_model_forward.3} parent=1 // pred_region
      _
    $region21: #{lstm_model_forward.3} parent=1 // pred_fallthru
      _
    // Predicated region
    $region22: #{lstm_model_forward.3} parent=1 // pred_check
      _
    $region23: #{lstm_model_forward.3} parent=1 // pred_check_branch
      %25 = sbr.rel (0) target = $region25
    $region24: #{lstm_model_forward.3} parent=1 // pred_region
      _
    $region25: #{lstm_model_forward.3} parent=1 // pred_fallthru
      _
    %v26 = vld [vmem:[%s2] sm:$0xff]
    %v27 = vld [vmem:[%s2 + $0x8] sm:$0xff]
    %v28 = vld [vmem:[%s2 + $0x10] sm:$0xff]
    %v29 = vld [vmem:[%s2 + $0x18] sm:$0xff]
    %v30 = vld [vmem:[%s3] sm:$0xff]
    %v31 = vld [vmem:[%s3 + $0x8] sm:$0xff]
    %v32 = vld [vmem:[%s3 + $0x10] sm:$0xff]
    %v33 = vld [vmem:[%s3 + $0x18] sm:$0xff]
    %v34 = vld [vmem:[%s0] sm:$0x3]
    %vm35 = vcmask 261120
    %v37 = vsel %vm35, 0.0, 0
    %39 = vmatprep.subr.mxu0 0.0
    %40 = vmatpush1.msra.mxu0 0.0
    %41 = vmatprep.subr.mxu0 0.0
    %42 = vmatpush1.msra.mxu0 0.0
    %43 = vmatprep.subr.mxu0 0.0
    %44 = vmatpush1.msra.mxu0 0.0
    %45 = vmatprep.subr.mxu0 0.0
    %46 = vmatpush1.msra.mxu0 0.0
    %47 = vmatprep.subr.mxu0 0.0
    %48 = vmatpush1.msra.mxu0 0.0
    %49 = vmatprep.subr.mxu0 0.0
    %50 = vmatpush1.msra.mxu0 0.0
    %51 = vmatprep.subr.mxu0 0.0
    %52 = vmatpush1.msra.mxu0 0.0
    %53 = vmatprep.subr.mxu0 0.0
    %54 = vmatpush1.msra.mxu0 0.0
    %55 = vmatprep.subr.mxu0 0.0
    %56 = vmatpush1.msra.mxu0 0.0
    %57 = vmatprep.subr.mxu0 0.0
    %58 = vmatpush1.msra.mxu0 0.0
    %59 = vmatprep.subr.mxu0 0.0
    %60 = vmatpush1.msra.mxu0 0.0
    %61 = vmatprep.subr.mxu0 0.0
    %62 = vmatpush1.msra.mxu0 0.0
    %63 = vmatprep.subr.mxu0 0.0
    %64 = vmatpush1.msra.mxu0 %v29
    %65 = vmatprep.subr.mxu0 0.0
    %66 = vmatpush1.msra.mxu0 %v28
    %67 = vmatprep.subr.mxu0 0.0
    %68 = vmatpush1.msra.mxu0 %v27
    %69 = vmatprep.subr.mxu0 0.0
    %70 = vmatpush1.msra.mxu0 %v26
    %71 = vmatprep.subr.mxu0 0.0
    %72 = vmatpush2.msra.mxu0 0.0
    %73 = vmatprep.subr.mxu0 0.0
    %74 = vmatpush2.msra.mxu0 0.0
    %75 = vmatprep.subr.mxu0 0.0
    %76 = vmatpush2.msra.mxu0 0.0
    %77 = vmatprep.subr.mxu0 0.0
    %78 = vmatpush2.msra.mxu0 0.0
    %79 = vmatprep.subr.mxu0 0.0
    %80 = vmatpush2.msra.mxu0 0.0
    %81 = vmatprep.subr.mxu0 0.0
    %82 = vmatpush2.msra.mxu0 0.0
    %83 = vmatprep.subr.mxu0 0.0
    %84 = vmatpush2.msra.mxu0 0.0
    %85 = vmatprep.subr.mxu0 0.0
    %86 = vmatpush2.msra.mxu0 0.0
    %87 = vmatprep.subr.mxu0 0.0
    %88 = vmatpush2.msra.mxu0 0.0
    %89 = vmatprep.subr.mxu0 0.0
    %90 = vmatpush2.msra.mxu0 0.0
    %91 = vmatprep.subr.mxu0 0.0
    %92 = vmatpush2.msra.mxu0 0.0
    %93 = vmatprep.subr.mxu0 0.0
    %94 = vmatpush2.msra.mxu0 0.0
    %95 = vmatprep.subr.mxu0 0.0
    %96 = vmatpush2.msra.mxu0 0.0
    %97 = vmatprep.subr.mxu0 0.0
    %98 = vmatpush2.msra.mxu0 0.0
    %99 = vmatprep.subr.mxu0 0.0
    %100 = vmatpush2.msra.mxu0 0.0
    %101 = vmatprep.subr.mxu0 0.0
    %102 = vmatpush2.msra.mxu0 0.0
    %103 = vmatprep.mubr.f32.mxu0 0.0
    %104 = vmatmul.mubr.f32.gmra.mxu0 %v37
    %v105 = vpop.f32.mrf.mxu0
    %v106 = vadd.f32 0.0, %v105
    %v107 = vpop.f32.mrf.mxu0
    %108 = vdwg.mxu0
    %v109 = vadd.f32 %v34, %v106
    %s110 = scalar_lea.vmem %s1, 14
    %v111 = vld [vmem:[%s110] sm:$0x3]
    %112 = vmatprep.subr.mxu0 0.0
    %113 = vmatpush1.msra.mxu0 0.0
    %114 = vmatprep.subr.mxu0 0.0
    %115 = vmatpush1.msra.mxu0 0.0
    %116 = vmatprep.subr.mxu0 0.0
    %117 = vmatpush1.msra.mxu0 0.0
    %118 = vmatprep.subr.mxu0 0.0
    %119 = vmatpush1.msra.mxu0 0.0
    %120 = vmatprep.subr.mxu0 0.0
    %121 = vmatpush1.msra.mxu0 0.0
    %122 = vmatprep.subr.mxu0 0.0
    %123 = vmatpush1.msra.mxu0 0.0
    %124 = vmatprep.subr.mxu0 0.0
    %125 = vmatpush1.msra.mxu0 0.0
    %126 = vmatprep.subr.mxu0 0.0
    %127 = vmatpush1.msra.mxu0 0.0
    %128 = vmatprep.subr.mxu0 0.0
    %129 = vmatpush1.msra.mxu0 0.0
    %130 = vmatprep.subr.mxu0 0.0
    %131 = vmatpush1.msra.mxu0 0.0
    %132 = vmatprep.subr.mxu0 0.0
    %133 = vmatpush1.msra.mxu0 0.0
    %134 = vmatprep.subr.mxu0 0.0
    %135 = vmatpush1.msra.mxu0 0.0
    %136 = vmatprep.subr.mxu0 0.0
    %137 = vmatpush1.msra.mxu0 %v33
    %138 = vmatprep.subr.mxu0 0.0
    %139 = vmatpush1.msra.mxu0 %v32
    %140 = vmatprep.subr.mxu0 0.0
    %141 = vmatpush1.msra.mxu0 %v31
    %142 = vmatprep.subr.mxu0 0.0
    %143 = vmatpush1.msra.mxu0 %v30
    %144 = vmatprep.subr.mxu0 0.0
    %145 = vmatpush2.msra.mxu0 0.0
    %146 = vmatprep.subr.mxu0 0.0
    %147 = vmatpush2.msra.mxu0 0.0
    %148 = vmatprep.subr.mxu0 0.0
    %149 = vmatpush2.msra.mxu0 0.0
    %150 = vmatprep.subr.mxu0 0.0
    %151 = vmatpush2.msra.mxu0 0.0
    %152 = vmatprep.subr.mxu0 0.0
    %153 = vmatpush2.msra.mxu0 0.0
    %154 = vmatprep.subr.mxu0 0.0
    %155 = vmatpush2.msra.mxu0 0.0
    %156 = vmatprep.subr.mxu0 0.0
    %157 = vmatpush2.msra.mxu0 0.0
    %158 = vmatprep.subr.mxu0 0.0
    %159 = vmatpush2.msra.mxu0 0.0
    %160 = vmatprep.subr.mxu0 0.0
    %161 = vmatpush2.msra.mxu0 0.0
    %162 = vmatprep.subr.mxu0 0.0
    %163 = vmatpush2.msra.mxu0 0.0
    %164 = vmatprep.subr.mxu0 0.0
    %165 = vmatpush2.msra.mxu0 0.0
    %166 = vmatprep.subr.mxu0 0.0
    %167 = vmatpush2.msra.mxu0 0.0
    %168 = vmatprep.subr.mxu0 0.0
    %169 = vmatpush2.msra.mxu0 0.0
    %170 = vmatprep.subr.mxu0 0.0
    %171 = vmatpush2.msra.mxu0 0.0
    %172 = vmatprep.subr.mxu0 0.0
    %173 = vmatpush2.msra.mxu0 0.0
    %174 = vmatprep.subr.mxu0 0.0
    %175 = vmatpush2.msra.mxu0 0.0
    %176 = vmatprep.mubr.f32.mxu0 0.0
    %177 = vmatmul.mubr.f32.gmra.mxu0 %v37
    %v178 = vpop.f32.mrf.mxu0
    %v179 = vadd.f32 0.0, %v178
    %v180 = vpop.f32.mrf.mxu0
    %181 = vdwg.mxu0
    %v182 = vadd.f32 %v111, %v179
    %v183 = vxor.u32 %v109, 2147483648
    %v184 = vmul.f32 %v183, 1.442695
    %v185 = vpow.pop %v184
    %v186 = vadd.f32 %v185, 1.0
    %v187 = vrcp.pop %v186
    %v188 = vmul.f32 1.0, %v187
    %v189 = vtanh.pop %v109
    %v190 = vmul.f32 %v188, 0.0
    %192 = vrot.lane.b32.xlu0 %v189, 64
    %v193 = vpop.permute.xlu0 %192
    %v195 = vmul.f32 %v188, %v193
    %197 = vrot.lane.b32.xlu0 %v195, 32
    %v198 = vpop.permute.xlu0 %197
    %v200 = vadd.f32 %v190, %v198
    %v201 = vtanh.pop %v200
    %203 = vrot.lane.b32.xlu0 %v201, 64
    %v204 = vpop.permute.xlu0 %203
    %v206 = vmul.f32 %v188, %v204
    %v207 = vxor.u32 %v182, 2147483648
    %v208 = vmul.f32 %v207, 1.442695
    %v209 = vpow.pop %v208
    %v210 = vadd.f32 %v209, 1.0
    %v211 = vrcp.pop %v210
    %v212 = vmul.f32 1.0, %v211
    %v213 = vtanh.pop %v182
    %v214 = vmul.f32 %v212, 0.0
    %216 = vrot.lane.b32.xlu0 %v213, 64
    %v217 = vpop.permute.xlu0 %216
    %v219 = vmul.f32 %v212, %v217
    %221 = vrot.lane.b32.xlu0 %v219, 32
    %v222 = vpop.permute.xlu0 %221
    %v224 = vadd.f32 %v214, %v222
    %v225 = vtanh.pop %v224
    %227 = vrot.lane.b32.xlu0 %v225, 64
    %v228 = vpop.permute.xlu0 %227
    %v230 = vmul.f32 %v212, %v228
    %232 = vrot.lane.b32.xlu0 %v206, 32
    %v233 = vpop.permute.xlu0 %232
    %vm235 = vcmask 254976
    %236 = vst.msk [vmem:[%s6] sm:$0x3] %vm235, %v233
    %238 = vrot.lane.b32.xlu0 %v230, 64
    %v239 = vpop.permute.xlu0 %238
    %s241 = scalar_lea.vmem %s6, 14
    %vm242 = vcmask 517376
    %243 = vst.msk [vmem:[%s241] sm:$0x3] %vm242, %v239
    %s244 = scalar_lea.vmem %s0, 2
    %v245 = vld [vmem:[%s244] sm:$0x3]
    %v246 = vsel %vm35, %v233, 0
    %248 = vmatprep.subr.mxu0 0.0
    %249 = vmatpush1.msra.mxu0 0.0
    %250 = vmatprep.subr.mxu0 0.0
    %251 = vmatpush1.msra.mxu0 0.0
    %252 = vmatprep.subr.mxu0 0.0
    %253 = vmatpush1.msra.mxu0 0.0
    %254 = vmatprep.subr.mxu0 0.0
    %255 = vmatpush1.msra.mxu0 0.0
    %256 = vmatprep.subr.mxu0 0.0
    %257 = vmatpush1.msra.mxu0 0.0
    %258 = vmatprep.subr.mxu0 0.0
    %259 = vmatpush1.msra.mxu0 0.0
    %260 = vmatprep.subr.mxu0 0.0
    %261 = vmatpush1.msra.mxu0 0.0
    %262 = vmatprep.subr.mxu0 0.0
    %263 = vmatpush1.msra.mxu0 0.0
    %264 = vmatprep.subr.mxu0 0.0
    %265 = vmatpush1.msra.mxu0 0.0
    %266 = vmatprep.subr.mxu0 0.0
    %267 = vmatpush1.msra.mxu0 0.0
    %268 = vmatprep.subr.mxu0 0.0
    %269 = vmatpush1.msra.mxu0 0.0
    %270 = vmatprep.subr.mxu0 0.0
    %271 = vmatpush1.msra.mxu0 0.0
    %272 = vmatprep.subr.mxu0 0.0
    %273 = vmatpush1.msra.mxu0 %v29
    %274 = vmatprep.subr.mxu0 0.0
    %275 = vmatpush1.msra.mxu0 %v28
    %276 = vmatprep.subr.mxu0 0.0
    %277 = vmatpush1.msra.mxu0 %v27
    %278 = vmatprep.subr.mxu0 0.0
    %279 = vmatpush1.msra.mxu0 %v26
    %280 = vmatprep.subr.mxu0 0.0
    %281 = vmatpush2.msra.mxu0 0.0
    %282 = vmatprep.subr.mxu0 0.0
    %283 = vmatpush2.msra.mxu0 0.0
    %284 = vmatprep.subr.mxu0 0.0
    %285 = vmatpush2.msra.mxu0 0.0
    %286 = vmatprep.subr.mxu0 0.0
    %287 = vmatpush2.msra.mxu0 0.0
    %288 = vmatprep.subr.mxu0 0.0
    %289 = vmatpush2.msra.mxu0 0.0
    %290 = vmatprep.subr.mxu0 0.0
    %291 = vmatpush2.msra.mxu0 0.0
    %292 = vmatprep.subr.mxu0 0.0
    %293 = vmatpush2.msra.mxu0 0.0
    %294 = vmatprep.subr.mxu0 0.0
    %295 = vmatpush2.msra.mxu0 0.0
    %296 = vmatprep.subr.mxu0 0.0
    %297 = vmatpush2.msra.mxu0 0.0
    %298 = vmatprep.subr.mxu0 0.0
    %299 = vmatpush2.msra.mxu0 0.0
    %300 = vmatprep.subr.mxu0 0.0
    %301 = vmatpush2.msra.mxu0 0.0
    %302 = vmatprep.subr.mxu0 0.0
    %303 = vmatpush2.msra.mxu0 0.0
    %304 = vmatprep.subr.mxu0 0.0
    %305 = vmatpush2.msra.mxu0 0.0
    %306 = vmatprep.subr.mxu0 0.0
    %307 = vmatpush2.msra.mxu0 0.0
    %308 = vmatprep.subr.mxu0 0.0
    %309 = vmatpush2.msra.mxu0 0.0
    %310 = vmatprep.subr.mxu0 0.0
    %311 = vmatpush2.msra.mxu0 0.0
    %312 = vmatprep.mubr.f32.mxu0 0.0
    %313 = vmatmul.mubr.f32.gmra.mxu0 %v246
    %v314 = vpop.f32.mrf.mxu0
    %v315 = vadd.f32 0.0, %v314
    %v316 = vpop.f32.mrf.mxu0
    %317 = vdwg.mxu0
    %v318 = vadd.f32 %v245, %v315
    %s319 = scalar_lea.vmem %s1, 12
    %v320 = vld [vmem:[%s319] sm:$0x3]
    %321 = vrot.lane.b32.xlu0 %v230, 32
    %v322 = vpop.permute.xlu0 %321
    %v323 = vsel %vm35, %v322, 0
    %325 = vmatprep.subr.mxu0 0.0
    %326 = vmatpush1.msra.mxu0 0.0
    %327 = vmatprep.subr.mxu0 0.0
    %328 = vmatpush1.msra.mxu0 0.0
    %329 = vmatprep.subr.mxu0 0.0
    %330 = vmatpush1.msra.mxu0 0.0
    %331 = vmatprep.subr.mxu0 0.0
    %332 = vmatpush1.msra.mxu0 0.0
    %333 = vmatprep.subr.mxu0 0.0
    %334 = vmatpush1.msra.mxu0 0.0
    %335 = vmatprep.subr.mxu0 0.0
    %336 = vmatpush1.msra.mxu0 0.0
    %337 = vmatprep.subr.mxu0 0.0
    %338 = vmatpush1.msra.mxu0 0.0
    %339 = vmatprep.subr.mxu0 0.0
    %340 = vmatpush1.msra.mxu0 0.0
    %341 = vmatprep.subr.mxu0 0.0
    %342 = vmatpush1.msra.mxu0 0.0
    %343 = vmatprep.subr.mxu0 0.0
    %344 = vmatpush1.msra.mxu0 0.0
    %345 = vmatprep.subr.mxu0 0.0
    %346 = vmatpush1.msra.mxu0 0.0
    %347 = vmatprep.subr.mxu0 0.0
    %348 = vmatpush1.msra.mxu0 0.0
    %349 = vmatprep.subr.mxu0 0.0
    %350 = vmatpush1.msra.mxu0 %v33
    %351 = vmatprep.subr.mxu0 0.0
    %352 = vmatpush1.msra.mxu0 %v32
    %353 = vmatprep.subr.mxu0 0.0
    %354 = vmatpush1.msra.mxu0 %v31
    %355 = vmatprep.subr.mxu0 0.0
    %356 = vmatpush1.msra.mxu0 %v30
    %357 = vmatprep.subr.mxu0 0.0
    %358 = vmatpush2.msra.mxu0 0.0
    %359 = vmatprep.subr.mxu0 0.0
    %360 = vmatpush2.msra.mxu0 0.0
    %361 = vmatprep.subr.mxu0 0.0
    %362 = vmatpush2.msra.mxu0 0.0
    %363 = vmatprep.subr.mxu0 0.0
    %364 = vmatpush2.msra.mxu0 0.0
    %365 = vmatprep.subr.mxu0 0.0
    %366 = vmatpush2.msra.mxu0 0.0
    %367 = vmatprep.subr.mxu0 0.0
    %368 = vmatpush2.msra.mxu0 0.0
    %369 = vmatprep.subr.mxu0 0.0
    %370 = vmatpush2.msra.mxu0 0.0
    %371 = vmatprep.subr.mxu0 0.0
    %372 = vmatpush2.msra.mxu0 0.0
    %373 = vmatprep.subr.mxu0 0.0
    %374 = vmatpush2.msra.mxu0 0.0
    %375 = vmatprep.subr.mxu0 0.0
    %376 = vmatpush2.msra.mxu0 0.0
    %377 = vmatprep.subr.mxu0 0.0
    %378 = vmatpush2.msra.mxu0 0.0
    %379 = vmatprep.subr.mxu0 0.0
    %380 = vmatpush2.msra.mxu0 0.0
    %381 = vmatprep.subr.mxu0 0.0
    %382 = vmatpush2.msra.mxu0 0.0
    %383 = vmatprep.subr.mxu0 0.0
    %384 = vmatpush2.msra.mxu0 0.0
    %385 = vmatprep.subr.mxu0 0.0
    %386 = vmatpush2.msra.mxu0 0.0
    %387 = vmatprep.subr.mxu0 0.0
    %388 = vmatpush2.msra.mxu0 0.0
    %389 = vmatprep.mubr.f32.mxu0 0.0
    %390 = vmatmul.mubr.f32.gmra.mxu0 %v323
    %v391 = vpop.f32.mrf.mxu0
    %v392 = vadd.f32 0.0, %v391
    %v393 = vpop.f32.mrf.mxu0
    %394 = vdwg.mxu0
    %v395 = vadd.f32 %v320, %v392
    %v396 = vxor.u32 %v318, 2147483648
    %v397 = vmul.f32 %v396, 1.442695
    %v398 = vpow.pop %v397
    %v399 = vadd.f32 %v398, 1.0
    %v400 = vrcp.pop %v399
    %v401 = vmul.f32 1.0, %v400
    %v402 = vtanh.pop %v318
    %v403 = vmul.f32 %v401, %v200
    %405 = vrot.lane.b32.xlu0 %v402, 64
    %v406 = vpop.permute.xlu0 %405
    %v408 = vmul.f32 %v401, %v406
    %410 = vrot.lane.b32.xlu0 %v408, 32
    %v411 = vpop.permute.xlu0 %410
    %v413 = vadd.f32 %v403, %v411
    %v414 = vtanh.pop %v413
    %416 = vrot.lane.b32.xlu0 %v414, 64
    %v417 = vpop.permute.xlu0 %416
    %v419 = vmul.f32 %v401, %v417
    %v420 = vxor.u32 %v395, 2147483648
    %v421 = vmul.f32 %v420, 1.442695
    %v422 = vpow.pop %v421
    %v423 = vadd.f32 %v422, 1.0
    %v424 = vrcp.pop %v423
    %v425 = vmul.f32 1.0, %v424
    %v426 = vtanh.pop %v395
    %v427 = vmul.f32 %v425, %v224
    %429 = vrot.lane.b32.xlu0 %v426, 64
    %v430 = vpop.permute.xlu0 %429
    %v432 = vmul.f32 %v425, %v430
    %434 = vrot.lane.b32.xlu0 %v432, 32
    %v435 = vpop.permute.xlu0 %434
    %v437 = vadd.f32 %v427, %v435
    %v438 = vtanh.pop %v437
    %440 = vrot.lane.b32.xlu0 %v438, 64
    %v441 = vpop.permute.xlu0 %440
    %v443 = vmul.f32 %v425, %v441
    %445 = vrot.lane.b32.xlu0 %v419, 32
    %v446 = vpop.permute.xlu0 %445
    %s448 = scalar_lea.vmem %s6, 2
    %449 = vst.msk [vmem:[%s448] sm:$0x3] %vm235, %v446
    %451 = vrot.lane.b32.xlu0 %v443, 64
    %v452 = vpop.permute.xlu0 %451
    %s454 = scalar_lea.vmem %s6, 12
    %455 = vst.msk [vmem:[%s454] sm:$0x3] %vm242, %v452
    %s456 = scalar_lea.vmem %s0, 4
    %v457 = vld [vmem:[%s456] sm:$0x3]
    %v458 = vsel %vm35, %v446, 0
    %460 = vmatprep.subr.mxu0 0.0
    %461 = vmatpush1.msra.mxu0 0.0
    %462 = vmatprep.subr.mxu0 0.0
    %463 = vmatpush1.msra.mxu0 0.0
    %464 = vmatprep.subr.mxu0 0.0
    %465 = vmatpush1.msra.mxu0 0.0
    %466 = vmatprep.subr.mxu0 0.0
    %467 = vmatpush1.msra.mxu0 0.0
    %468 = vmatprep.subr.mxu0 0.0
    %469 = vmatpush1.msra.mxu0 0.0
    %470 = vmatprep.subr.mxu0 0.0
    %471 = vmatpush1.msra.mxu0 0.0
    %472 = vmatprep.subr.mxu0 0.0
    %473 = vmatpush1.msra.mxu0 0.0
    %474 = vmatprep.subr.mxu0 0.0
    %475 = vmatpush1.msra.mxu0 0.0
    %476 = vmatprep.subr.mxu0 0.0
    %477 = vmatpush1.msra.mxu0 0.0
    %478 = vmatprep.subr.mxu0 0.0
    %479 = vmatpush1.msra.mxu0 0.0
    %480 = vmatprep.subr.mxu0 0.0
    %481 = vmatpush1.msra.mxu0 0.0
    %482 = vmatprep.subr.mxu0 0.0
    %483 = vmatpush1.msra.mxu0 0.0
    %484 = vmatprep.subr.mxu0 0.0
    %485 = vmatpush1.msra.mxu0 %v29
    %486 = vmatprep.subr.mxu0 0.0
    %487 = vmatpush1.msra.mxu0 %v28
    %488 = vmatprep.subr.mxu0 0.0
    %489 = vmatpush1.msra.mxu0 %v27
    %490 = vmatprep.subr.mxu0 0.0
    %491 = vmatpush1.msra.mxu0 %v26
    %492 = vmatprep.subr.mxu0 0.0
    %493 = vmatpush2.msra.mxu0 0.0
    %494 = vmatprep.subr.mxu0 0.0
    %495 = vmatpush2.msra.mxu0 0.0
    %496 = vmatprep.subr.mxu0 0.0
    %497 = vmatpush2.msra.mxu0 0.0
    %498 = vmatprep.subr.mxu0 0.0
    %499 = vmatpush2.msra.mxu0 0.0
    %500 = vmatprep.subr.mxu0 0.0
    %501 = vmatpush2.msra.mxu0 0.0
    %502 = vmatprep.subr.mxu0 0.0
    %503 = vmatpush2.msra.mxu0 0.0
    %504 = vmatprep.subr.mxu0 0.0
    %505 = vmatpush2.msra.mxu0 0.0
    %506 = vmatprep.subr.mxu0 0.0
    %507 = vmatpush2.msra.mxu0 0.0
    %508 = vmatprep.subr.mxu0 0.0
    %509 = vmatpush2.msra.mxu0 0.0
    %510 = vmatprep.subr.mxu0 0.0
    %511 = vmatpush2.msra.mxu0 0.0
    %512 = vmatprep.subr.mxu0 0.0
    %513 = vmatpush2.msra.mxu0 0.0
    %514 = vmatprep.subr.mxu0 0.0
    %515 = vmatpush2.msra.mxu0 0.0
    %516 = vmatprep.subr.mxu0 0.0
    %517 = vmatpush2.msra.mxu0 0.0
    %518 = vmatprep.subr.mxu0 0.0
    %519 = vmatpush2.msra.mxu0 0.0
    %520 = vmatprep.subr.mxu0 0.0
    %521 = vmatpush2.msra.mxu0 0.0
    %522 = vmatprep.subr.mxu0 0.0
    %523 = vmatpush2.msra.mxu0 0.0
    %524 = vmatprep.mubr.f32.mxu0 0.0
    %525 = vmatmul.mubr.f32.gmra.mxu0 %v458
    %v526 = vpop.f32.mrf.mxu0
    %v527 = vadd.f32 0.0, %v526
    %v528 = vpop.f32.mrf.mxu0
    %529 = vdwg.mxu0
    %v530 = vadd.f32 %v457, %v527
    %s531 = scalar_lea.vmem %s1, 10
    %v532 = vld [vmem:[%s531] sm:$0x3]
    %533 = vrot.lane.b32.xlu0 %v443, 32
    %v534 = vpop.permute.xlu0 %533
    %v535 = vsel %vm35, %v534, 0
    %537 = vmatprep.subr.mxu0 0.0
    %538 = vmatpush1.msra.mxu0 0.0
    %539 = vmatprep.subr.mxu0 0.0
    %540 = vmatpush1.msra.mxu0 0.0
    %541 = vmatprep.subr.mxu0 0.0
    %542 = vmatpush1.msra.mxu0 0.0
    %543 = vmatprep.subr.mxu0 0.0
    %544 = vmatpush1.msra.mxu0 0.0
    %545 = vmatprep.subr.mxu0 0.0
    %546 = vmatpush1.msra.mxu0 0.0
    %547 = vmatprep.subr.mxu0 0.0
    %548 = vmatpush1.msra.mxu0 0.0
    %549 = vmatprep.subr.mxu0 0.0
    %550 = vmatpush1.msra.mxu0 0.0
    %551 = vmatprep.subr.mxu0 0.0
    %552 = vmatpush1.msra.mxu0 0.0
    %553 = vmatprep.subr.mxu0 0.0
    %554 = vmatpush1.msra.mxu0 0.0
    %555 = vmatprep.subr.mxu0 0.0
    %556 = vmatpush1.msra.mxu0 0.0
    %557 = vmatprep.subr.mxu0 0.0
    %558 = vmatpush1.msra.mxu0 0.0
    %559 = vmatprep.subr.mxu0 0.0
    %560 = vmatpush1.msra.mxu0 0.0
    %561 = vmatprep.subr.mxu0 0.0
    %562 = vmatpush1.msra.mxu0 %v33
    %563 = vmatprep.subr.mxu0 0.0
    %564 = vmatpush1.msra.mxu0 %v32
    %565 = vmatprep.subr.mxu0 0.0
    %566 = vmatpush1.msra.mxu0 %v31
    %567 = vmatprep.subr.mxu0 0.0
    %568 = vmatpush1.msra.mxu0 %v30
    %569 = vmatprep.subr.mxu0 0.0
    %570 = vmatpush2.msra.mxu0 0.0
    %571 = vmatprep.subr.mxu0 0.0
    %572 = vmatpush2.msra.mxu0 0.0
    %573 = vmatprep.subr.mxu0 0.0
    %574 = vmatpush2.msra.mxu0 0.0
    %575 = vmatprep.subr.mxu0 0.0
    %576 = vmatpush2.msra.mxu0 0.0
    %577 = vmatprep.subr.mxu0 0.0
    %578 = vmatpush2.msra.mxu0 0.0
    %579 = vmatprep.subr.mxu0 0.0
    %580 = vmatpush2.msra.mxu0 0.0
    %581 = vmatprep.subr.mxu0 0.0
    %582 = vmatpush2.msra.mxu0 0.0
    %583 = vmatprep.subr.mxu0 0.0
    %584 = vmatpush2.msra.mxu0 0.0
    %585 = vmatprep.subr.mxu0 0.0
    %586 = vmatpush2.msra.mxu0 0.0
    %587 = vmatprep.subr.mxu0 0.0
    %588 = vmatpush2.msra.mxu0 0.0
    %589 = vmatprep.subr.mxu0 0.0
    %590 = vmatpush2.msra.mxu0 0.0
    %591 = vmatprep.subr.mxu0 0.0
    %592 = vmatpush2.msra.mxu0 0.0
    %593 = vmatprep.subr.mxu0 0.0
    %594 = vmatpush2.msra.mxu0 0.0
    %595 = vmatprep.subr.mxu0 0.0
    %596 = vmatpush2.msra.mxu0 0.0
    %597 = vmatprep.subr.mxu0 0.0
    %598 = vmatpush2.msra.mxu0 0.0
    %599 = vmatprep.subr.mxu0 0.0
    %600 = vmatpush2.msra.mxu0 0.0
    %601 = vmatprep.mubr.f32.mxu0 0.0
    %602 = vmatmul.mubr.f32.gmra.mxu0 %v535
    %v603 = vpop.f32.mrf.mxu0
    %v604 = vadd.f32 0.0, %v603
    %v605 = vpop.f32.mrf.mxu0
    %606 = vdwg.mxu0
    %v607 = vadd.f32 %v532, %v604
    %v608 = vxor.u32 %v530, 2147483648
    %v609 = vmul.f32 %v608, 1.442695
    %v610 = vpow.pop %v609
    %v611 = vadd.f32 %v610, 1.0
    %v612 = vrcp.pop %v611
    %v613 = vmul.f32 1.0, %v612
    %v614 = vtanh.pop %v530
    %v615 = vmul.f32 %v613, %v413
    %617 = vrot.lane.b32.xlu0 %v614, 64
    %v618 = vpop.permute.xlu0 %617
    %v620 = vmul.f32 %v613, %v618
    %622 = vrot.lane.b32.xlu0 %v620, 32
    %v623 = vpop.permute.xlu0 %622
    %v625 = vadd.f32 %v615, %v623
    %v626 = vtanh.pop %v625
    %628 = vrot.lane.b32.xlu0 %v626, 64
    %v629 = vpop.permute.xlu0 %628
    %v631 = vmul.f32 %v613, %v629
    %v632 = vxor.u32 %v607, 2147483648
    %v633 = vmul.f32 %v632, 1.442695
    %v634 = vpow.pop %v633
    %v635 = vadd.f32 %v634, 1.0
    %v636 = vrcp.pop %v635
    %v637 = vmul.f32 1.0, %v636
    %v638 = vtanh.pop %v607
    %v639 = vmul.f32 %v637, %v437
    %641 = vrot.lane.b32.xlu0 %v638, 64
    %v642 = vpop.permute.xlu0 %641
    %v644 = vmul.f32 %v637, %v642
    %646 = vrot.lane.b32.xlu0 %v644, 32
    %v647 = vpop.permute.xlu0 %646
    %v649 = vadd.f32 %v639, %v647
    %v650 = vtanh.pop %v649
    %652 = vrot.lane.b32.xlu0 %v650, 64
    %v653 = vpop.permute.xlu0 %652
    %v655 = vmul.f32 %v637, %v653
    %657 = vrot.lane.b32.xlu0 %v631, 32
    %v658 = vpop.permute.xlu0 %657
    %s660 = scalar_lea.vmem %s6, 4
    %661 = vst.msk [vmem:[%s660] sm:$0x3] %vm235, %v658
    %663 = vrot.lane.b32.xlu0 %v655, 64
    %v664 = vpop.permute.xlu0 %663
    %s666 = scalar_lea.vmem %s6, 10
    %667 = vst.msk [vmem:[%s666] sm:$0x3] %vm242, %v664
    %s668 = scalar_lea.vmem %s0, 6
    %v669 = vld [vmem:[%s668] sm:$0x3]
    %v670 = vsel %vm35, %v658, 0
    %672 = vmatprep.subr.mxu0 0.0
    %673 = vmatpush1.msra.mxu0 0.0
    %674 = vmatprep.subr.mxu0 0.0
    %675 = vmatpush1.msra.mxu0 0.0
    %676 = vmatprep.subr.mxu0 0.0
    %677 = vmatpush1.msra.mxu0 0.0
    %678 = vmatprep.subr.mxu0 0.0
    %679 = vmatpush1.msra.mxu0 0.0
    %680 = vmatprep.subr.mxu0 0.0
    %681 = vmatpush1.msra.mxu0 0.0
    %682 = vmatprep.subr.mxu0 0.0
    %683 = vmatpush1.msra.mxu0 0.0
    %684 = vmatprep.subr.mxu0 0.0
    %685 = vmatpush1.msra.mxu0 0.0
    %686 = vmatprep.subr.mxu0 0.0
    %687 = vmatpush1.msra.mxu0 0.0
    %688 = vmatprep.subr.mxu0 0.0
    %689 = vmatpush1.msra.mxu0 0.0
    %690 = vmatprep.subr.mxu0 0.0
    %691 = vmatpush1.msra.mxu0 0.0
    %692 = vmatprep.subr.mxu0 0.0
    %693 = vmatpush1.msra.mxu0 0.0
    %694 = vmatprep.subr.mxu0 0.0
    %695 = vmatpush1.msra.mxu0 0.0
    %696 = vmatprep.subr.mxu0 0.0
    %697 = vmatpush1.msra.mxu0 %v29
    %698 = vmatprep.subr.mxu0 0.0
    %699 = vmatpush1.msra.mxu0 %v28
    %700 = vmatprep.subr.mxu0 0.0
    %701 = vmatpush1.msra.mxu0 %v27
    %702 = vmatprep.subr.mxu0 0.0
    %703 = vmatpush1.msra.mxu0 %v26
    %704 = vmatprep.subr.mxu0 0.0
    %705 = vmatpush2.msra.mxu0 0.0
    %706 = vmatprep.subr.mxu0 0.0
    %707 = vmatpush2.msra.mxu0 0.0
    %708 = vmatprep.subr.mxu0 0.0
    %709 = vmatpush2.msra.mxu0 0.0
    %710 = vmatprep.subr.mxu0 0.0
    %711 = vmatpush2.msra.mxu0 0.0
    %712 = vmatprep.subr.mxu0 0.0
    %713 = vmatpush2.msra.mxu0 0.0
    %714 = vmatprep.subr.mxu0 0.0
    %715 = vmatpush2.msra.mxu0 0.0
    %716 = vmatprep.subr.mxu0 0.0
    %717 = vmatpush2.msra.mxu0 0.0
    %718 = vmatprep.subr.mxu0 0.0
    %719 = vmatpush2.msra.mxu0 0.0
    %720 = vmatprep.subr.mxu0 0.0
    %721 = vmatpush2.msra.mxu0 0.0
    %722 = vmatprep.subr.mxu0 0.0
    %723 = vmatpush2.msra.mxu0 0.0
    %724 = vmatprep.subr.mxu0 0.0
    %725 = vmatpush2.msra.mxu0 0.0
    %726 = vmatprep.subr.mxu0 0.0
    %727 = vmatpush2.msra.mxu0 0.0
    %728 = vmatprep.subr.mxu0 0.0
    %729 = vmatpush2.msra.mxu0 0.0
    %730 = vmatprep.subr.mxu0 0.0
    %731 = vmatpush2.msra.mxu0 0.0
    %732 = vmatprep.subr.mxu0 0.0
    %733 = vmatpush2.msra.mxu0 0.0
    %734 = vmatprep.subr.mxu0 0.0
    %735 = vmatpush2.msra.mxu0 0.0
    %736 = vmatprep.mubr.f32.mxu0 0.0
    %737 = vmatmul.mubr.f32.gmra.mxu0 %v670
    %v738 = vpop.f32.mrf.mxu0
    %v739 = vadd.f32 0.0, %v738
    %v740 = vpop.f32.mrf.mxu0
    %741 = vdwg.mxu0
    %v742 = vadd.f32 %v669, %v739
    %s743 = scalar_lea.vmem %s1, 8
    %v744 = vld [vmem:[%s743] sm:$0x3]
    %745 = vrot.lane.b32.xlu0 %v655, 32
    %v746 = vpop.permute.xlu0 %745
    %v747 = vsel %vm35, %v746, 0
    %749 = vmatprep.subr.mxu0 0.0
    %750 = vmatpush1.msra.mxu0 0.0
    %751 = vmatprep.subr.mxu0 0.0
    %752 = vmatpush1.msra.mxu0 0.0
    %753 = vmatprep.subr.mxu0 0.0
    %754 = vmatpush1.msra.mxu0 0.0
    %755 = vmatprep.subr.mxu0 0.0
    %756 = vmatpush1.msra.mxu0 0.0
    %757 = vmatprep.subr.mxu0 0.0
    %758 = vmatpush1.msra.mxu0 0.0
    %759 = vmatprep.subr.mxu0 0.0
    %760 = vmatpush1.msra.mxu0 0.0
    %761 = vmatprep.subr.mxu0 0.0
    %762 = vmatpush1.msra.mxu0 0.0
    %763 = vmatprep.subr.mxu0 0.0
    %764 = vmatpush1.msra.mxu0 0.0
    %765 = vmatprep.subr.mxu0 0.0
    %766 = vmatpush1.msra.mxu0 0.0
    %767 = vmatprep.subr.mxu0 0.0
    %768 = vmatpush1.msra.mxu0 0.0
    %769 = vmatprep.subr.mxu0 0.0
    %770 = vmatpush1.msra.mxu0 0.0
    %771 = vmatprep.subr.mxu0 0.0
    %772 = vmatpush1.msra.mxu0 0.0
    %773 = vmatprep.subr.mxu0 0.0
    %774 = vmatpush1.msra.mxu0 %v33
    %775 = vmatprep.subr.mxu0 0.0
    %776 = vmatpush1.msra.mxu0 %v32
    %777 = vmatprep.subr.mxu0 0.0
    %778 = vmatpush1.msra.mxu0 %v31
    %779 = vmatprep.subr.mxu0 0.0
    %780 = vmatpush1.msra.mxu0 %v30
    %781 = vmatprep.subr.mxu0 0.0
    %782 = vmatpush2.msra.mxu0 0.0
    %783 = vmatprep.subr.mxu0 0.0
    %784 = vmatpush2.msra.mxu0 0.0
    %785 = vmatprep.subr.mxu0 0.0
    %786 = vmatpush2.msra.mxu0 0.0
    %787 = vmatprep.subr.mxu0 0.0
    %788 = vmatpush2.msra.mxu0 0.0
    %789 = vmatprep.subr.mxu0 0.0
    %790 = vmatpush2.msra.mxu0 0.0
    %791 = vmatprep.subr.mxu0 0.0
    %792 = vmatpush2.msra.mxu0 0.0
    %793 = vmatprep.subr.mxu0 0.0
    %794 = vmatpush2.msra.mxu0 0.0
    %795 = vmatprep.subr.mxu0 0.0
    %796 = vmatpush2.msra.mxu0 0.0
    %797 = vmatprep.subr.mxu0 0.0
    %798 = vmatpush2.msra.mxu0 0.0
    %799 = vmatprep.subr.mxu0 0.0
    %800 = vmatpush2.msra.mxu0 0.0
    %801 = vmatprep.subr.mxu0 0.0
    %802 = vmatpush2.msra.mxu0 0.0
    %803 = vmatprep.subr.mxu0 0.0
    %804 = vmatpush2.msra.mxu0 0.0
    %805 = vmatprep.subr.mxu0 0.0
    %806 = vmatpush2.msra.mxu0 0.0
    %807 = vmatprep.subr.mxu0 0.0
    %808 = vmatpush2.msra.mxu0 0.0
    %809 = vmatprep.subr.mxu0 0.0
    %810 = vmatpush2.msra.mxu0 0.0
    %811 = vmatprep.subr.mxu0 0.0
    %812 = vmatpush2.msra.mxu0 0.0
    %813 = vmatprep.mubr.f32.mxu0 0.0
    %814 = vmatmul.mubr.f32.gmra.mxu0 %v747
    %v815 = vpop.f32.mrf.mxu0
    %v816 = vadd.f32 0.0, %v815
    %v817 = vpop.f32.mrf.mxu0
    %818 = vdwg.mxu0
    %v819 = vadd.f32 %v744, %v816
    %v820 = vxor.u32 %v742, 2147483648
    %v821 = vmul.f32 %v820, 1.442695
    %v822 = vpow.pop %v821
    %v823 = vadd.f32 %v822, 1.0
    %v824 = vrcp.pop %v823
    %v825 = vmul.f32 1.0, %v824
    %v826 = vtanh.pop %v742
    %v827 = vmul.f32 %v825, %v625
    %829 = vrot.lane.b32.xlu0 %v826, 64
    %v830 = vpop.permute.xlu0 %829
    %v832 = vmul.f32 %v825, %v830
    %834 = vrot.lane.b32.xlu0 %v832, 32
    %v835 = vpop.permute.xlu0 %834
    %v837 = vadd.f32 %v827, %v835
    %v838 = vtanh.pop %v837
    %840 = vrot.lane.b32.xlu0 %v838, 64
    %v841 = vpop.permute.xlu0 %840
    %v843 = vmul.f32 %v825, %v841
    %v844 = vxor.u32 %v819, 2147483648
    %v845 = vmul.f32 %v844, 1.442695
    %v846 = vpow.pop %v845
    %v847 = vadd.f32 %v846, 1.0
    %v848 = vrcp.pop %v847
    %v849 = vmul.f32 1.0, %v848
    %v850 = vtanh.pop %v819
    %v851 = vmul.f32 %v849, %v649
    %853 = vrot.lane.b32.xlu0 %v850, 64
    %v854 = vpop.permute.xlu0 %853
    %v856 = vmul.f32 %v849, %v854
    %858 = vrot.lane.b32.xlu0 %v856, 32
    %v859 = vpop.permute.xlu0 %858
    %v861 = vadd.f32 %v851, %v859
    %v862 = vtanh.pop %v861
    %864 = vrot.lane.b32.xlu0 %v862, 64
    %v865 = vpop.permute.xlu0 %864
    %v867 = vmul.f32 %v849, %v865
    %869 = vrot.lane.b32.xlu0 %v843, 32
    %v870 = vpop.permute.xlu0 %869
    %s872 = scalar_lea.vmem %s6, 6
    %873 = vst.msk [vmem:[%s872] sm:$0x3] %vm235, %v870
    %875 = vrot.lane.b32.xlu0 %v867, 64
    %v876 = vpop.permute.xlu0 %875
    %s878 = scalar_lea.vmem %s6, 8
    %879 = vst.msk [vmem:[%s878] sm:$0x3] %vm242, %v876
    %s880 = scalar_lea.vmem %s0, 8
    %v881 = vld [vmem:[%s880] sm:$0x3]
    %v882 = vsel %vm35, %v870, 0
    %884 = vmatprep.subr.mxu0 0.0
    %885 = vmatpush1.msra.mxu0 0.0
    %886 = vmatprep.subr.mxu0 0.0
    %887 = vmatpush1.msra.mxu0 0.0
    %888 = vmatprep.subr.mxu0 0.0
    %889 = vmatpush1.msra.mxu0 0.0
    %890 = vmatprep.subr.mxu0 0.0
    %891 = vmatpush1.msra.mxu0 0.0
    %892 = vmatprep.subr.mxu0 0.0
    %893 = vmatpush1.msra.mxu0 0.0
    %894 = vmatprep.subr.mxu0 0.0
    %895 = vmatpush1.msra.mxu0 0.0
    %896 = vmatprep.subr.mxu0 0.0
    %897 = vmatpush1.msra.mxu0 0.0
    %898 = vmatprep.subr.mxu0 0.0
    %899 = vmatpush1.msra.mxu0 0.0
    %900 = vmatprep.subr.mxu0 0.0
    %901 = vmatpush1.msra.mxu0 0.0
    %902 = vmatprep.subr.mxu0 0.0
    %903 = vmatpush1.msra.mxu0 0.0
    %904 = vmatprep.subr.mxu0 0.0
    %905 = vmatpush1.msra.mxu0 0.0
    %906 = vmatprep.subr.mxu0 0.0
    %907 = vmatpush1.msra.mxu0 0.0
    %908 = vmatprep.subr.mxu0 0.0
    %909 = vmatpush1.msra.mxu0 %v29
    %910 = vmatprep.subr.mxu0 0.0
    %911 = vmatpush1.msra.mxu0 %v28
    %912 = vmatprep.subr.mxu0 0.0
    %913 = vmatpush1.msra.mxu0 %v27
    %914 = vmatprep.subr.mxu0 0.0
    %915 = vmatpush1.msra.mxu0 %v26
    %916 = vmatprep.subr.mxu0 0.0
    %917 = vmatpush2.msra.mxu0 0.0
    %918 = vmatprep.subr.mxu0 0.0
    %919 = vmatpush2.msra.mxu0 0.0
    %920 = vmatprep.subr.mxu0 0.0
    %921 = vmatpush2.msra.mxu0 0.0
    %922 = vmatprep.subr.mxu0 0.0
    %923 = vmatpush2.msra.mxu0 0.0
    %924 = vmatprep.subr.mxu0 0.0
    %925 = vmatpush2.msra.mxu0 0.0
    %926 = vmatprep.subr.mxu0 0.0
    %927 = vmatpush2.msra.mxu0 0.0
    %928 = vmatprep.subr.mxu0 0.0
    %929 = vmatpush2.msra.mxu0 0.0
    %930 = vmatprep.subr.mxu0 0.0
    %931 = vmatpush2.msra.mxu0 0.0
    %932 = vmatprep.subr.mxu0 0.0
    %933 = vmatpush2.msra.mxu0 0.0
    %934 = vmatprep.subr.mxu0 0.0
    %935 = vmatpush2.msra.mxu0 0.0
    %936 = vmatprep.subr.mxu0 0.0
    %937 = vmatpush2.msra.mxu0 0.0
    %938 = vmatprep.subr.mxu0 0.0
    %939 = vmatpush2.msra.mxu0 0.0
    %940 = vmatprep.subr.mxu0 0.0
    %941 = vmatpush2.msra.mxu0 0.0
    %942 = vmatprep.subr.mxu0 0.0
    %943 = vmatpush2.msra.mxu0 0.0
    %944 = vmatprep.subr.mxu0 0.0
    %945 = vmatpush2.msra.mxu0 0.0
    %946 = vmatprep.subr.mxu0 0.0
    %947 = vmatpush2.msra.mxu0 0.0
    %948 = vmatprep.mubr.f32.mxu0 0.0
    %949 = vmatmul.mubr.f32.gmra.mxu0 %v882
    %v950 = vpop.f32.mrf.mxu0
    %v951 = vadd.f32 0.0, %v950
    %v952 = vpop.f32.mrf.mxu0
    %953 = vdwg.mxu0
    %v954 = vadd.f32 %v881, %v951
    %s955 = scalar_lea.vmem %s1, 6
    %v956 = vld [vmem:[%s955] sm:$0x3]
    %957 = vrot.lane.b32.xlu0 %v867, 32
    %v958 = vpop.permute.xlu0 %957
    %v959 = vsel %vm35, %v958, 0
    %961 = vmatprep.subr.mxu0 0.0
    %962 = vmatpush1.msra.mxu0 0.0
    %963 = vmatprep.subr.mxu0 0.0
    %964 = vmatpush1.msra.mxu0 0.0
    %965 = vmatprep.subr.mxu0 0.0
    %966 = vmatpush1.msra.mxu0 0.0
    %967 = vmatprep.subr.mxu0 0.0
    %968 = vmatpush1.msra.mxu0 0.0
    %969 = vmatprep.subr.mxu0 0.0
    %970 = vmatpush1.msra.mxu0 0.0
    %971 = vmatprep.subr.mxu0 0.0
    %972 = vmatpush1.msra.mxu0 0.0
    %973 = vmatprep.subr.mxu0 0.0
    %974 = vmatpush1.msra.mxu0 0.0
    %975 = vmatprep.subr.mxu0 0.0
    %976 = vmatpush1.msra.mxu0 0.0
    %977 = vmatprep.subr.mxu0 0.0
    %978 = vmatpush1.msra.mxu0 0.0
    %979 = vmatprep.subr.mxu0 0.0
    %980 = vmatpush1.msra.mxu0 0.0
    %981 = vmatprep.subr.mxu0 0.0
    %982 = vmatpush1.msra.mxu0 0.0
    %983 = vmatprep.subr.mxu0 0.0
    %984 = vmatpush1.msra.mxu0 0.0
    %985 = vmatprep.subr.mxu0 0.0
    %986 = vmatpush1.msra.mxu0 %v33
    %987 = vmatprep.subr.mxu0 0.0
    %988 = vmatpush1.msra.mxu0 %v32
    %989 = vmatprep.subr.mxu0 0.0
    %990 = vmatpush1.msra.mxu0 %v31
    %991 = vmatprep.subr.mxu0 0.0
    %992 = vmatpush1.msra.mxu0 %v30
    %993 = vmatprep.subr.mxu0 0.0
    %994 = vmatpush2.msra.mxu0 0.0
    %995 = vmatprep.subr.mxu0 0.0
    %996 = vmatpush2.msra.mxu0 0.0
    %997 = vmatprep.subr.mxu0 0.0
    %998 = vmatpush2.msra.mxu0 0.0
    %999 = vmatprep.subr.mxu0 0.0
    %1000 = vmatpush2.msra.mxu0 0.0
    %1001 = vmatprep.subr.mxu0 0.0
    %1002 = vmatpush2.msra.mxu0 0.0
    %1003 = vmatprep.subr.mxu0 0.0
    %1004 = vmatpush2.msra.mxu0 0.0
    %1005 = vmatprep.subr.mxu0 0.0
    %1006 = vmatpush2.msra.mxu0 0.0
    %1007 = vmatprep.subr.mxu0 0.0
    %1008 = vmatpush2.msra.mxu0 0.0
    %1009 = vmatprep.subr.mxu0 0.0
    %1010 = vmatpush2.msra.mxu0 0.0
    %1011 = vmatprep.subr.mxu0 0.0
    %1012 = vmatpush2.msra.mxu0 0.0
    %1013 = vmatprep.subr.mxu0 0.0
    %1014 = vmatpush2.msra.mxu0 0.0
    %1015 = vmatprep.subr.mxu0 0.0
    %1016 = vmatpush2.msra.mxu0 0.0
    %1017 = vmatprep.subr.mxu0 0.0
    %1018 = vmatpush2.msra.mxu0 0.0
    %1019 = vmatprep.subr.mxu0 0.0
    %1020 = vmatpush2.msra.mxu0 0.0
    %1021 = vmatprep.subr.mxu0 0.0
    %1022 = vmatpush2.msra.mxu0 0.0
    %1023 = vmatprep.subr.mxu0 0.0
    %1024 = vmatpush2.msra.mxu0 0.0
    %1025 = vmatprep.mubr.f32.mxu0 0.0
    %1026 = vmatmul.mubr.f32.gmra.mxu0 %v959
    %v1027 = vpop.f32.mrf.mxu0
    %v1028 = vadd.f32 0.0, %v1027
    %v1029 = vpop.f32.mrf.mxu0
    %1030 = vdwg.mxu0
    %v1031 = vadd.f32 %v956, %v1028
    %v1032 = vxor.u32 %v954, 2147483648
    %v1033 = vmul.f32 %v1032, 1.442695
    %v1034 = vpow.pop %v1033
    %v1035 = vadd.f32 %v1034, 1.0
    %v1036 = vrcp.pop %v1035
    %v1037 = vmul.f32 1.0, %v1036
    %v1038 = vtanh.pop %v954
    %v1039 = vmul.f32 %v1037, %v837
    %1041 = vrot.lane.b32.xlu0 %v1038, 64
    %v1042 = vpop.permute.xlu0 %1041
    %v1044 = vmul.f32 %v1037, %v1042
    %1046 = vrot.lane.b32.xlu0 %v1044, 32
    %v1047 = vpop.permute.xlu0 %1046
    %v1049 = vadd.f32 %v1039, %v1047
    %v1050 = vtanh.pop %v1049
    %1052 = vrot.lane.b32.xlu0 %v1050, 64
    %v1053 = vpop.permute.xlu0 %1052
    %v1055 = vmul.f32 %v1037, %v1053
    %v1056 = vxor.u32 %v1031, 2147483648
    %v1057 = vmul.f32 %v1056, 1.442695
    %v1058 = vpow.pop %v1057
    %v1059 = vadd.f32 %v1058, 1.0
    %v1060 = vrcp.pop %v1059
    %v1061 = vmul.f32 1.0, %v1060
    %v1062 = vtanh.pop %v1031
    %v1063 = vmul.f32 %v1061, %v861
    %1065 = vrot.lane.b32.xlu0 %v1062, 64
    %v1066 = vpop.permute.xlu0 %1065
    %v1068 = vmul.f32 %v1061, %v1066
    %1070 = vrot.lane.b32.xlu0 %v1068, 32
    %v1071 = vpop.permute.xlu0 %1070
    %v1073 = vadd.f32 %v1063, %v1071
    %v1074 = vtanh.pop %v1073
    %1076 = vrot.lane.b32.xlu0 %v1074, 64
    %v1077 = vpop.permute.xlu0 %1076
    %v1079 = vmul.f32 %v1061, %v1077
    %1081 = vrot.lane.b32.xlu0 %v1055, 32
    %v1082 = vpop.permute.xlu0 %1081
    %1084 = vst.msk [vmem:[%s878] sm:$0x3] %vm235, %v1082
    %1086 = vrot.lane.b32.xlu0 %v1079, 64
    %v1087 = vpop.permute.xlu0 %1086
    %1089 = vst.msk [vmem:[%s872] sm:$0x3] %vm242, %v1087
    %s1090 = scalar_lea.vmem %s0, 10
    %v1091 = vld [vmem:[%s1090] sm:$0x3]
    %v1092 = vsel %vm35, %v1082, 0
    %1094 = vmatprep.subr.mxu0 0.0
    %1095 = vmatpush1.msra.mxu0 0.0
    %1096 = vmatprep.subr.mxu0 0.0
    %1097 = vmatpush1.msra.mxu0 0.0
    %1098 = vmatprep.subr.mxu0 0.0
    %1099 = vmatpush1.msra.mxu0 0.0
    %1100 = vmatprep.subr.mxu0 0.0
    %1101 = vmatpush1.msra.mxu0 0.0
    %1102 = vmatprep.subr.mxu0 0.0
    %1103 = vmatpush1.msra.mxu0 0.0
    %1104 = vmatprep.subr.mxu0 0.0
    %1105 = vmatpush1.msra.mxu0 0.0
    %1106 = vmatprep.subr.mxu0 0.0
    %1107 = vmatpush1.msra.mxu0 0.0
    %1108 = vmatprep.subr.mxu0 0.0
    %1109 = vmatpush1.msra.mxu0 0.0
    %1110 = vmatprep.subr.mxu0 0.0
    %1111 = vmatpush1.msra.mxu0 0.0
    %1112 = vmatprep.subr.mxu0 0.0
    %1113 = vmatpush1.msra.mxu0 0.0
    %1114 = vmatprep.subr.mxu0 0.0
    %1115 = vmatpush1.msra.mxu0 0.0
    %1116 = vmatprep.subr.mxu0 0.0
    %1117 = vmatpush1.msra.mxu0 0.0
    %1118 = vmatprep.subr.mxu0 0.0
    %1119 = vmatpush1.msra.mxu0 %v29
    %1120 = vmatprep.subr.mxu0 0.0
    %1121 = vmatpush1.msra.mxu0 %v28
    %1122 = vmatprep.subr.mxu0 0.0
    %1123 = vmatpush1.msra.mxu0 %v27
    %1124 = vmatprep.subr.mxu0 0.0
    %1125 = vmatpush1.msra.mxu0 %v26
    %1126 = vmatprep.subr.mxu0 0.0
    %1127 = vmatpush2.msra.mxu0 0.0
    %1128 = vmatprep.subr.mxu0 0.0
    %1129 = vmatpush2.msra.mxu0 0.0
    %1130 = vmatprep.subr.mxu0 0.0
    %1131 = vmatpush2.msra.mxu0 0.0
    %1132 = vmatprep.subr.mxu0 0.0
    %1133 = vmatpush2.msra.mxu0 0.0
    %1134 = vmatprep.subr.mxu0 0.0
    %1135 = vmatpush2.msra.mxu0 0.0
    %1136 = vmatprep.subr.mxu0 0.0
    %1137 = vmatpush2.msra.mxu0 0.0
    %1138 = vmatprep.subr.mxu0 0.0
    %1139 = vmatpush2.msra.mxu0 0.0
    %1140 = vmatprep.subr.mxu0 0.0
    %1141 = vmatpush2.msra.mxu0 0.0
    %1142 = vmatprep.subr.mxu0 0.0
    %1143 = vmatpush2.msra.mxu0 0.0
    %1144 = vmatprep.subr.mxu0 0.0
    %1145 = vmatpush2.msra.mxu0 0.0
    %1146 = vmatprep.subr.mxu0 0.0
    %1147 = vmatpush2.msra.mxu0 0.0
    %1148 = vmatprep.subr.mxu0 0.0
    %1149 = vmatpush2.msra.mxu0 0.0
    %1150 = vmatprep.subr.mxu0 0.0
    %1151 = vmatpush2.msra.mxu0 0.0
    %1152 = vmatprep.subr.mxu0 0.0
    %1153 = vmatpush2.msra.mxu0 0.0
    %1154 = vmatprep.subr.mxu0 0.0
    %1155 = vmatpush2.msra.mxu0 0.0
    %1156 = vmatprep.subr.mxu0 0.0
    %1157 = vmatpush2.msra.mxu0 0.0
    %1158 = vmatprep.mubr.f32.mxu0 0.0
    %1159 = vmatmul.mubr.f32.gmra.mxu0 %v1092
    %v1160 = vpop.f32.mrf.mxu0
    %v1161 = vadd.f32 0.0, %v1160
    %v1162 = vpop.f32.mrf.mxu0
    %1163 = vdwg.mxu0
    %v1164 = vadd.f32 %v1091, %v1161
    %s1165 = scalar_lea.vmem %s1, 4
    %v1166 = vld [vmem:[%s1165] sm:$0x3]
    %1167 = vrot.lane.b32.xlu0 %v1079, 32
    %v1168 = vpop.permute.xlu0 %1167
    %v1169 = vsel %vm35, %v1168, 0
    %1171 = vmatprep.subr.mxu0 0.0
    %1172 = vmatpush1.msra.mxu0 0.0
    %1173 = vmatprep.subr.mxu0 0.0
    %1174 = vmatpush1.msra.mxu0 0.0
    %1175 = vmatprep.subr.mxu0 0.0
    %1176 = vmatpush1.msra.mxu0 0.0
    %1177 = vmatprep.subr.mxu0 0.0
    %1178 = vmatpush1.msra.mxu0 0.0
    %1179 = vmatprep.subr.mxu0 0.0
    %1180 = vmatpush1.msra.mxu0 0.0
    %1181 = vmatprep.subr.mxu0 0.0
    %1182 = vmatpush1.msra.mxu0 0.0
    %1183 = vmatprep.subr.mxu0 0.0
    %1184 = vmatpush1.msra.mxu0 0.0
    %1185 = vmatprep.subr.mxu0 0.0
    %1186 = vmatpush1.msra.mxu0 0.0
    %1187 = vmatprep.subr.mxu0 0.0
    %1188 = vmatpush1.msra.mxu0 0.0
    %1189 = vmatprep.subr.mxu0 0.0
    %1190 = vmatpush1.msra.mxu0 0.0
    %1191 = vmatprep.subr.mxu0 0.0
    %1192 = vmatpush1.msra.mxu0 0.0
    %1193 = vmatprep.subr.mxu0 0.0
    %1194 = vmatpush1.msra.mxu0 0.0
    %1195 = vmatprep.subr.mxu0 0.0
    %1196 = vmatpush1.msra.mxu0 %v33
    %1197 = vmatprep.subr.mxu0 0.0
    %1198 = vmatpush1.msra.mxu0 %v32
    %1199 = vmatprep.subr.mxu0 0.0
    %1200 = vmatpush1.msra.mxu0 %v31
    %1201 = vmatprep.subr.mxu0 0.0
    %1202 = vmatpush1.msra.mxu0 %v30
    %1203 = vmatprep.subr.mxu0 0.0
    %1204 = vmatpush2.msra.mxu0 0.0
    %1205 = vmatprep.subr.mxu0 0.0
    %1206 = vmatpush2.msra.mxu0 0.0
    %1207 = vmatprep.subr.mxu0 0.0
    %1208 = vmatpush2.msra.mxu0 0.0
    %1209 = vmatprep.subr.mxu0 0.0
    %1210 = vmatpush2.msra.mxu0 0.0
    %1211 = vmatprep.subr.mxu0 0.0
    %1212 = vmatpush2.msra.mxu0 0.0
    %1213 = vmatprep.subr.mxu0 0.0
    %1214 = vmatpush2.msra.mxu0 0.0
    %1215 = vmatprep.subr.mxu0 0.0
    %1216 = vmatpush2.msra.mxu0 0.0
    %1217 = vmatprep.subr.mxu0 0.0
    %1218 = vmatpush2.msra.mxu0 0.0
    %1219 = vmatprep.subr.mxu0 0.0
    %1220 = vmatpush2.msra.mxu0 0.0
    %1221 = vmatprep.subr.mxu0 0.0
    %1222 = vmatpush2.msra.mxu0 0.0
    %1223 = vmatprep.subr.mxu0 0.0
    %1224 = vmatpush2.msra.mxu0 0.0
    %1225 = vmatprep.subr.mxu0 0.0
    %1226 = vmatpush2.msra.mxu0 0.0
    %1227 = vmatprep.subr.mxu0 0.0
    %1228 = vmatpush2.msra.mxu0 0.0
    %1229 = vmatprep.subr.mxu0 0.0
    %1230 = vmatpush2.msra.mxu0 0.0
    %1231 = vmatprep.subr.mxu0 0.0
    %1232 = vmatpush2.msra.mxu0 0.0
    %1233 = vmatprep.subr.mxu0 0.0
    %1234 = vmatpush2.msra.mxu0 0.0
    %1235 = vmatprep.mubr.f32.mxu0 0.0
    %1236 = vmatmul.mubr.f32.gmra.mxu0 %v1169
    %v1237 = vpop.f32.mrf.mxu0
    %v1238 = vadd.f32 0.0, %v1237
    %v1239 = vpop.f32.mrf.mxu0
    %1240 = vdwg.mxu0
    %v1241 = vadd.f32 %v1166, %v1238
    %v1242 = vxor.u32 %v1164, 2147483648
    %v1243 = vmul.f32 %v1242, 1.442695
    %v1244 = vpow.pop %v1243
    %v1245 = vadd.f32 %v1244, 1.0
    %v1246 = vrcp.pop %v1245
    %v1247 = vmul.f32 1.0, %v1246
    %v1248 = vtanh.pop %v1164
    %v1249 = vmul.f32 %v1247, %v1049
    %1251 = vrot.lane.b32.xlu0 %v1248, 64
    %v1252 = vpop.permute.xlu0 %1251
    %v1254 = vmul.f32 %v1247, %v1252
    %1256 = vrot.lane.b32.xlu0 %v1254, 32
    %v1257 = vpop.permute.xlu0 %1256
    %v1259 = vadd.f32 %v1249, %v1257
    %v1260 = vtanh.pop %v1259
    %1262 = vrot.lane.b32.xlu0 %v1260, 64
    %v1263 = vpop.permute.xlu0 %1262
    %v1265 = vmul.f32 %v1247, %v1263
    %v1266 = vxor.u32 %v1241, 2147483648
    %v1267 = vmul.f32 %v1266, 1.442695
    %v1268 = vpow.pop %v1267
    %v1269 = vadd.f32 %v1268, 1.0
    %v1270 = vrcp.pop %v1269
    %v1271 = vmul.f32 1.0, %v1270
    %v1272 = vtanh.pop %v1241
    %v1273 = vmul.f32 %v1271, %v1073
    %1275 = vrot.lane.b32.xlu0 %v1272, 64
    %v1276 = vpop.permute.xlu0 %1275
    %v1278 = vmul.f32 %v1271, %v1276
    %1280 = vrot.lane.b32.xlu0 %v1278, 32
    %v1281 = vpop.permute.xlu0 %1280
    %v1283 = vadd.f32 %v1273, %v1281
    %v1284 = vtanh.pop %v1283
    %1286 = vrot.lane.b32.xlu0 %v1284, 64
    %v1287 = vpop.permute.xlu0 %1286
    %v1289 = vmul.f32 %v1271, %v1287
    %1291 = vrot.lane.b32.xlu0 %v1265, 32
    %v1292 = vpop.permute.xlu0 %1291
    %1294 = vst.msk [vmem:[%s666] sm:$0x3] %vm235, %v1292
    %1296 = vrot.lane.b32.xlu0 %v1289, 64
    %v1297 = vpop.permute.xlu0 %1296
    %1299 = vst.msk [vmem:[%s660] sm:$0x3] %vm242, %v1297
    %s1300 = scalar_lea.vmem %s0, 12
    %v1301 = vld [vmem:[%s1300] sm:$0x3]
    %v1302 = vsel %vm35, %v1292, 0
    %1304 = vmatprep.subr.mxu0 0.0
    %1305 = vmatpush1.msra.mxu0 0.0
    %1306 = vmatprep.subr.mxu0 0.0
    %1307 = vmatpush1.msra.mxu0 0.0
    %1308 = vmatprep.subr.mxu0 0.0
    %1309 = vmatpush1.msra.mxu0 0.0
    %1310 = vmatprep.subr.mxu0 0.0
    %1311 = vmatpush1.msra.mxu0 0.0
    %1312 = vmatprep.subr.mxu0 0.0
    %1313 = vmatpush1.msra.mxu0 0.0
    %1314 = vmatprep.subr.mxu0 0.0
    %1315 = vmatpush1.msra.mxu0 0.0
    %1316 = vmatprep.subr.mxu0 0.0
    %1317 = vmatpush1.msra.mxu0 0.0
    %1318 = vmatprep.subr.mxu0 0.0
    %1319 = vmatpush1.msra.mxu0 0.0
    %1320 = vmatprep.subr.mxu0 0.0
    %1321 = vmatpush1.msra.mxu0 0.0
    %1322 = vmatprep.subr.mxu0 0.0
    %1323 = vmatpush1.msra.mxu0 0.0
    %1324 = vmatprep.subr.mxu0 0.0
    %1325 = vmatpush1.msra.mxu0 0.0
    %1326 = vmatprep.subr.mxu0 0.0
    %1327 = vmatpush1.msra.mxu0 0.0
    %1328 = vmatprep.subr.mxu0 0.0
    %1329 = vmatpush1.msra.mxu0 %v29
    %1330 = vmatprep.subr.mxu0 0.0
    %1331 = vmatpush1.msra.mxu0 %v28
    %1332 = vmatprep.subr.mxu0 0.0
    %1333 = vmatpush1.msra.mxu0 %v27
    %1334 = vmatprep.subr.mxu0 0.0
    %1335 = vmatpush1.msra.mxu0 %v26
    %1336 = vmatprep.subr.mxu0 0.0
    %1337 = vmatpush2.msra.mxu0 0.0
    %1338 = vmatprep.subr.mxu0 0.0
    %1339 = vmatpush2.msra.mxu0 0.0
    %1340 = vmatprep.subr.mxu0 0.0
    %1341 = vmatpush2.msra.mxu0 0.0
    %1342 = vmatprep.subr.mxu0 0.0
    %1343 = vmatpush2.msra.mxu0 0.0
    %1344 = vmatprep.subr.mxu0 0.0
    %1345 = vmatpush2.msra.mxu0 0.0
    %1346 = vmatprep.subr.mxu0 0.0
    %1347 = vmatpush2.msra.mxu0 0.0
    %1348 = vmatprep.subr.mxu0 0.0
    %1349 = vmatpush2.msra.mxu0 0.0
    %1350 = vmatprep.subr.mxu0 0.0
    %1351 = vmatpush2.msra.mxu0 0.0
    %1352 = vmatprep.subr.mxu0 0.0
    %1353 = vmatpush2.msra.mxu0 0.0
    %1354 = vmatprep.subr.mxu0 0.0
    %1355 = vmatpush2.msra.mxu0 0.0
    %1356 = vmatprep.subr.mxu0 0.0
    %1357 = vmatpush2.msra.mxu0 0.0
    %1358 = vmatprep.subr.mxu0 0.0
    %1359 = vmatpush2.msra.mxu0 0.0
    %1360 = vmatprep.subr.mxu0 0.0
    %1361 = vmatpush2.msra.mxu0 0.0
    %1362 = vmatprep.subr.mxu0 0.0
    %1363 = vmatpush2.msra.mxu0 0.0
    %1364 = vmatprep.subr.mxu0 0.0
    %1365 = vmatpush2.msra.mxu0 0.0
    %1366 = vmatprep.subr.mxu0 0.0
    %1367 = vmatpush2.msra.mxu0 0.0
    %1368 = vmatprep.mubr.f32.mxu0 0.0
    %1369 = vmatmul.mubr.f32.gmra.mxu0 %v1302
    %v1370 = vpop.f32.mrf.mxu0
    %v1371 = vadd.f32 0.0, %v1370
    %v1372 = vpop.f32.mrf.mxu0
    %1373 = vdwg.mxu0
    %v1374 = vadd.f32 %v1301, %v1371
    %s1375 = scalar_lea.vmem %s1, 2
    %v1376 = vld [vmem:[%s1375] sm:$0x3]
    %1377 = vrot.lane.b32.xlu0 %v1289, 32
    %v1378 = vpop.permute.xlu0 %1377
    %v1379 = vsel %vm35, %v1378, 0
    %1381 = vmatprep.subr.mxu0 0.0
    %1382 = vmatpush1.msra.mxu0 0.0
    %1383 = vmatprep.subr.mxu0 0.0
    %1384 = vmatpush1.msra.mxu0 0.0
    %1385 = vmatprep.subr.mxu0 0.0
    %1386 = vmatpush1.msra.mxu0 0.0
    %1387 = vmatprep.subr.mxu0 0.0
    %1388 = vmatpush1.msra.mxu0 0.0
    %1389 = vmatprep.subr.mxu0 0.0
    %1390 = vmatpush1.msra.mxu0 0.0
    %1391 = vmatprep.subr.mxu0 0.0
    %1392 = vmatpush1.msra.mxu0 0.0
    %1393 = vmatprep.subr.mxu0 0.0
    %1394 = vmatpush1.msra.mxu0 0.0
    %1395 = vmatprep.subr.mxu0 0.0
    %1396 = vmatpush1.msra.mxu0 0.0
    %1397 = vmatprep.subr.mxu0 0.0
    %1398 = vmatpush1.msra.mxu0 0.0
    %1399 = vmatprep.subr.mxu0 0.0
    %1400 = vmatpush1.msra.mxu0 0.0
    %1401 = vmatprep.subr.mxu0 0.0
    %1402 = vmatpush1.msra.mxu0 0.0
    %1403 = vmatprep.subr.mxu0 0.0
    %1404 = vmatpush1.msra.mxu0 0.0
    %1405 = vmatprep.subr.mxu0 0.0
    %1406 = vmatpush1.msra.mxu0 %v33
    %1407 = vmatprep.subr.mxu0 0.0
    %1408 = vmatpush1.msra.mxu0 %v32
    %1409 = vmatprep.subr.mxu0 0.0
    %1410 = vmatpush1.msra.mxu0 %v31
    %1411 = vmatprep.subr.mxu0 0.0
    %1412 = vmatpush1.msra.mxu0 %v30
    %1413 = vmatprep.subr.mxu0 0.0
    %1414 = vmatpush2.msra.mxu0 0.0
    %1415 = vmatprep.subr.mxu0 0.0
    %1416 = vmatpush2.msra.mxu0 0.0
    %1417 = vmatprep.subr.mxu0 0.0
    %1418 = vmatpush2.msra.mxu0 0.0
    %1419 = vmatprep.subr.mxu0 0.0
    %1420 = vmatpush2.msra.mxu0 0.0
    %1421 = vmatprep.subr.mxu0 0.0
    %1422 = vmatpush2.msra.mxu0 0.0
    %1423 = vmatprep.subr.mxu0 0.0
    %1424 = vmatpush2.msra.mxu0 0.0
    %1425 = vmatprep.subr.mxu0 0.0
    %1426 = vmatpush2.msra.mxu0 0.0
    %1427 = vmatprep.subr.mxu0 0.0
    %1428 = vmatpush2.msra.mxu0 0.0
    %1429 = vmatprep.subr.mxu0 0.0
    %1430 = vmatpush2.msra.mxu0 0.0
    %1431 = vmatprep.subr.mxu0 0.0
    %1432 = vmatpush2.msra.mxu0 0.0
    %1433 = vmatprep.subr.mxu0 0.0
    %1434 = vmatpush2.msra.mxu0 0.0
    %1435 = vmatprep.subr.mxu0 0.0
    %1436 = vmatpush2.msra.mxu0 0.0
    %1437 = vmatprep.subr.mxu0 0.0
    %1438 = vmatpush2.msra.mxu0 0.0
    %1439 = vmatprep.subr.mxu0 0.0
    %1440 = vmatpush2.msra.mxu0 0.0
    %1441 = vmatprep.subr.mxu0 0.0
    %1442 = vmatpush2.msra.mxu0 0.0
    %1443 = vmatprep.subr.mxu0 0.0
    %1444 = vmatpush2.msra.mxu0 0.0
    %1445 = vmatprep.mubr.f32.mxu0 0.0
    %1446 = vmatmul.mubr.f32.gmra.mxu0 %v1379
    %v1447 = vpop.f32.mrf.mxu0
    %v1448 = vadd.f32 0.0, %v1447
    %v1449 = vpop.f32.mrf.mxu0
    %1450 = vdwg.mxu0
    %v1451 = vadd.f32 %v1376, %v1448
    %v1452 = vxor.u32 %v1374, 2147483648
    %v1453 = vmul.f32 %v1452, 1.442695
    %v1454 = vpow.pop %v1453
    %v1455 = vadd.f32 %v1454, 1.0
    %v1456 = vrcp.pop %v1455
    %v1457 = vmul.f32 1.0, %v1456
    %v1458 = vtanh.pop %v1374
    %v1459 = vmul.f32 %v1457, %v1259
    %1461 = vrot.lane.b32.xlu0 %v1458, 64
    %v1462 = vpop.permute.xlu0 %1461
    %v1464 = vmul.f32 %v1457, %v1462
    %1466 = vrot.lane.b32.xlu0 %v1464, 32
    %v1467 = vpop.permute.xlu0 %1466
    %v1469 = vadd.f32 %v1459, %v1467
    %v1470 = vtanh.pop %v1469
    %1472 = vrot.lane.b32.xlu0 %v1470, 64
    %v1473 = vpop.permute.xlu0 %1472
    %v1475 = vmul.f32 %v1457, %v1473
    %v1476 = vxor.u32 %v1451, 2147483648
    %v1477 = vmul.f32 %v1476, 1.442695
    %v1478 = vpow.pop %v1477
    %v1479 = vadd.f32 %v1478, 1.0
    %v1480 = vrcp.pop %v1479
    %v1481 = vmul.f32 1.0, %v1480
    %v1482 = vtanh.pop %v1451
    %v1483 = vmul.f32 %v1481, %v1283
    %1485 = vrot.lane.b32.xlu0 %v1482, 64
    %v1486 = vpop.permute.xlu0 %1485
    %v1488 = vmul.f32 %v1481, %v1486
    %1490 = vrot.lane.b32.xlu0 %v1488, 32
    %v1491 = vpop.permute.xlu0 %1490
    %v1493 = vadd.f32 %v1483, %v1491
    %v1494 = vtanh.pop %v1493
    %1496 = vrot.lane.b32.xlu0 %v1494, 64
    %v1497 = vpop.permute.xlu0 %1496
    %v1499 = vmul.f32 %v1481, %v1497
    %1501 = vrot.lane.b32.xlu0 %v1475, 32
    %v1502 = vpop.permute.xlu0 %1501
    %1504 = vst.msk [vmem:[%s454] sm:$0x3] %vm235, %v1502
    %1506 = vrot.lane.b32.xlu0 %v1499, 64
    %v1507 = vpop.permute.xlu0 %1506
    %1509 = vst.msk [vmem:[%s448] sm:$0x3] %vm242, %v1507
    %s1510 = scalar_lea.vmem %s0, 14
    %v1511 = vld [vmem:[%s1510] sm:$0x3]
    %v1512 = vsel %vm35, %v1502, 0
    %1514 = vmatprep.subr.mxu0 0.0
    %1515 = vmatpush1.msra.mxu0 0.0
    %1516 = vmatprep.subr.mxu0 0.0
    %1517 = vmatpush1.msra.mxu0 0.0
    %1518 = vmatprep.subr.mxu0 0.0
    %1519 = vmatpush1.msra.mxu0 0.0
    %1520 = vmatprep.subr.mxu0 0.0
    %1521 = vmatpush1.msra.mxu0 0.0
    %1522 = vmatprep.subr.mxu0 0.0
    %1523 = vmatpush1.msra.mxu0 0.0
    %1524 = vmatprep.subr.mxu0 0.0
    %1525 = vmatpush1.msra.mxu0 0.0
    %1526 = vmatprep.subr.mxu0 0.0
    %1527 = vmatpush1.msra.mxu0 0.0
    %1528 = vmatprep.subr.mxu0 0.0
    %1529 = vmatpush1.msra.mxu0 0.0
    %1530 = vmatprep.subr.mxu0 0.0
    %1531 = vmatpush1.msra.mxu0 0.0
    %1532 = vmatprep.subr.mxu0 0.0
    %1533 = vmatpush1.msra.mxu0 0.0
    %1534 = vmatprep.subr.mxu0 0.0
    %1535 = vmatpush1.msra.mxu0 0.0
    %1536 = vmatprep.subr.mxu0 0.0
    %1537 = vmatpush1.msra.mxu0 0.0
    %1538 = vmatprep.subr.mxu0 0.0
    %1539 = vmatpush1.msra.mxu0 %v29
    %1540 = vmatprep.subr.mxu0 0.0
    %1541 = vmatpush1.msra.mxu0 %v28
    %1542 = vmatprep.subr.mxu0 0.0
    %1543 = vmatpush1.msra.mxu0 %v27
    %1544 = vmatprep.subr.mxu0 0.0
    %1545 = vmatpush1.msra.mxu0 %v26
    %1546 = vmatprep.subr.mxu0 0.0
    %1547 = vmatpush2.msra.mxu0 0.0
    %1548 = vmatprep.subr.mxu0 0.0
    %1549 = vmatpush2.msra.mxu0 0.0
    %1550 = vmatprep.subr.mxu0 0.0
    %1551 = vmatpush2.msra.mxu0 0.0
    %1552 = vmatprep.subr.mxu0 0.0
    %1553 = vmatpush2.msra.mxu0 0.0
    %1554 = vmatprep.subr.mxu0 0.0
    %1555 = vmatpush2.msra.mxu0 0.0
    %1556 = vmatprep.subr.mxu0 0.0
    %1557 = vmatpush2.msra.mxu0 0.0
    %1558 = vmatprep.subr.mxu0 0.0
    %1559 = vmatpush2.msra.mxu0 0.0
    %1560 = vmatprep.subr.mxu0 0.0
    %1561 = vmatpush2.msra.mxu0 0.0
    %1562 = vmatprep.subr.mxu0 0.0
    %1563 = vmatpush2.msra.mxu0 0.0
    %1564 = vmatprep.subr.mxu0 0.0
    %1565 = vmatpush2.msra.mxu0 0.0
    %1566 = vmatprep.subr.mxu0 0.0
    %1567 = vmatpush2.msra.mxu0 0.0
    %1568 = vmatprep.subr.mxu0 0.0
    %1569 = vmatpush2.msra.mxu0 0.0
    %1570 = vmatprep.subr.mxu0 0.0
    %1571 = vmatpush2.msra.mxu0 0.0
    %1572 = vmatprep.subr.mxu0 0.0
    %1573 = vmatpush2.msra.mxu0 0.0
    %1574 = vmatprep.subr.mxu0 0.0
    %1575 = vmatpush2.msra.mxu0 0.0
    %1576 = vmatprep.subr.mxu0 0.0
    %1577 = vmatpush2.msra.mxu0 0.0
    %1578 = vmatprep.mubr.f32.mxu0 0.0
    %1579 = vmatmul.mubr.f32.gmra.mxu0 %v1512
    %v1580 = vpop.f32.mrf.mxu0
    %v1581 = vadd.f32 0.0, %v1580
    %v1582 = vpop.f32.mrf.mxu0
    %1583 = vdwg.mxu0
    %v1584 = vadd.f32 %v1511, %v1581
    %v1585 = vld [vmem:[%s1] sm:$0x3]
    %1586 = vrot.lane.b32.xlu0 %v1499, 32
    %v1587 = vpop.permute.xlu0 %1586
    %v1588 = vsel %vm35, %v1587, 0
    %1590 = vmatprep.subr.mxu0 0.0
    %1591 = vmatpush1.msra.mxu0 0.0
    %1592 = vmatprep.subr.mxu0 0.0
    %1593 = vmatpush1.msra.mxu0 0.0
    %1594 = vmatprep.subr.mxu0 0.0
    %1595 = vmatpush1.msra.mxu0 0.0
    %1596 = vmatprep.subr.mxu0 0.0
    %1597 = vmatpush1.msra.mxu0 0.0
    %1598 = vmatprep.subr.mxu0 0.0
    %1599 = vmatpush1.msra.mxu0 0.0
    %1600 = vmatprep.subr.mxu0 0.0
    %1601 = vmatpush1.msra.mxu0 0.0
    %1602 = vmatprep.subr.mxu0 0.0
    %1603 = vmatpush1.msra.mxu0 0.0
    %1604 = vmatprep.subr.mxu0 0.0
    %1605 = vmatpush1.msra.mxu0 0.0
    %1606 = vmatprep.subr.mxu0 0.0
    %1607 = vmatpush1.msra.mxu0 0.0
    %1608 = vmatprep.subr.mxu0 0.0
    %1609 = vmatpush1.msra.mxu0 0.0
    %1610 = vmatprep.subr.mxu0 0.0
    %1611 = vmatpush1.msra.mxu0 0.0
    %1612 = vmatprep.subr.mxu0 0.0
    %1613 = vmatpush1.msra.mxu0 0.0
    %1614 = vmatprep.subr.mxu0 0.0
    %1615 = vmatpush1.msra.mxu0 %v33
    %1616 = vmatprep.subr.mxu0 0.0
    %1617 = vmatpush1.msra.mxu0 %v32
    %1618 = vmatprep.subr.mxu0 0.0
    %1619 = vmatpush1.msra.mxu0 %v31
    %1620 = vmatprep.subr.mxu0 0.0
    %1621 = vmatpush1.msra.mxu0 %v30
    %1622 = vmatprep.subr.mxu0 0.0
    %1623 = vmatpush2.msra.mxu0 0.0
    %1624 = vmatprep.subr.mxu0 0.0
    %1625 = vmatpush2.msra.mxu0 0.0
    %1626 = vmatprep.subr.mxu0 0.0
    %1627 = vmatpush2.msra.mxu0 0.0
    %1628 = vmatprep.subr.mxu0 0.0
    %1629 = vmatpush2.msra.mxu0 0.0
    %1630 = vmatprep.subr.mxu0 0.0
    %1631 = vmatpush2.msra.mxu0 0.0
    %1632 = vmatprep.subr.mxu0 0.0
    %1633 = vmatpush2.msra.mxu0 0.0
    %1634 = vmatprep.subr.mxu0 0.0
    %1635 = vmatpush2.msra.mxu0 0.0
    %1636 = vmatprep.subr.mxu0 0.0
    %1637 = vmatpush2.msra.mxu0 0.0
    %1638 = vmatprep.subr.mxu0 0.0
    %1639 = vmatpush2.msra.mxu0 0.0
    %1640 = vmatprep.subr.mxu0 0.0
    %1641 = vmatpush2.msra.mxu0 0.0
    %1642 = vmatprep.subr.mxu0 0.0
    %1643 = vmatpush2.msra.mxu0 0.0
    %1644 = vmatprep.subr.mxu0 0.0
    %1645 = vmatpush2.msra.mxu0 0.0
    %1646 = vmatprep.subr.mxu0 0.0
    %1647 = vmatpush2.msra.mxu0 0.0
    %1648 = vmatprep.subr.mxu0 0.0
    %1649 = vmatpush2.msra.mxu0 0.0
    %1650 = vmatprep.subr.mxu0 0.0
    %1651 = vmatpush2.msra.mxu0 0.0
    %1652 = vmatprep.subr.mxu0 0.0
    %1653 = vmatpush2.msra.mxu0 0.0
    %1654 = vmatprep.mubr.f32.mxu0 0.0
    %1655 = vmatmul.mubr.f32.gmra.mxu0 %v1588
    %v1656 = vpop.f32.mrf.mxu0
    %v1657 = vadd.f32 0.0, %v1656
    %v1658 = vpop.f32.mrf.mxu0
    %1659 = vdwg.mxu0
    %v1660 = vadd.f32 %v1585, %v1657
    %v1661 = vxor.u32 %v1584, 2147483648
    %v1662 = vmul.f32 %v1661, 1.442695
    %v1663 = vpow.pop %v1662
    %v1664 = vadd.f32 %v1663, 1.0
    %v1665 = vrcp.pop %v1664
    %v1666 = vmul.f32 1.0, %v1665
    %v1667 = vtanh.pop %v1584
    %v1668 = vmul.f32 %v1666, %v1469
    %1670 = vrot.lane.b32.xlu0 %v1667, 64
    %v1671 = vpop.permute.xlu0 %1670
    %v1673 = vmul.f32 %v1666, %v1671
    %1675 = vrot.lane.b32.xlu0 %v1673, 32
    %v1676 = vpop.permute.xlu0 %1675
    %v1678 = vadd.f32 %v1668, %v1676
    %v1679 = vtanh.pop %v1678
    %1681 = vrot.lane.b32.xlu0 %v1679, 64
    %v1682 = vpop.permute.xlu0 %1681
    %v1684 = vmul.f32 %v1666, %v1682
    %v1685 = vxor.u32 %v1660, 2147483648
    %v1686 = vmul.f32 %v1685, 1.442695
    %v1687 = vpow.pop %v1686
    %v1688 = vadd.f32 %v1687, 1.0
    %v1689 = vrcp.pop %v1688
    %v1690 = vmul.f32 1.0, %v1689
    %v1691 = vtanh.pop %v1660
    %v1692 = vmul.f32 %v1690, %v1493
    %1694 = vrot.lane.b32.xlu0 %v1691, 64
    %v1695 = vpop.permute.xlu0 %1694
    %v1697 = vmul.f32 %v1690, %v1695
    %1699 = vrot.lane.b32.xlu0 %v1697, 32
    %v1700 = vpop.permute.xlu0 %1699
    %v1702 = vadd.f32 %v1692, %v1700
    %v1703 = vtanh.pop %v1702
    %1705 = vrot.lane.b32.xlu0 %v1703, 64
    %v1706 = vpop.permute.xlu0 %1705
    %v1708 = vmul.f32 %v1690, %v1706
    %1710 = vrot.lane.b32.xlu0 %v1684, 32
    %v1711 = vpop.permute.xlu0 %1710
    %1713 = vst.msk [vmem:[%s241] sm:$0x3] %vm235, %v1711
    %1715 = vrot.lane.b32.xlu0 %v1708, 64
    %v1716 = vpop.permute.xlu0 %1715
    %1718 = vst.msk [vmem:[%s6] sm:$0x3] %vm242, %v1716
    %v1719 = vld [vmem:[%s241] sm:$0x3]
    %v1720 = vld [vmem:[%s4] sm:$0xff]
    %v1721 = vld [vmem:[%s4 + $0x8] sm:$0xff]
    %v1722 = vld [vmem:[%s4 + $0x10] sm:$0xff]
    %v1723 = vld [vmem:[%s4 + $0x18] sm:$0xff]
    %v1724 = vld [vmem:[%s4 + $0x20] sm:$0xff]
    %v1725 = vld [vmem:[%s4 + $0x28] sm:$0xff]
    %v1726 = vld [vmem:[%s4 + $0x30] sm:$0xff]
    %v1727 = vld [vmem:[%s4 + $0x38] sm:$0xff]
    %v1728 = vld [vmem:[%s5] sm:$0x1]
    %v1730 = vlaneseq
    %v1731 = vshrl.u32 %v1730, 7
    %v1732 = vsub.s32 0, %v1731
    %v1733 = vrot.slane %v1728, %v1732
    %vm1735 = vcmask 523264
    %v1737 = vsel %vm1735, %v1719, 0
    %1739 = vmatprep.subr.mxu0 0.0
    %1740 = vmatpush1.msra.mxu0 0.0
    %1741 = vmatprep.subr.mxu0 0.0
    %1742 = vmatpush1.msra.mxu0 0.0
    %1743 = vmatprep.subr.mxu0 0.0
    %1744 = vmatpush1.msra.mxu0 0.0
    %1745 = vmatprep.subr.mxu0 0.0
    %1746 = vmatpush1.msra.mxu0 0.0
    %1747 = vmatprep.subr.mxu0 0.0
    %1748 = vmatpush1.msra.mxu0 0.0
    %1749 = vmatprep.subr.mxu0 0.0
    %1750 = vmatpush1.msra.mxu0 0.0
    %1751 = vmatprep.subr.mxu0 0.0
    %1752 = vmatpush1.msra.mxu0 0.0
    %1753 = vmatprep.subr.mxu0 0.0
    %1754 = vmatpush1.msra.mxu0 0.0
    %1755 = vmatprep.subr.mxu0 0.0
    %1756 = vmatpush1.msra.mxu0 %v1727
    %1757 = vmatprep.subr.mxu0 0.0
    %1758 = vmatpush1.msra.mxu0 %v1726
    %1759 = vmatprep.subr.mxu0 0.0
    %1760 = vmatpush1.msra.mxu0 %v1725
    %1761 = vmatprep.subr.mxu0 0.0
    %1762 = vmatpush1.msra.mxu0 %v1724
    %1763 = vmatprep.subr.mxu0 0.0
    %1764 = vmatpush1.msra.mxu0 %v1723
    %1765 = vmatprep.subr.mxu0 0.0
    %1766 = vmatpush1.msra.mxu0 %v1722
    %1767 = vmatprep.subr.mxu0 0.0
    %1768 = vmatpush1.msra.mxu0 %v1721
    %1769 = vmatprep.subr.mxu0 0.0
    %1770 = vmatpush1.msra.mxu0 %v1720
    %1771 = vmatprep.subr.mxu0 0.0
    %1772 = vmatpush2.msra.mxu0 0.0
    %1773 = vmatprep.subr.mxu0 0.0
    %1774 = vmatpush2.msra.mxu0 0.0
    %1775 = vmatprep.subr.mxu0 0.0
    %1776 = vmatpush2.msra.mxu0 0.0
    %1777 = vmatprep.subr.mxu0 0.0
    %1778 = vmatpush2.msra.mxu0 0.0
    %1779 = vmatprep.subr.mxu0 0.0
    %1780 = vmatpush2.msra.mxu0 0.0
    %1781 = vmatprep.subr.mxu0 0.0
    %1782 = vmatpush2.msra.mxu0 0.0
    %1783 = vmatprep.subr.mxu0 0.0
    %1784 = vmatpush2.msra.mxu0 0.0
    %1785 = vmatprep.subr.mxu0 0.0
    %1786 = vmatpush2.msra.mxu0 0.0
    %1787 = vmatprep.subr.mxu0 0.0
    %1788 = vmatpush2.msra.mxu0 0.0
    %1789 = vmatprep.subr.mxu0 0.0
    %1790 = vmatpush2.msra.mxu0 0.0
    %1791 = vmatprep.subr.mxu0 0.0
    %1792 = vmatpush2.msra.mxu0 0.0
    %1793 = vmatprep.subr.mxu0 0.0
    %1794 = vmatpush2.msra.mxu0 0.0
    %1795 = vmatprep.subr.mxu0 0.0
    %1796 = vmatpush2.msra.mxu0 0.0
    %1797 = vmatprep.subr.mxu0 0.0
    %1798 = vmatpush2.msra.mxu0 0.0
    %1799 = vmatprep.subr.mxu0 0.0
    %1800 = vmatpush2.msra.mxu0 0.0
    %1801 = vmatprep.subr.mxu0 0.0
    %1802 = vmatpush2.msra.mxu0 0.0
    %1803 = vmatprep.mubr.f32.mxu0 0.0
    %1804 = vmatmul.mubr.f32.gmra.mxu0 %v1737
    %v1805 = vpop.f32.mrf.mxu0
    %v1806 = vadd.f32 %v1733, %v1805
    %v1807 = vpop.f32.mrf.mxu0
    %1808 = vdwg.mxu0
    %vm1809 = vcmask 58368
    %1810 = vst.msk [vmem:[#allocation2] sm:$0x3] %vm1809, %v1806
    // Predicated region
    $region26: #{lstm_model_forward.3} parent=1 // pred_check
      _
    $region27: #{lstm_model_forward.3} parent=1 // pred_check_branch
      %1812 = sbr.rel (0) target = $region29
    $region28: #{lstm_model_forward.3} parent=1 // pred_region
      _
    $region29: #{lstm_model_forward.3} parent=1 // pred_fallthru
      _
    // Predicated region
    $region30: #{lstm_model_forward.3} parent=1 // pred_check
      _
    $region31: #{lstm_model_forward.3} parent=1 // pred_check_branch
      %1814 = sbr.rel (0) target = $region33
    $region32: #{lstm_model_forward.3} parent=1 // pred_region
      %s1816 = ssub.s32 32, 32
      %1817 = vsyncadd [#allocation3], %s1816
      %s1819 = sshll.u32 [#allocation2], 4
      %s1820 = int_to_ptr.vmem [resolvable:$true] %s1819
      %1822 = dma.vmem_to_hbm [thread:$0]  %s1820, 32, %s7, [#allocation3]
    $region33: #{lstm_model_forward.3} parent=1 // pred_fallthru
      _
    // Predicated region
    $region34: #{lstm_model_forward.3} parent=1 // pred_check
      _
    $region35: #{lstm_model_forward.3} parent=1 // pred_check_branch
      %1824 = sbr.rel (0) target = $region37
    $region36: #{lstm_model_forward.3} parent=1 // pred_region
      _
    $region37: #{lstm_model_forward.3} parent=1 // pred_fallthru
      _
    // Predicated region
    $region38: #{lstm_model_forward.3} parent=1 // pred_check
      _
    $region39: #{lstm_model_forward.3} parent=1 // pred_check_branch
      %1826 = sbr.rel (0) target = $region41
    $region40: #{lstm_model_forward.3} parent=1 // pred_region
      %1827 = dma.done [#allocation3], 32
    $region41: #{lstm_model_forward.3} parent=1 // pred_fallthru
      _
    %1828 = vsyncpa [#allocation3], 1

</llo_original>
